<compile_context>
chip_gen: v6e
topology: v6e:2x2x1
jax: 0.10.0
libtpu: 0.0.40
codegen_flags: <defaults>
</compile_context>

<pallas_src>
import functools

import jax
import jax.numpy as jnp
from jax import lax
from jax.experimental import pallas as pl
from jax.experimental.pallas import tpu as pltpu

EPS = 1e-5  # nn.BatchNorm2d default eps


# ---------------------------------------------------------------------------
# Fused Pallas kernel
# ---------------------------------------------------------------------------
def _bn_train(y, g, b, inv_m):
    """Single-pass training-mode BatchNorm over the pixel axis (N*H*W)."""
    s = jnp.sum(y, axis=0, keepdims=True)
    ss = jnp.sum(y * y, axis=0, keepdims=True)
    mean = s * inv_m
    var = jnp.maximum(ss * inv_m - mean * mean, 0.0)
    return (y - mean) * lax.rsqrt(var + EPS) * g + b


def _residual_block_kernel(*refs, M, B, Ho, Wo, K, pad, Cpad, has_ds):
    if has_ds:
        (lhs1_ref, w1_ref, g1_ref, b1_ref, w2_ref, g2_ref, b2_ref,
         gd_ref, bd_ref, o_ref, h1p_ref, lhs2_ref) = refs
    else:
        (lhs1_ref, w1_ref, g1_ref, b1_ref, w2_ref, g2_ref, b2_ref,
         res_ref, o_ref, h1p_ref, lhs2_ref) = refs

    inv_m = jnp.float32(1.0 / M)

    # ---- conv1 (+ fused 1x1 downsample): ONE MXU matmul, N = Cpad or 2*Cpad
    y = jnp.dot(lhs1_ref[...], w1_ref[...], preferred_element_type=jnp.float32)

    acc1 = y[:, :Cpad]
    h1 = jnp.maximum(_bn_train(acc1, g1_ref[...], b1_ref[...], inv_m), 0.0)

    # ---- residual branch
    if has_ds:
        res = _bn_train(y[:, Cpad:2 * Cpad], gd_ref[...], bd_ref[...], inv_m)
    else:
        res = res_ref[...]          # exact f32 identity residual

    # ---- stage h1 (bf16) into a halo-padded VMEM scratch; zero ONLY the halo
    Wp = Wo + 2 * pad
    h1b = h1.astype(jnp.bfloat16).reshape(B, Ho, Wo, Cpad)
    if pad:
        zr = jnp.zeros((B, pad, Wp, Cpad), jnp.bfloat16)
        zc = jnp.zeros((B, Ho, pad, Cpad), jnp.bfloat16)
        h1p_ref[:, :pad, :, :] = zr
        h1p_ref[:, Ho + pad:, :, :] = zr
        h1p_ref[:, pad:pad + Ho, :pad, :] = zc
        h1p_ref[:, pad:pad + Ho, Wo + pad:, :] = zc
    h1p_ref[:, pad:pad + Ho, pad:pad + Wo, :] = h1b

    # ---- conv2: pack the K*K shifted tap slabs into one (M, K*K*Cpad) bf16
    #      lhs and issue a single matmul with a K*K*Cpad-deep contraction.
    for ky in range(K):
        for kx in range(K):
            t = ky * K + kx
            lhs2_ref[:, t * Cpad:(t + 1) * Cpad] = (
                h1p_ref[:, ky:ky + Ho, kx:kx + Wo, :].reshape(M, Cpad))

    acc2 = jnp.dot(lhs2_ref[...], w2_ref[...], preferred_element_type=jnp.float32)
    out = jnp.maximum(_bn_train(acc2, g2_ref[...], b2_ref[...], inv_m), 0.0)

    o_ref[...] = out + res          # lane-dense (M, Cpad) f32 store


# ---------------------------------------------------------------------------
# Wrapper: layout transposes, lane-dense im2col for conv1, weight repacking
# ---------------------------------------------------------------------------
def residual_block_forward(x_nchw, params, ksize, padding, stride):
    assert 2 * padding == ksize - 1, "residual add requires 'same'-style padding"
    x = jnp.transpose(x_nchw, (0, 2, 3, 1)).astype(jnp.float32)   # NCHW -> NHWC
    B, H, W, Cin = x.shape
    Cout = params["w1"].shape[-1]
    Cpad = max(128, ((Cout + 127) // 128) * 128)
    K, pad, s = ksize, padding, stride
    Ho = (H + 2 * pad - K) // s + 1
    Wo = (W + 2 * pad - K) // s + 1
    M = B * Ho * Wo
    has_ds = (stride != 1)

    # ---- conv1 im2col in the wrapper (lane-dense; K*K*Cin is tiny)
    xp = jnp.pad(x, ((0, 0), (pad, pad), (pad, pad), (0, 0)))
    cols = []
    for ky in range(K):
        for kx in range(K):
            sl = xp[:, ky:ky + (Ho - 1) * s + 1:s, kx:kx + (Wo - 1) * s + 1:s, :]
            cols.append(sl.reshape(M, Cin))
    Kc1 = K * K * Cin
    Kc1p = ((Kc1 + 127) // 128) * 128
    lhs1 = jnp.concatenate(cols, axis=-1)                    # (M, K*K*Cin)
    lhs1 = jnp.pad(lhs1, ((0, 0), (0, Kc1p - Kc1))).astype(jnp.bfloat16)

    def pad_last(a, n):
        return jnp.pad(a, [(0, 0)] * (a.ndim - 1) + [(0, n - a.shape[-1])])

    # conv1 weights as one (Kc1p, Cpad) matrix (row = tap-major, cin-minor)
    w1 = params["w1"].reshape(K * K * Cin, Cout)
    w1 = jnp.pad(w1, ((0, Kc1p - Kc1), (0, Cpad - Cout)))
    if has_ds:
        # fuse the 1x1 stride-s downsample: its lhs is the centre-tap slab.
        center = pad * K + pad
        wd = params["wd"].reshape(Cin, Cout)
        wd_rows = jnp.zeros((Kc1p, Cpad), jnp.float32)
        wd_rows = wd_rows.at[center * Cin:center * Cin + Cin, :Cout].set(wd)
        w1 = jnp.concatenate([w1, wd_rows], axis=1)          # (Kc1p, 2*Cpad)
    w1 = w1.astype(jnp.bfloat16)

    # conv2 weights as one (K*K*Cpad, Cpad) matrix (row = tap-major, cin-minor)
    w2 = jnp.pad(params["w2"],
                 ((0, 0), (0, 0), (0, Cpad - Cout), (0, Cpad - Cout)))
    w2 = w2.reshape(K * K * Cpad, Cpad).astype(jnp.bfloat16)

    g1 = pad_last(params["g1"], Cpad).reshape(1, Cpad)
    b1 = pad_last(params["b1"], Cpad).reshape(1, Cpad)
    g2 = pad_last(params["g2"], Cpad).reshape(1, Cpad)
    b2 = pad_last(params["b2"], Cpad).reshape(1, Cpad)

    args = [lhs1, w1, g1, b1, w2, g2, b2]
    if has_ds:
        gd = pad_last(params["gd"], Cpad).reshape(1, Cpad)
        bd = pad_last(params["bd"], Cpad).reshape(1, Cpad)
        args += [gd, bd]
    else:
        # exact f32 identity residual (stride==1 => Ho==H, Wo==W, Cin==Cout)
        args += [pad_last(x.reshape(M, Cin), Cpad)]

    kern = functools.partial(_residual_block_kernel, M=M, B=B, Ho=Ho, Wo=Wo,
                             K=K, pad=pad, Cpad=Cpad, has_ds=has_ds)

    Hp, Wp = Ho + 2 * pad, Wo + 2 * pad
    scratch_shapes = [pltpu.VMEM((B, Hp, Wp, Cpad), jnp.bfloat16),   # h1 + halo
                      pltpu.VMEM((M, K * K * Cpad), jnp.bfloat16)]   # conv2 lhs

    in_bytes = sum(int(a.size) * a.dtype.itemsize for a in args)
    out_bytes = M * Cpad * 4
    scratch_bytes = B * Hp * Wp * Cpad * 2 + M * K * K * Cpad * 2
    n1 = 2 * Cpad if has_ds else Cpad
    flops = int(2 * M * Kc1p * n1 + 2 * M * (K * K * Cpad) * Cpad)

    out = pl.pallas_call(
        kern,
        out_shape=jax.ShapeDtypeStruct((M, Cpad), jnp.float32),
        in_specs=[pl.BlockSpec(memory_space=pltpu.MemorySpace.VMEM)] * len(args),
        out_specs=pl.BlockSpec(memory_space=pltpu.MemorySpace.VMEM),
        scratch_shapes=scratch_shapes,
        compiler_params=pltpu.CompilerParams(
            # actual footprint is a few MiB; stay well below v7x's 64 MiB VMEM
            vmem_limit_bytes=int(min(
                48 << 20,
                max(16 << 20, 4 * (in_bytes + out_bytes + scratch_bytes))))),
        cost_estimate=pl.CostEstimate(flops=flops, transcendentals=3 * Cpad,
                                      bytes_accessed=in_bytes + out_bytes),
    )(*args)

    # TODO(synk): when chaining blocks, keep the padded (M, Cpad) layout
    # between blocks instead of slicing/transposing back to NCHW every time.
    out = out[:, :Cout].reshape(B, Ho, Wo, Cout)
    return jnp.transpose(out, (0, 3, 1, 2))                  # NHWC -> NCHW


# ---------------------------------------------------------------------------
# Parameter init + pure-JAX reference (mirrors the PyTorch forward, training BN)
# ---------------------------------------------------------------------------
def init_params(key, cin, cout, ksize, stride):
    ks = jax.random.split(key, 8)
    params = dict(
        w1=jax.random.normal(ks[0], (ksize, ksize, cin, cout), jnp.float32) * 0.1,
        g1=1.0 + 0.1 * jax.random.normal(ks[1], (cout,), jnp.float32),
        b1=0.1 * jax.random.normal(ks[2], (cout,), jnp.float32),
        w2=jax.random.normal(ks[3], (ksize, ksize, cout, cout), jnp.float32) * 0.1,
        g2=1.0 + 0.1 * jax.random.normal(ks[4], (cout,), jnp.float32),
        b2=0.1 * jax.random.normal(ks[5], (cout,), jnp.float32),
    )
    if stride != 1:
        params.update(
            wd=jax.random.normal(ks[6], (1, 1, cin, cout), jnp.float32) * 0.1,
            gd=1.0 + 0.1 * jax.random.normal(ks[7], (cout,), jnp.float32),
            bd=0.05 * jnp.ones((cout,), jnp.float32),
        )
    return params


def ref_forward(x_nchw, params, ksize, padding, stride):
    def conv(x, w_hwio, st, pad):
        return jax.lax.conv_general_dilated(
            x, w_hwio, (st, st), [(pad, pad), (pad, pad)],
            dimension_numbers=("NCHW", "HWIO", "NCHW"))

    def bn(x, g, b):
        mean = jnp.mean(x, axis=(0, 2, 3), keepdims=True)
        var = jnp.mean(jnp.square(x - mean), axis=(0, 2, 3), keepdims=True)
        return ((x - mean) * jax.lax.rsqrt(var + EPS)
                * g.reshape(1, -1, 1, 1) + b.reshape(1, -1, 1, 1))

    out = jax.nn.relu(bn(conv(x_nchw, params["w1"], stride, padding),
                         params["g1"], params["b1"]))
    out = bn(conv(out, params["w2"], 1, padding), params["g2"], params["b2"])
    if stride != 1:
        residual = bn(conv(x_nchw, params["wd"], stride, 0),
                      params["gd"], params["bd"])
    else:
        residual = x_nchw
    return jax.nn.relu(out) + residual


if __name__ == "__main__":
    key = jax.random.PRNGKey(0)
    kx_, kp_ = jax.random.split(key)

    # bf16 MXU operands + f32 accumulation => matches the fp32 reference to
    # ~1e-2 after two training-mode BatchNorms (documented contract).
    ATOL = RTOL = 4e-2

    # ResidualBlock(in_channels=4, out_channels=8, kernel_size=3, padding=1, stride=2)
    B, Cin, H, W = 2, 4, 16, 16
    Cout, ksize, padding, stride = 8, 3, 1, 2
    x = jax.random.normal(kx_, (B, Cin, H, W), jnp.float32)
    params = init_params(kp_, Cin, Cout, ksize, stride)

    fwd = jax.jit(functools.partial(residual_block_forward,
                                    ksize=ksize, padding=padding, stride=stride))
    out = jax.block_until_ready(fwd(x, params))
    ref = ref_forward(x, params, ksize, padding, stride)
    assert out.shape == (B, Cout, H // stride, W // stride)
    assert jnp.allclose(out, ref, atol=ATOL, rtol=RTOL), \
        float(jnp.max(jnp.abs(out - ref)))

    # stride=1 identity-residual path (in_channels == out_channels)
    C2 = 8
    x2 = jax.random.normal(jax.random.PRNGKey(1), (B, C2, H, W), jnp.float32)
    params2 = init_params(jax.random.PRNGKey(2), C2, C2, ksize, 1)
    fwd2 = jax.jit(functools.partial(residual_block_forward,
                                     ksize=ksize, padding=padding, stride=1))
    out2 = jax.block_until_ready(fwd2(x2, params2))
    ref2 = ref_forward(x2, params2, ksize, padding, 1)
    assert out2.shape == (B, C2, H, W)
    assert jnp.allclose(out2, ref2, atol=ATOL, rtol=RTOL), \
        float(jnp.max(jnp.abs(out2 - ref2)))

    print("KERNEL_OK")
</pallas_src>

<mosaic_0001>
module attributes {stable_mosaic.version = 11 : i64} {
  func.func @_residual_block_kernel(%arg0: memref<128x128xbf16, #tpu.memory_space<vmem>>, %arg1: memref<128x256xbf16, #tpu.memory_space<vmem>>, %arg2: memref<1x128xf32, #tpu.memory_space<vmem>>, %arg3: memref<1x128xf32, #tpu.memory_space<vmem>>, %arg4: memref<1152x128xbf16, #tpu.memory_space<vmem>>, %arg5: memref<1x128xf32, #tpu.memory_space<vmem>>, %arg6: memref<1x128xf32, #tpu.memory_space<vmem>>, %arg7: memref<1x128xf32, #tpu.memory_space<vmem>>, %arg8: memref<1x128xf32, #tpu.memory_space<vmem>>, %arg9: memref<128x128xf32, #tpu.memory_space<vmem>>, %arg10: memref<2x10x10x128xbf16, #tpu.memory_space<vmem>>, %arg11: memref<128x1152xbf16, #tpu.memory_space<vmem>>) attributes {dimension_semantics = [], scalar_prefetch = 0 : i64, scratch_operands = 2 : i64, tpu.core_type = #tpu.core_type<tc>} {
    %c0 = arith.constant 0 : index
    %c0_0 = arith.constant 0 : index
    %0 = vector.load %arg0[%c0, %c0_0] : memref<128x128xbf16, #tpu.memory_space<vmem>>, vector<128x128xbf16>
    %c0_1 = arith.constant 0 : index
    %c0_2 = arith.constant 0 : index
    %1 = vector.load %arg1[%c0_1, %c0_2] : memref<128x256xbf16, #tpu.memory_space<vmem>>, vector<128x256xbf16>
    %cst = arith.constant dense<0.000000e+00> : vector<128x256xf32>
    %2 = tpu.matmul %0, %1, %cst {dimension_numbers = #tpu.dot_dimension_numbers<[1], [0], [0], [1], [0, 0, 1, 1], [], []>} : vector<128x128xbf16>, vector<128x256xbf16>, vector<128x256xf32> -> vector<128x256xf32>
    %3 = vector.extract_strided_slice %2 {offsets = [0, 0], sizes = [128, 128], strides = [1, 1]} : vector<128x256xf32> to vector<128x128xf32>
    %c0_3 = arith.constant 0 : index
    %c0_4 = arith.constant 0 : index
    %4 = vector.load %arg2[%c0_3, %c0_4] : memref<1x128xf32, #tpu.memory_space<vmem>>, vector<1x128xf32>
    %c0_5 = arith.constant 0 : index
    %c0_6 = arith.constant 0 : index
    %5 = vector.load %arg3[%c0_5, %c0_6] : memref<1x128xf32, #tpu.memory_space<vmem>>, vector<1x128xf32>
    %cst_7 = arith.constant dense<0.000000e+00> : vector<128xf32>
    %6 = vector.multi_reduction <add>, %3, %cst_7 [0] : vector<128x128xf32> to vector<128xf32>
    %7 = vector.shape_cast %6 : vector<128xf32> to vector<1x128xf32>
    %8 = arith.mulf %3, %3 : vector<128x128xf32>
    %cst_8 = arith.constant dense<0.000000e+00> : vector<128xf32>
    %9 = vector.multi_reduction <add>, %8, %cst_8 [0] : vector<128x128xf32> to vector<128xf32>
    %10 = vector.shape_cast %9 : vector<128xf32> to vector<1x128xf32>
    %cst_9 = arith.constant 7.812500e-03 : f32
    %11 = vector.broadcast %cst_9 : f32 to vector<1x128xf32>
    %12 = arith.mulf %7, %11 : vector<1x128xf32>
    %cst_10 = arith.constant 7.812500e-03 : f32
    %13 = vector.broadcast %cst_10 : f32 to vector<1x128xf32>
    %14 = arith.mulf %10, %13 : vector<1x128xf32>
    %15 = arith.mulf %12, %12 : vector<1x128xf32>
    %16 = arith.subf %14, %15 : vector<1x128xf32>
    %cst_11 = arith.constant 0.000000e+00 : f32
    %17 = vector.broadcast %cst_11 : f32 to vector<1x128xf32>
    %18 = arith.maximumf %16, %17 : vector<1x128xf32>
    %19 = vector.broadcast %12 : vector<1x128xf32> to vector<128x128xf32>
    %20 = arith.subf %3, %19 : vector<128x128xf32>
    %cst_12 = arith.constant 9.99999974E-6 : f32
    %21 = vector.broadcast %cst_12 : f32 to vector<1x128xf32>
    %22 = arith.addf %18, %21 : vector<1x128xf32>
    %23 = math.rsqrt %22 : vector<1x128xf32>
    %24 = vector.broadcast %23 : vector<1x128xf32> to vector<128x128xf32>
    %25 = arith.mulf %20, %24 : vector<128x128xf32>
    %26 = vector.broadcast %4 : vector<1x128xf32> to vector<128x128xf32>
    %27 = arith.mulf %25, %26 : vector<128x128xf32>
    %28 = vector.broadcast %5 : vector<1x128xf32> to vector<128x128xf32>
    %29 = arith.addf %27, %28 : vector<128x128xf32>
    %cst_13 = arith.constant 0.000000e+00 : f32
    %30 = vector.broadcast %cst_13 : f32 to vector<128x128xf32>
    %31 = arith.maximumf %29, %30 : vector<128x128xf32>
    %32 = vector.extract_strided_slice %2 {offsets = [0, 128], sizes = [128, 128], strides = [1, 1]} : vector<128x256xf32> to vector<128x128xf32>
    %c0_14 = arith.constant 0 : index
    %c0_15 = arith.constant 0 : index
    %33 = vector.load %arg7[%c0_14, %c0_15] : memref<1x128xf32, #tpu.memory_space<vmem>>, vector<1x128xf32>
    %c0_16 = arith.constant 0 : index
    %c0_17 = arith.constant 0 : index
    %34 = vector.load %arg8[%c0_16, %c0_17] : memref<1x128xf32, #tpu.memory_space<vmem>>, vector<1x128xf32>
    %cst_18 = arith.constant dense<0.000000e+00> : vector<128xf32>
    %35 = vector.multi_reduction <add>, %32, %cst_18 [0] : vector<128x128xf32> to vector<128xf32>
    %36 = vector.shape_cast %35 : vector<128xf32> to vector<1x128xf32>
    %37 = arith.mulf %32, %32 : vector<128x128xf32>
    %cst_19 = arith.constant dense<0.000000e+00> : vector<128xf32>
    %38 = vector.multi_reduction <add>, %37, %cst_19 [0] : vector<128x128xf32> to vector<128xf32>
    %39 = vector.shape_cast %38 : vector<128xf32> to vector<1x128xf32>
    %cst_20 = arith.constant 7.812500e-03 : f32
    %40 = vector.broadcast %cst_20 : f32 to vector<1x128xf32>
    %41 = arith.mulf %36, %40 : vector<1x128xf32>
    %cst_21 = arith.constant 7.812500e-03 : f32
    %42 = vector.broadcast %cst_21 : f32 to vector<1x128xf32>
    %43 = arith.mulf %39, %42 : vector<1x128xf32>
    %44 = arith.mulf %41, %41 : vector<1x128xf32>
    %45 = arith.subf %43, %44 : vector<1x128xf32>
    %cst_22 = arith.constant 0.000000e+00 : f32
    %46 = vector.broadcast %cst_22 : f32 to vector<1x128xf32>
    %47 = arith.maximumf %45, %46 : vector<1x128xf32>
    %48 = vector.broadcast %41 : vector<1x128xf32> to vector<128x128xf32>
    %49 = arith.subf %32, %48 : vector<128x128xf32>
    %cst_23 = arith.constant 9.99999974E-6 : f32
    %50 = vector.broadcast %cst_23 : f32 to vector<1x128xf32>
    %51 = arith.addf %47, %50 : vector<1x128xf32>
    %52 = math.rsqrt %51 : vector<1x128xf32>
    %53 = vector.broadcast %52 : vector<1x128xf32> to vector<128x128xf32>
    %54 = arith.mulf %49, %53 : vector<128x128xf32>
    %55 = vector.broadcast %33 : vector<1x128xf32> to vector<128x128xf32>
    %56 = arith.mulf %54, %55 : vector<128x128xf32>
    %57 = vector.broadcast %34 : vector<1x128xf32> to vector<128x128xf32>
    %58 = arith.addf %56, %57 : vector<128x128xf32>
    %59 = arith.truncf %31 : vector<128x128xf32> to vector<128x128xbf16>
    %60 = vector.shape_cast %59 : vector<128x128xbf16> to vector<2x8x8x128xbf16>
    %cst_24 = arith.constant 0.000000e+00 : bf16
    %61 = vector.broadcast %cst_24 : bf16 to vector<2x1x10x128xbf16>
    %cst_25 = arith.constant 0.000000e+00 : bf16
    %62 = vector.broadcast %cst_25 : bf16 to vector<2x8x1x128xbf16>
    %c0_26 = arith.constant 0 : index
    %c0_27 = arith.constant 0 : index
    %c0_28 = arith.constant 0 : index
    %c0_29 = arith.constant 0 : index
    %63 = vector.load %arg10[%c0_26, %c0_27, %c0_28, %c0_29] : memref<2x10x10x128xbf16, #tpu.memory_space<vmem>>, vector<2x1x10x128xbf16>
    tpu.vector_store %arg10[%c0_26, %c0_27, %c0_28, %c0_29], %61 {strides = array<i32>} : memref<2x10x10x128xbf16, #tpu.memory_space<vmem>>, vector<2x1x10x128xbf16>,
    %c0_30 = arith.constant 0 : index
    %c9 = arith.constant 9 : index
    %c0_31 = arith.constant 0 : index
    %c0_32 = arith.constant 0 : index
    %64 = vector.load %arg10[%c0_30, %c9, %c0_31, %c0_32] : memref<2x10x10x128xbf16, #tpu.memory_space<vmem>>, vector<2x1x10x128xbf16>
    tpu.vector_store %arg10[%c0_30, %c9, %c0_31, %c0_32], %61 {strides = array<i32>} : memref<2x10x10x128xbf16, #tpu.memory_space<vmem>>, vector<2x1x10x128xbf16>,
    %c0_33 = arith.constant 0 : index
    %c1 = arith.constant 1 : index
    %c0_34 = arith.constant 0 : index
    %c0_35 = arith.constant 0 : index
    %65 = vector.load %arg10[%c0_33, %c1, %c0_34, %c0_35] : memref<2x10x10x128xbf16, #tpu.memory_space<vmem>>, vector<2x8x1x128xbf16>
    tpu.vector_store %arg10[%c0_33, %c1, %c0_34, %c0_35], %62 {strides = array<i32>} : memref<2x10x10x128xbf16, #tpu.memory_space<vmem>>, vector<2x8x1x128xbf16>,
    %c0_36 = arith.constant 0 : index
    %c1_37 = arith.constant 1 : index
    %c9_38 = arith.constant 9 : index
    %c0_39 = arith.constant 0 : index
    %66 = vector.load %arg10[%c0_36, %c1_37, %c9_38, %c0_39] : memref<2x10x10x128xbf16, #tpu.memory_space<vmem>>, vector<2x8x1x128xbf16>
    tpu.vector_store %arg10[%c0_36, %c1_37, %c9_38, %c0_39], %62 {strides = array<i32>} : memref<2x10x10x128xbf16, #tpu.memory_space<vmem>>, vector<2x8x1x128xbf16>,
    %c0_40 = arith.constant 0 : index
    %c1_41 = arith.constant 1 : index
    %c1_42 = arith.constant 1 : index
    %c0_43 = arith.constant 0 : index
    %67 = vector.load %arg10[%c0_40, %c1_41, %c1_42, %c0_43] : memref<2x10x10x128xbf16, #tpu.memory_space<vmem>>, vector<2x8x8x128xbf16>
    tpu.vector_store %arg10[%c0_40, %c1_41, %c1_42, %c0_43], %60 {strides = array<i32>} : memref<2x10x10x128xbf16, #tpu.memory_space<vmem>>, vector<2x8x8x128xbf16>,
    %c0_44 = arith.constant 0 : index
    %c0_45 = arith.constant 0 : index
    %c0_46 = arith.constant 0 : index
    %c0_47 = arith.constant 0 : index
    %68 = vector.load %arg10[%c0_44, %c0_45, %c0_46, %c0_47] : memref<2x10x10x128xbf16, #tpu.memory_space<vmem>>, vector<2x8x8x128xbf16>
    %69 = vector.shape_cast %68 : vector<2x8x8x128xbf16> to vector<128x128xbf16>
    %c0_48 = arith.constant 0 : index
    %c0_49 = arith.constant 0 : index
    %70 = vector.load %arg11[%c0_48, %c0_49] : memref<128x1152xbf16, #tpu.memory_space<vmem>>, vector<128x128xbf16>
    tpu.vector_store %arg11[%c0_48, %c0_49], %69 {strides = array<i32>} : memref<128x1152xbf16, #tpu.memory_space<vmem>>, vector<128x128xbf16>,
    %c0_50 = arith.constant 0 : index
    %c0_51 = arith.constant 0 : index
    %c1_52 = arith.constant 1 : index
    %c0_53 = arith.constant 0 : index
    %71 = vector.load %arg10[%c0_50, %c0_51, %c1_52, %c0_53] : memref<2x10x10x128xbf16, #tpu.memory_space<vmem>>, vector<2x8x8x128xbf16>
    %72 = vector.shape_cast %71 : vector<2x8x8x128xbf16> to vector<128x128xbf16>
    %c0_54 = arith.constant 0 : index
    %c128 = arith.constant 128 : index
    %73 = vector.load %arg11[%c0_54, %c128] : memref<128x1152xbf16, #tpu.memory_space<vmem>>, vector<128x128xbf16>
    tpu.vector_store %arg11[%c0_54, %c128], %72 {strides = array<i32>} : memref<128x1152xbf16, #tpu.memory_space<vmem>>, vector<128x128xbf16>,
    %c0_55 = arith.constant 0 : index
    %c0_56 = arith.constant 0 : index
    %c2 = arith.constant 2 : index
    %c0_57 = arith.constant 0 : index
    %74 = vector.load %arg10[%c0_55, %c0_56, %c2, %c0_57] : memref<2x10x10x128xbf16, #tpu.memory_space<vmem>>, vector<2x8x8x128xbf16>
    %75 = vector.shape_cast %74 : vector<2x8x8x128xbf16> to vector<128x128xbf16>
    %c0_58 = arith.constant 0 : index
    %c256 = arith.constant 256 : index
    %76 = vector.load %arg11[%c0_58, %c256] : memref<128x1152xbf16, #tpu.memory_space<vmem>>, vector<128x128xbf16>
    tpu.vector_store %arg11[%c0_58, %c256], %75 {strides = array<i32>} : memref<128x1152xbf16, #tpu.memory_space<vmem>>, vector<128x128xbf16>,
    %c0_59 = arith.constant 0 : index
    %c1_60 = arith.constant 1 : index
    %c0_61 = arith.constant 0 : index
    %c0_62 = arith.constant 0 : index
    %77 = vector.load %arg10[%c0_59, %c1_60, %c0_61, %c0_62] : memref<2x10x10x128xbf16, #tpu.memory_space<vmem>>, vector<2x8x8x128xbf16>
    %78 = vector.shape_cast %77 : vector<2x8x8x128xbf16> to vector<128x128xbf16>
    %c0_63 = arith.constant 0 : index
    %c384 = arith.constant 384 : index
    %79 = vector.load %arg11[%c0_63, %c384] : memref<128x1152xbf16, #tpu.memory_space<vmem>>, vector<128x128xbf16>
    tpu.vector_store %arg11[%c0_63, %c384], %78 {strides = array<i32>} : memref<128x1152xbf16, #tpu.memory_space<vmem>>, vector<128x128xbf16>,
    %c0_64 = arith.constant 0 : index
    %c1_65 = arith.constant 1 : index
    %c1_66 = arith.constant 1 : index
    %c0_67 = arith.constant 0 : index
    %80 = vector.load %arg10[%c0_64, %c1_65, %c1_66, %c0_67] : memref<2x10x10x128xbf16, #tpu.memory_space<vmem>>, vector<2x8x8x128xbf16>
    %81 = vector.shape_cast %80 : vector<2x8x8x128xbf16> to vector<128x128xbf16>
    %c0_68 = arith.constant 0 : index
    %c512 = arith.constant 512 : index
    %82 = vector.load %arg11[%c0_68, %c512] : memref<128x1152xbf16, #tpu.memory_space<vmem>>, vector<128x128xbf16>
    tpu.vector_store %arg11[%c0_68, %c512], %81 {strides = array<i32>} : memref<128x1152xbf16, #tpu.memory_space<vmem>>, vector<128x128xbf16>,
    %c0_69 = arith.constant 0 : index
    %c1_70 = arith.constant 1 : index
    %c2_71 = arith.constant 2 : index
    %c0_72 = arith.constant 0 : index
    %83 = vector.load %arg10[%c0_69, %c1_70, %c2_71, %c0_72] : memref<2x10x10x128xbf16, #tpu.memory_space<vmem>>, vector<2x8x8x128xbf16>
    %84 = vector.shape_cast %83 : vector<2x8x8x128xbf16> to vector<128x128xbf16>
    %c0_73 = arith.constant 0 : index
    %c640 = arith.constant 640 : index
    %85 = vector.load %arg11[%c0_73, %c640] : memref<128x1152xbf16, #tpu.memory_space<vmem>>, vector<128x128xbf16>
    tpu.vector_store %arg11[%c0_73, %c640], %84 {strides = array<i32>} : memref<128x1152xbf16, #tpu.memory_space<vmem>>, vector<128x128xbf16>,
    %c0_74 = arith.constant 0 : index
    %c2_75 = arith.constant 2 : index
    %c0_76 = arith.constant 0 : index
    %c0_77 = arith.constant 0 : index
    %86 = vector.load %arg10[%c0_74, %c2_75, %c0_76, %c0_77] : memref<2x10x10x128xbf16, #tpu.memory_space<vmem>>, vector<2x8x8x128xbf16>
    %87 = vector.shape_cast %86 : vector<2x8x8x128xbf16> to vector<128x128xbf16>
    %c0_78 = arith.constant 0 : index
    %c768 = arith.constant 768 : index
    %88 = vector.load %arg11[%c0_78, %c768] : memref<128x1152xbf16, #tpu.memory_space<vmem>>, vector<128x128xbf16>
    tpu.vector_store %arg11[%c0_78, %c768], %87 {strides = array<i32>} : memref<128x1152xbf16, #tpu.memory_space<vmem>>, vector<128x128xbf16>,
    %c0_79 = arith.constant 0 : index
    %c2_80 = arith.constant 2 : index
    %c1_81 = arith.constant 1 : index
    %c0_82 = arith.constant 0 : index
    %89 = vector.load %arg10[%c0_79, %c2_80, %c1_81, %c0_82] : memref<2x10x10x128xbf16, #tpu.memory_space<vmem>>, vector<2x8x8x128xbf16>
    %90 = vector.shape_cast %89 : vector<2x8x8x128xbf16> to vector<128x128xbf16>
    %c0_83 = arith.constant 0 : index
    %c896 = arith.constant 896 : index
    %91 = vector.load %arg11[%c0_83, %c896] : memref<128x1152xbf16, #tpu.memory_space<vmem>>, vector<128x128xbf16>
    tpu.vector_store %arg11[%c0_83, %c896], %90 {strides = array<i32>} : memref<128x1152xbf16, #tpu.memory_space<vmem>>, vector<128x128xbf16>,
    %c0_84 = arith.constant 0 : index
    %c2_85 = arith.constant 2 : index
    %c2_86 = arith.constant 2 : index
    %c0_87 = arith.constant 0 : index
    %92 = vector.load %arg10[%c0_84, %c2_85, %c2_86, %c0_87] : memref<2x10x10x128xbf16, #tpu.memory_space<vmem>>, vector<2x8x8x128xbf16>
    %93 = vector.shape_cast %92 : vector<2x8x8x128xbf16> to vector<128x128xbf16>
    %c0_88 = arith.constant 0 : index
    %c1024 = arith.constant 1024 : index
    %94 = vector.load %arg11[%c0_88, %c1024] : memref<128x1152xbf16, #tpu.memory_space<vmem>>, vector<128x128xbf16>
    tpu.vector_store %arg11[%c0_88, %c1024], %93 {strides = array<i32>} : memref<128x1152xbf16, #tpu.memory_space<vmem>>, vector<128x128xbf16>,
    %c0_89 = arith.constant 0 : index
    %c0_90 = arith.constant 0 : index
    %95 = vector.load %arg11[%c0_89, %c0_90] : memref<128x1152xbf16, #tpu.memory_space<vmem>>, vector<128x1152xbf16>
    %c0_91 = arith.constant 0 : index
    %c0_92 = arith.constant 0 : index
    %96 = vector.load %arg4[%c0_91, %c0_92] : memref<1152x128xbf16, #tpu.memory_space<vmem>>, vector<1152x128xbf16>
    %cst_93 = arith.constant dense<0.000000e+00> : vector<128x128xf32>
    %97 = tpu.matmul %95, %96, %cst_93 {dimension_numbers = #tpu.dot_dimension_numbers<[1], [0], [0], [1], [0, 0, 1, 1], [], []>} : vector<128x1152xbf16>, vector<1152x128xbf16>, vector<128x128xf32> -> vector<128x128xf32>
    %c0_94 = arith.constant 0 : index
    %c0_95 = arith.constant 0 : index
    %98 = vector.load %arg5[%c0_94, %c0_95] : memref<1x128xf32, #tpu.memory_space<vmem>>, vector<1x128xf32>
    %c0_96 = arith.constant 0 : index
    %c0_97 = arith.constant 0 : index
    %99 = vector.load %arg6[%c0_96, %c0_97] : memref<1x128xf32, #tpu.memory_space<vmem>>, vector<1x128xf32>
    %cst_98 = arith.constant dense<0.000000e+00> : vector<128xf32>
    %100 = vector.multi_reduction <add>, %97, %cst_98 [0] : vector<128x128xf32> to vector<128xf32>
    %101 = vector.shape_cast %100 : vector<128xf32> to vector<1x128xf32>
    %102 = arith.mulf %97, %97 : vector<128x128xf32>
    %cst_99 = arith.constant dense<0.000000e+00> : vector<128xf32>
    %103 = vector.multi_reduction <add>, %102, %cst_99 [0] : vector<128x128xf32> to vector<128xf32>
    %104 = vector.shape_cast %103 : vector<128xf32> to vector<1x128xf32>
    %cst_100 = arith.constant 7.812500e-03 : f32
    %105 = vector.broadcast %cst_100 : f32 to vector<1x128xf32>
    %106 = arith.mulf %101, %105 : vector<1x128xf32>
    %cst_101 = arith.constant 7.812500e-03 : f32
    %107 = vector.broadcast %cst_101 : f32 to vector<1x128xf32>
    %108 = arith.mulf %104, %107 : vector<1x128xf32>
    %109 = arith.mulf %106, %106 : vector<1x128xf32>
    %110 = arith.subf %108, %109 : vector<1x128xf32>
    %cst_102 = arith.constant 0.000000e+00 : f32
    %111 = vector.broadcast %cst_102 : f32 to vector<1x128xf32>
    %112 = arith.maximumf %110, %111 : vector<1x128xf32>
    %113 = vector.broadcast %106 : vector<1x128xf32> to vector<128x128xf32>
    %114 = arith.subf %97, %113 : vector<128x128xf32>
    %cst_103 = arith.constant 9.99999974E-6 : f32
    %115 = vector.broadcast %cst_103 : f32 to vector<1x128xf32>
    %116 = arith.addf %112, %115 : vector<1x128xf32>
    %117 = math.rsqrt %116 : vector<1x128xf32>
    %118 = vector.broadcast %117 : vector<1x128xf32> to vector<128x128xf32>
    %119 = arith.mulf %114, %118 : vector<128x128xf32>
    %120 = vector.broadcast %98 : vector<1x128xf32> to vector<128x128xf32>
    %121 = arith.mulf %119, %120 : vector<128x128xf32>
    %122 = vector.broadcast %99 : vector<1x128xf32> to vector<128x128xf32>
    %123 = arith.addf %121, %122 : vector<128x128xf32>
    %cst_104 = arith.constant 0.000000e+00 : f32
    %124 = vector.broadcast %cst_104 : f32 to vector<128x128xf32>
    %125 = arith.maximumf %123, %124 : vector<128x128xf32>
    %126 = arith.addf %125, %58 : vector<128x128xf32>
    %c0_105 = arith.constant 0 : index
    %c0_106 = arith.constant 0 : index
    %127 = vector.load %arg9[%c0_105, %c0_106] : memref<128x128xf32, #tpu.memory_space<vmem>>, vector<128x128xf32>
    tpu.vector_store %arg9[%c0_105, %c0_106], %126 {strides = array<i32>} : memref<128x128xf32, #tpu.memory_space<vmem>>, vector<128x128xf32>,
    return
  }
}

</mosaic_0001>

<llo_original>
// kernel: residual_block_forward.1
$region0: #{residual_block_forward.1}
  #allocation0 [shape = 'u32[]', space=smem, size = 0x4, offset = 0x4, fixed_abs, tag = 'smem constant byte address 0x4 - core index']
  #allocation1 [shape = 'u32[144,128]{1,0:T(1,128)}', space=vmem, size = 0x12000, scoped, tag = 'internal scratch']
  #allocation2 [shape = 'bf16[2,10,10,128]{3,2,1,0:T(8,128)(2,1)}', space=vmem, size = 0x14000, scoped, tag = 'scratch operand']
  #allocation3 [shape = 'bf16[128,1152]{1,0:T(8,128)(2,1)}', space=vmem, size = 0x48000, scoped, tag = 'scratch operand']
  %s0 = inlined_call_operand.vmem [shape: bf16[128,128], index: 0, kind: input, shape index: {}]
  %s1 = inlined_call_operand.vmem [shape: bf16[128,256], index: 1, kind: input, shape index: {}]
  %s2 = inlined_call_operand.vmem [shape: f32[1,128], index: 2, kind: input, shape index: {}]
  %s3 = inlined_call_operand.vmem [shape: f32[1,128], index: 3, kind: input, shape index: {}]
  %s4 = inlined_call_operand.vmem [shape: bf16[1152,128], index: 4, kind: input, shape index: {}]
  %s5 = inlined_call_operand.vmem [shape: f32[1,128], index: 5, kind: input, shape index: {}]
  %s6 = inlined_call_operand.vmem [shape: f32[1,128], index: 6, kind: input, shape index: {}]
  %s7 = inlined_call_operand.vmem [shape: f32[1,128], index: 7, kind: input, shape index: {}]
  %s8 = inlined_call_operand.vmem [shape: f32[1,128], index: 8, kind: input, shape index: {}]
  %s9 = inlined_call_operand.vmem [shape: f32[128,128], index: 9, kind: output, shape index: {}]
  %s10 = sld [smem:[#allocation0]]
  $region46: #{residual_block_forward.1} parent=0
    _
  %s12 = ssub.s32 1, %s10
  %s13 = scalar_select 0, %s12, %s10
  // Predicated region
  $region2: #{residual_block_forward.1} parent=0 // pred_check
    _
  $region3: #{residual_block_forward.1} parent=0 // pred_check_branch
    %15 = sbr.rel (0) target = $region5
  $region4: #{residual_block_forward.1} parent=0 // pred_region
    _
  $region5: #{residual_block_forward.1} parent=0 // pred_fallthru
    _
  // Predicated region
  $region6: #{residual_block_forward.1} parent=0 // pred_check
    _
  $region7: #{residual_block_forward.1} parent=0 // pred_check_branch
    %17 = sbr.rel (0) target = $region9
  $region8: #{residual_block_forward.1} parent=0 // pred_region
    _
  $region9: #{residual_block_forward.1} parent=0 // pred_fallthru
    _
  // Predicated region
  $region10: #{residual_block_forward.1} parent=0 // pred_check
    _
  $region11: #{residual_block_forward.1} parent=0 // pred_check_branch
    %19 = sbr.rel (0) target = $region13
  $region12: #{residual_block_forward.1} parent=0 // pred_region
    _
  $region13: #{residual_block_forward.1} parent=0 // pred_fallthru
    _
  // Predicated region
  $region14: #{residual_block_forward.1} parent=0 // pred_check
    _
  $region15: #{residual_block_forward.1} parent=0 // pred_check_branch
    %21 = sbr.rel (0) target = $region17
  $region16: #{residual_block_forward.1} parent=0 // pred_region
    _
  $region17: #{residual_block_forward.1} parent=0 // pred_fallthru
    _
  // Predicated region
  $region18: #{residual_block_forward.1} parent=0 // pred_check
    _
  $region19: #{residual_block_forward.1} parent=0 // pred_check_branch
    %23 = sbr.rel (0) target = $region21
  $region20: #{residual_block_forward.1} parent=0 // pred_region
    _
  $region21: #{residual_block_forward.1} parent=0 // pred_fallthru
    _
  // Predicated region
  $region22: #{residual_block_forward.1} parent=0 // pred_check
    _
  $region23: #{residual_block_forward.1} parent=0 // pred_check_branch
    %25 = sbr.rel (0) target = $region25
  $region24: #{residual_block_forward.1} parent=0 // pred_region
    _
  $region25: #{residual_block_forward.1} parent=0 // pred_fallthru
    _
  // Predicated region
  $region26: #{residual_block_forward.1} parent=0 // pred_check
    _
  $region27: #{residual_block_forward.1} parent=0 // pred_check_branch
    %27 = sbr.rel (0) target = $region29
  $region28: #{residual_block_forward.1} parent=0 // pred_region
    _
  $region29: #{residual_block_forward.1} parent=0 // pred_fallthru
    _
  // Predicated region
  $region30: #{residual_block_forward.1} parent=0 // pred_check
    _
  $region31: #{residual_block_forward.1} parent=0 // pred_check_branch
    %29 = sbr.rel (0) target = $region33
  $region32: #{residual_block_forward.1} parent=0 // pred_region
    _
  $region33: #{residual_block_forward.1} parent=0 // pred_fallthru
    _
  // Predicated region
  $region34: #{residual_block_forward.1} parent=0 // pred_check
    _
  $region35: #{residual_block_forward.1} parent=0 // pred_check_branch
    %31 = sbr.rel (0) target = $region37
  $region36: #{residual_block_forward.1} parent=0 // pred_region
    _
  $region37: #{residual_block_forward.1} parent=0 // pred_fallthru
    _
  %v33 = vld [vmem:[%s0] sm:$0xf]
  %v34 = vld [vmem:[%s0 + $0x4] sm:$0xf]
  %v35 = vld [vmem:[%s0 + $0x8] sm:$0xf]
  %v36 = vld [vmem:[%s0 + $0xc] sm:$0xf]
  %v37 = vld [vmem:[%s0 + $0x10] sm:$0xf]
  %v38 = vld [vmem:[%s0 + $0x14] sm:$0xf]
  %v39 = vld [vmem:[%s0 + $0x18] sm:$0xf]
  %v40 = vld [vmem:[%s0 + $0x1c] sm:$0xf]
  %v41 = vld [vmem:[%s0 + $0x20] sm:$0xf]
  %v42 = vld [vmem:[%s0 + $0x24] sm:$0xf]
  %v43 = vld [vmem:[%s0 + $0x28] sm:$0xf]
  %v44 = vld [vmem:[%s0 + $0x2c] sm:$0xf]
  %v45 = vld [vmem:[%s0 + $0x30] sm:$0xf]
  %v46 = vld [vmem:[%s0 + $0x34] sm:$0xf]
  %v47 = vld [vmem:[%s0 + $0x38] sm:$0xf]
  %v48 = vld [vmem:[%s0 + $0x3c] sm:$0xf]
  %v49 = vld [vmem:[%s1] sm:$0xff]
  %v50 = vld [vmem:[%s1 + $0x8] sm:$0xff]
  %v51 = vld [vmem:[%s1 + $0x10] sm:$0xff]
  %v52 = vld [vmem:[%s1 + $0x18] sm:$0xff]
  %v53 = vld [vmem:[%s1 + $0x20] sm:$0xff]
  %v54 = vld [vmem:[%s1 + $0x28] sm:$0xff]
  %v55 = vld [vmem:[%s1 + $0x30] sm:$0xff]
  %v56 = vld [vmem:[%s1 + $0x38] sm:$0xff]
  %v57 = vld [vmem:[%s1 + $0x40] sm:$0xff]
  %v58 = vld [vmem:[%s1 + $0x48] sm:$0xff]
  %v59 = vld [vmem:[%s1 + $0x50] sm:$0xff]
  %v60 = vld [vmem:[%s1 + $0x58] sm:$0xff]
  %v61 = vld [vmem:[%s1 + $0x60] sm:$0xff]
  %v62 = vld [vmem:[%s1 + $0x68] sm:$0xff]
  %v63 = vld [vmem:[%s1 + $0x70] sm:$0xff]
  %v64 = vld [vmem:[%s1 + $0x78] sm:$0xff]
  %v81 = vunpack.c.l.b16 %v33
  %v82 = vunpack.c.l.b16 %v34
  %v83 = vunpack.c.l.b16 %v35
  %v84 = vunpack.c.l.b16 %v36
  %v85 = vunpack.c.l.b16 %v37
  %v86 = vunpack.c.l.b16 %v38
  %v87 = vunpack.c.l.b16 %v39
  %v88 = vunpack.c.l.b16 %v40
  %v89 = vunpack.c.l.b16 %v41
  %v90 = vunpack.c.l.b16 %v42
  %v91 = vunpack.c.l.b16 %v43
  %v92 = vunpack.c.l.b16 %v44
  %v93 = vunpack.c.l.b16 %v45
  %v94 = vunpack.c.l.b16 %v46
  %v95 = vunpack.c.l.b16 %v47
  %v96 = vunpack.c.l.b16 %v48
  %v97 = vpack.c.b16 %v82, %v81
  %v98 = vpack.c.b16 %v84, %v83
  %v99 = vpack.c.b16 %v86, %v85
  %v100 = vpack.c.b16 %v88, %v87
  %v101 = vpack.c.b16 %v90, %v89
  %v102 = vpack.c.b16 %v92, %v91
  %v103 = vpack.c.b16 %v94, %v93
  %v104 = vpack.c.b16 %v96, %v95
  %v129 = vunpack.c.l.b16 %v49
  %v130 = vunpack.c.h.b16 %v49
  %v131 = vunpack.c.l.b16 %v50
  %v132 = vunpack.c.h.b16 %v50
  %v133 = vunpack.c.l.b16 %v51
  %v134 = vunpack.c.h.b16 %v51
  %v135 = vunpack.c.l.b16 %v52
  %v136 = vunpack.c.h.b16 %v52
  %v137 = vunpack.c.l.b16 %v53
  %v138 = vunpack.c.h.b16 %v53
  %v139 = vunpack.c.l.b16 %v54
  %v140 = vunpack.c.h.b16 %v54
  %v141 = vunpack.c.l.b16 %v55
  %v142 = vunpack.c.h.b16 %v55
  %v143 = vunpack.c.l.b16 %v56
  %v144 = vunpack.c.h.b16 %v56
  %v145 = vunpack.c.l.b16 %v57
  %v146 = vunpack.c.h.b16 %v57
  %v147 = vunpack.c.l.b16 %v58
  %v148 = vunpack.c.h.b16 %v58
  %v149 = vunpack.c.l.b16 %v59
  %v150 = vunpack.c.h.b16 %v59
  %v151 = vunpack.c.l.b16 %v60
  %v152 = vunpack.c.h.b16 %v60
  %v153 = vunpack.c.l.b16 %v61
  %v154 = vunpack.c.h.b16 %v61
  %v155 = vunpack.c.l.b16 %v62
  %v156 = vunpack.c.h.b16 %v62
  %v157 = vunpack.c.l.b16 %v63
  %v158 = vunpack.c.h.b16 %v63
  %v159 = vunpack.c.l.b16 %v64
  %v160 = vunpack.c.h.b16 %v64
  %v161 = vpack.c.b16 %v131, %v129
  %v162 = vpack.c.b16 %v132, %v130
  %v163 = vpack.c.b16 %v135, %v133
  %v164 = vpack.c.b16 %v136, %v134
  %v165 = vpack.c.b16 %v139, %v137
  %v166 = vpack.c.b16 %v140, %v138
  %v167 = vpack.c.b16 %v143, %v141
  %v168 = vpack.c.b16 %v144, %v142
  %v169 = vpack.c.b16 %v147, %v145
  %v170 = vpack.c.b16 %v148, %v146
  %v171 = vpack.c.b16 %v151, %v149
  %v172 = vpack.c.b16 %v152, %v150
  %v173 = vpack.c.b16 %v155, %v153
  %v174 = vpack.c.b16 %v156, %v154
  %v175 = vpack.c.b16 %v159, %v157
  %v176 = vpack.c.b16 %v160, %v158
  %193 = vmatprep.subr.bf16.mxu0 %v176
  %194 = vmatpush1.bf16.msra.mxu0 %v175
  %195 = vmatprep.subr.bf16.mxu0 %v174
  %196 = vmatpush1.bf16.msra.mxu0 %v173
  %197 = vmatprep.subr.bf16.mxu0 %v172
  %198 = vmatpush1.bf16.msra.mxu0 %v171
  %199 = vmatprep.subr.bf16.mxu0 %v170
  %200 = vmatpush1.bf16.msra.mxu0 %v169
  %201 = vmatprep.subr.bf16.mxu0 %v168
  %202 = vmatpush1.bf16.msra.mxu0 %v167
  %203 = vmatprep.subr.bf16.mxu0 %v166
  %204 = vmatpush1.bf16.msra.mxu0 %v165
  %205 = vmatprep.subr.bf16.mxu0 %v164
  %206 = vmatpush1.bf16.msra.mxu0 %v163
  %207 = vmatprep.subr.bf16.mxu0 %v162
  %208 = vmatpush1.bf16.msra.mxu0 %v161
  %209 = vmatprep.subr.bf16.mxu0 0
  %210 = vmatpush2.bf16.msra.mxu0 0
  %211 = vmatprep.subr.bf16.mxu0 0
  %212 = vmatpush2.bf16.msra.mxu0 0
  %213 = vmatprep.subr.bf16.mxu0 0
  %214 = vmatpush2.bf16.msra.mxu0 0
  %215 = vmatprep.subr.bf16.mxu0 0
  %216 = vmatpush2.bf16.msra.mxu0 0
  %217 = vmatprep.subr.bf16.mxu0 0
  %218 = vmatpush2.bf16.msra.mxu0 0
  %219 = vmatprep.subr.bf16.mxu0 0
  %220 = vmatpush2.bf16.msra.mxu0 0
  %221 = vmatprep.subr.bf16.mxu0 0
  %222 = vmatpush2.bf16.msra.mxu0 0
  %223 = vmatprep.subr.bf16.mxu0 0
  %224 = vmatpush2.bf16.msra.mxu0 0
  %225 = vmatprep.mubr.bf16.mxu0 0
  %226 = vmatmul.mubr.bf16.gmra.mxu0 %v97
  %v227 = vpop.f32.mrf.mxu0
  %v228 = vadd.f32 0.0, %v227
  %v229 = vpop.f32.mrf.mxu0
  %v230 = vadd.f32 0.0, %v229
  %v231 = vpop.f32.mrf.mxu0
  %v232 = vadd.f32 0.0, %v231
  %v233 = vpop.f32.mrf.mxu0
  %v234 = vadd.f32 0.0, %v233
  %235 = vmatprep.mubr.bf16.mxu0 0
  %236 = vmatmul.mubr.bf16.gmra.mxu0 %v98
  %v237 = vpop.f32.mrf.mxu0
  %v238 = vadd.f32 0.0, %v237
  %v239 = vpop.f32.mrf.mxu0
  %v240 = vadd.f32 0.0, %v239
  %v241 = vpop.f32.mrf.mxu0
  %v242 = vadd.f32 0.0, %v241
  %v243 = vpop.f32.mrf.mxu0
  %v244 = vadd.f32 0.0, %v243
  %245 = vmatprep.mubr.bf16.mxu0 0
  %246 = vmatmul.mubr.bf16.gmra.mxu0 %v99
  %v247 = vpop.f32.mrf.mxu0
  %v248 = vadd.f32 0.0, %v247
  %v249 = vpop.f32.mrf.mxu0
  %v250 = vadd.f32 0.0, %v249
  %v251 = vpop.f32.mrf.mxu0
  %v252 = vadd.f32 0.0, %v251
  %v253 = vpop.f32.mrf.mxu0
  %v254 = vadd.f32 0.0, %v253
  %255 = vmatprep.mubr.bf16.mxu0 0
  %256 = vmatmul.mubr.bf16.gmra.mxu0 %v100
  %v257 = vpop.f32.mrf.mxu0
  %v258 = vadd.f32 0.0, %v257
  %v259 = vpop.f32.mrf.mxu0
  %v260 = vadd.f32 0.0, %v259
  %v261 = vpop.f32.mrf.mxu0
  %v262 = vadd.f32 0.0, %v261
  %v263 = vpop.f32.mrf.mxu0
  %v264 = vadd.f32 0.0, %v263
  %265 = vmatprep.mubr.bf16.mxu0 0
  %266 = vmatmul.mubr.bf16.gmra.mxu0 %v101
  %v267 = vpop.f32.mrf.mxu0
  %v268 = vadd.f32 0.0, %v267
  %v269 = vpop.f32.mrf.mxu0
  %v270 = vadd.f32 0.0, %v269
  %v271 = vpop.f32.mrf.mxu0
  %v272 = vadd.f32 0.0, %v271
  %v273 = vpop.f32.mrf.mxu0
  %v274 = vadd.f32 0.0, %v273
  %275 = vmatprep.mubr.bf16.mxu0 0
  %276 = vmatmul.mubr.bf16.gmra.mxu0 %v102
  %v277 = vpop.f32.mrf.mxu0
  %v278 = vadd.f32 0.0, %v277
  %v279 = vpop.f32.mrf.mxu0
  %v280 = vadd.f32 0.0, %v279
  %v281 = vpop.f32.mrf.mxu0
  %v282 = vadd.f32 0.0, %v281
  %v283 = vpop.f32.mrf.mxu0
  %v284 = vadd.f32 0.0, %v283
  %285 = vmatprep.mubr.bf16.mxu0 0
  %286 = vmatmul.mubr.bf16.gmra.mxu0 %v103
  %v287 = vpop.f32.mrf.mxu0
  %v288 = vadd.f32 0.0, %v287
  %v289 = vpop.f32.mrf.mxu0
  %v290 = vadd.f32 0.0, %v289
  %v291 = vpop.f32.mrf.mxu0
  %v292 = vadd.f32 0.0, %v291
  %v293 = vpop.f32.mrf.mxu0
  %v294 = vadd.f32 0.0, %v293
  %295 = vmatprep.mubr.bf16.mxu0 0
  %296 = vmatmul.mubr.bf16.gmra.mxu0 %v104
  %v297 = vpop.f32.mrf.mxu0
  %v298 = vadd.f32 0.0, %v297
  %v299 = vpop.f32.mrf.mxu0
  %v300 = vadd.f32 0.0, %v299
  %v301 = vpop.f32.mrf.mxu0
  %v302 = vadd.f32 0.0, %v301
  %v303 = vpop.f32.mrf.mxu0
  %v304 = vadd.f32 0.0, %v303
  %305 = vdwg.mxu0
  %v306 = vld [vmem:[%s2] sm:$0x1]
  %v307 = vld [vmem:[%s3] sm:$0x1]
  %v308 = vadd.f32 %v228, %v232
  %v309 = vadd.f32 %v308, %v238
  %v310 = vadd.f32 %v309, %v242
  %v311 = vadd.f32 %v310, %v248
  %v312 = vadd.f32 %v311, %v252
  %v313 = vadd.f32 %v312, %v258
  %v314 = vadd.f32 %v313, %v262
  %v315 = vadd.f32 %v314, %v268
  %v316 = vadd.f32 %v315, %v272
  %v317 = vadd.f32 %v316, %v278
  %v318 = vadd.f32 %v317, %v282
  %v319 = vadd.f32 %v318, %v288
  %v320 = vadd.f32 %v319, %v292
  %v321 = vadd.f32 %v320, %v298
  %v322 = vadd.f32 %v321, %v302
  %v323 = vrot.slane %v322, 4
  %v324 = vadd.f32 %v322, %v323
  %v325 = vrot.slane %v324, 2
  %v326 = vadd.f32 %v324, %v325
  %v327 = vrot.slane %v326, 1
  %v328 = vadd.f32 %v326, %v327
  %v329 = vmul.f32 %v228, %v228
  %v330 = vmul.f32 %v232, %v232
  %v331 = vmul.f32 %v238, %v238
  %v332 = vmul.f32 %v242, %v242
  %v333 = vmul.f32 %v248, %v248
  %v334 = vmul.f32 %v252, %v252
  %v335 = vmul.f32 %v258, %v258
  %v336 = vmul.f32 %v262, %v262
  %v337 = vmul.f32 %v268, %v268
  %v338 = vmul.f32 %v272, %v272
  %v339 = vmul.f32 %v278, %v278
  %v340 = vmul.f32 %v282, %v282
  %v341 = vmul.f32 %v288, %v288
  %v342 = vmul.f32 %v292, %v292
  %v343 = vmul.f32 %v298, %v298
  %v344 = vmul.f32 %v302, %v302
  %v345 = vadd.f32 %v329, %v330
  %v346 = vadd.f32 %v345, %v331
  %v347 = vadd.f32 %v346, %v332
  %v348 = vadd.f32 %v347, %v333
  %v349 = vadd.f32 %v348, %v334
  %v350 = vadd.f32 %v349, %v335
  %v351 = vadd.f32 %v350, %v336
  %v352 = vadd.f32 %v351, %v337
  %v353 = vadd.f32 %v352, %v338
  %v354 = vadd.f32 %v353, %v339
  %v355 = vadd.f32 %v354, %v340
  %v356 = vadd.f32 %v355, %v341
  %v357 = vadd.f32 %v356, %v342
  %v358 = vadd.f32 %v357, %v343
  %v359 = vadd.f32 %v358, %v344
  %v360 = vrot.slane %v359, 4
  %v361 = vadd.f32 %v359, %v360
  %v362 = vrot.slane %v361, 2
  %v363 = vadd.f32 %v361, %v362
  %v364 = vrot.slane %v363, 1
  %v365 = vadd.f32 %v363, %v364
  %v366 = vmul.f32 %v328, 0.0078125
  %v367 = vmul.f32 %v365, 0.0078125
  %v368 = vmul.f32 %v366, %v366
  %v369 = vsub.f32 %v367, %v368
  %v370 = vmax.f32 %v369, 0.0
  %v371 = vsub.f32 %v228, %v366
  %v372 = vsub.f32 %v232, %v366
  %v373 = vsub.f32 %v238, %v366
  %v374 = vsub.f32 %v242, %v366
  %v375 = vsub.f32 %v248, %v366
  %v376 = vsub.f32 %v252, %v366
  %v377 = vsub.f32 %v258, %v366
  %v378 = vsub.f32 %v262, %v366
  %v379 = vsub.f32 %v268, %v366
  %v380 = vsub.f32 %v272, %v366
  %v381 = vsub.f32 %v278, %v366
  %v382 = vsub.f32 %v282, %v366
  %v383 = vsub.f32 %v288, %v366
  %v384 = vsub.f32 %v292, %v366
  %v385 = vsub.f32 %v298, %v366
  %v386 = vsub.f32 %v302, %v366
  %v387 = vadd.f32 %v370, 1e-05
  %v388 = vrsqrt.pop %v387
  %v389 = vmul.f32 %v371, %v388
  %v390 = vmul.f32 %v372, %v388
  %v391 = vmul.f32 %v373, %v388
  %v392 = vmul.f32 %v374, %v388
  %v393 = vmul.f32 %v375, %v388
  %v394 = vmul.f32 %v376, %v388
  %v395 = vmul.f32 %v377, %v388
  %v396 = vmul.f32 %v378, %v388
  %v397 = vmul.f32 %v379, %v388
  %v398 = vmul.f32 %v380, %v388
  %v399 = vmul.f32 %v381, %v388
  %v400 = vmul.f32 %v382, %v388
  %v401 = vmul.f32 %v383, %v388
  %v402 = vmul.f32 %v384, %v388
  %v403 = vmul.f32 %v385, %v388
  %v404 = vmul.f32 %v386, %v388
  %v406 = vlaneseq
  %v407 = vshrl.u32 %v406, 7
  %v408 = vsub.s32 0, %v407
  %v409 = vrot.slane %v306, %v408
  %v411 = vmul.f32 %v389, %v409
  %v412 = vmul.f32 %v390, %v409
  %v413 = vmul.f32 %v391, %v409
  %v414 = vmul.f32 %v392, %v409
  %v415 = vmul.f32 %v393, %v409
  %v416 = vmul.f32 %v394, %v409
  %v417 = vmul.f32 %v395, %v409
  %v418 = vmul.f32 %v396, %v409
  %v419 = vmul.f32 %v397, %v409
  %v420 = vmul.f32 %v398, %v409
  %v421 = vmul.f32 %v399, %v409
  %v422 = vmul.f32 %v400, %v409
  %v423 = vmul.f32 %v401, %v409
  %v424 = vmul.f32 %v402, %v409
  %v425 = vmul.f32 %v403, %v409
  %v426 = vmul.f32 %v404, %v409
  %v428 = vlaneseq
  %v429 = vshrl.u32 %v428, 7
  %v430 = vsub.s32 0, %v429
  %v431 = vrot.slane %v307, %v430
  %v433 = vadd.f32 %v411, %v431
  %v434 = vadd.f32 %v412, %v431
  %v435 = vadd.f32 %v413, %v431
  %v436 = vadd.f32 %v414, %v431
  %v437 = vadd.f32 %v415, %v431
  %v438 = vadd.f32 %v416, %v431
  %v439 = vadd.f32 %v417, %v431
  %v440 = vadd.f32 %v418, %v431
  %v441 = vadd.f32 %v419, %v431
  %v442 = vadd.f32 %v420, %v431
  %v443 = vadd.f32 %v421, %v431
  %v444 = vadd.f32 %v422, %v431
  %v445 = vadd.f32 %v423, %v431
  %v446 = vadd.f32 %v424, %v431
  %v447 = vadd.f32 %v425, %v431
  %v448 = vadd.f32 %v426, %v431
  %v449 = vmax.f32 %v433, 0.0
  %v450 = vmax.f32 %v434, 0.0
  %v451 = vmax.f32 %v435, 0.0
  %v452 = vmax.f32 %v436, 0.0
  %v453 = vmax.f32 %v437, 0.0
  %v454 = vmax.f32 %v438, 0.0
  %v455 = vmax.f32 %v439, 0.0
  %v456 = vmax.f32 %v440, 0.0
  %v457 = vmax.f32 %v441, 0.0
  %v458 = vmax.f32 %v442, 0.0
  %v459 = vmax.f32 %v443, 0.0
  %v460 = vmax.f32 %v444, 0.0
  %v461 = vmax.f32 %v445, 0.0
  %v462 = vmax.f32 %v446, 0.0
  %v463 = vmax.f32 %v447, 0.0
  %v464 = vmax.f32 %v448, 0.0
  %v465 = vld [vmem:[%s7] sm:$0x1]
  %v466 = vld [vmem:[%s8] sm:$0x1]
  %v467 = vadd.f32 %v230, %v234
  %v468 = vadd.f32 %v467, %v240
  %v469 = vadd.f32 %v468, %v244
  %v470 = vadd.f32 %v469, %v250
  %v471 = vadd.f32 %v470, %v254
  %v472 = vadd.f32 %v471, %v260
  %v473 = vadd.f32 %v472, %v264
  %v474 = vadd.f32 %v473, %v270
  %v475 = vadd.f32 %v474, %v274
  %v476 = vadd.f32 %v475, %v280
  %v477 = vadd.f32 %v476, %v284
  %v478 = vadd.f32 %v477, %v290
  %v479 = vadd.f32 %v478, %v294
  %v480 = vadd.f32 %v479, %v300
  %v481 = vadd.f32 %v480, %v304
  %v482 = vrot.slane %v481, 4
  %v483 = vadd.f32 %v481, %v482
  %v484 = vrot.slane %v483, 2
  %v485 = vadd.f32 %v483, %v484
  %v486 = vrot.slane %v485, 1
  %v487 = vadd.f32 %v485, %v486
  %v488 = vmul.f32 %v230, %v230
  %v489 = vmul.f32 %v234, %v234
  %v490 = vmul.f32 %v240, %v240
  %v491 = vmul.f32 %v244, %v244
  %v492 = vmul.f32 %v250, %v250
  %v493 = vmul.f32 %v254, %v254
  %v494 = vmul.f32 %v260, %v260
  %v495 = vmul.f32 %v264, %v264
  %v496 = vmul.f32 %v270, %v270
  %v497 = vmul.f32 %v274, %v274
  %v498 = vmul.f32 %v280, %v280
  %v499 = vmul.f32 %v284, %v284
  %v500 = vmul.f32 %v290, %v290
  %v501 = vmul.f32 %v294, %v294
  %v502 = vmul.f32 %v300, %v300
  %v503 = vmul.f32 %v304, %v304
  %v504 = vadd.f32 %v488, %v489
  %v505 = vadd.f32 %v504, %v490
  %v506 = vadd.f32 %v505, %v491
  %v507 = vadd.f32 %v506, %v492
  %v508 = vadd.f32 %v507, %v493
  %v509 = vadd.f32 %v508, %v494
  %v510 = vadd.f32 %v509, %v495
  %v511 = vadd.f32 %v510, %v496
  %v512 = vadd.f32 %v511, %v497
  %v513 = vadd.f32 %v512, %v498
  %v514 = vadd.f32 %v513, %v499
  %v515 = vadd.f32 %v514, %v500
  %v516 = vadd.f32 %v515, %v501
  %v517 = vadd.f32 %v516, %v502
  %v518 = vadd.f32 %v517, %v503
  %v519 = vrot.slane %v518, 4
  %v520 = vadd.f32 %v518, %v519
  %v521 = vrot.slane %v520, 2
  %v522 = vadd.f32 %v520, %v521
  %v523 = vrot.slane %v522, 1
  %v524 = vadd.f32 %v522, %v523
  %v525 = vmul.f32 %v487, 0.0078125
  %v526 = vmul.f32 %v524, 0.0078125
  %v527 = vmul.f32 %v525, %v525
  %v528 = vsub.f32 %v526, %v527
  %v529 = vmax.f32 %v528, 0.0
  %v530 = vsub.f32 %v230, %v525
  %v531 = vsub.f32 %v234, %v525
  %v532 = vsub.f32 %v240, %v525
  %v533 = vsub.f32 %v244, %v525
  %v534 = vsub.f32 %v250, %v525
  %v535 = vsub.f32 %v254, %v525
  %v536 = vsub.f32 %v260, %v525
  %v537 = vsub.f32 %v264, %v525
  %v538 = vsub.f32 %v270, %v525
  %v539 = vsub.f32 %v274, %v525
  %v540 = vsub.f32 %v280, %v525
  %v541 = vsub.f32 %v284, %v525
  %v542 = vsub.f32 %v290, %v525
  %v543 = vsub.f32 %v294, %v525
  %v544 = vsub.f32 %v300, %v525
  %v545 = vsub.f32 %v304, %v525
  %v546 = vadd.f32 %v529, 1e-05
  %v547 = vrsqrt.pop %v546
  %v548 = vmul.f32 %v530, %v547
  %v549 = vmul.f32 %v531, %v547
  %v550 = vmul.f32 %v532, %v547
  %v551 = vmul.f32 %v533, %v547
  %v552 = vmul.f32 %v534, %v547
  %v553 = vmul.f32 %v535, %v547
  %v554 = vmul.f32 %v536, %v547
  %v555 = vmul.f32 %v537, %v547
  %v556 = vmul.f32 %v538, %v547
  %v557 = vmul.f32 %v539, %v547
  %v558 = vmul.f32 %v540, %v547
  %v559 = vmul.f32 %v541, %v547
  %v560 = vmul.f32 %v542, %v547
  %v561 = vmul.f32 %v543, %v547
  %v562 = vmul.f32 %v544, %v547
  %v563 = vmul.f32 %v545, %v547
  %v565 = vlaneseq
  %v566 = vshrl.u32 %v565, 7
  %v567 = vsub.s32 0, %v566
  %v568 = vrot.slane %v465, %v567
  %v570 = vmul.f32 %v548, %v568
  %v571 = vmul.f32 %v549, %v568
  %v572 = vmul.f32 %v550, %v568
  %v573 = vmul.f32 %v551, %v568
  %v574 = vmul.f32 %v552, %v568
  %v575 = vmul.f32 %v553, %v568
  %v576 = vmul.f32 %v554, %v568
  %v577 = vmul.f32 %v555, %v568
  %v578 = vmul.f32 %v556, %v568
  %v579 = vmul.f32 %v557, %v568
  %v580 = vmul.f32 %v558, %v568
  %v581 = vmul.f32 %v559, %v568
  %v582 = vmul.f32 %v560, %v568
  %v583 = vmul.f32 %v561, %v568
  %v584 = vmul.f32 %v562, %v568
  %v585 = vmul.f32 %v563, %v568
  %v587 = vlaneseq
  %v588 = vshrl.u32 %v587, 7
  %v589 = vsub.s32 0, %v588
  %v590 = vrot.slane %v466, %v589
  %v592 = vadd.f32 %v570, %v590
  %v593 = vadd.f32 %v571, %v590
  %v594 = vadd.f32 %v572, %v590
  %v595 = vadd.f32 %v573, %v590
  %v596 = vadd.f32 %v574, %v590
  %v597 = vadd.f32 %v575, %v590
  %v598 = vadd.f32 %v576, %v590
  %v599 = vadd.f32 %v577, %v590
  %v600 = vadd.f32 %v578, %v590
  %v601 = vadd.f32 %v579, %v590
  %v602 = vadd.f32 %v580, %v590
  %v603 = vadd.f32 %v581, %v590
  %v604 = vadd.f32 %v582, %v590
  %v605 = vadd.f32 %v583, %v590
  %v606 = vadd.f32 %v584, %v590
  %v607 = vadd.f32 %v585, %v590
  %v608 = vpack.c.bf16 %v450, %v449
  %v609 = vpack.c.bf16 %v452, %v451
  %v610 = vpack.c.bf16 %v454, %v453
  %v611 = vpack.c.bf16 %v456, %v455
  %v612 = vpack.c.bf16 %v458, %v457
  %v613 = vpack.c.bf16 %v460, %v459
  %v614 = vpack.c.bf16 %v462, %v461
  %v615 = vpack.c.bf16 %v464, %v463
  %v624 = vunpack.c.l.b16 %v608
  %v625 = vunpack.c.h.b16 %v608
  %v626 = vunpack.c.l.b16 %v609
  %v627 = vunpack.c.h.b16 %v609
  %v628 = vunpack.c.l.b16 %v610
  %v629 = vunpack.c.h.b16 %v610
  %v630 = vunpack.c.l.b16 %v611
  %v631 = vunpack.c.h.b16 %v611
  %v632 = vunpack.c.l.b16 %v612
  %v633 = vunpack.c.h.b16 %v612
  %v634 = vunpack.c.l.b16 %v613
  %v635 = vunpack.c.h.b16 %v613
  %v636 = vunpack.c.l.b16 %v614
  %v637 = vunpack.c.h.b16 %v614
  %v638 = vunpack.c.l.b16 %v615
  %v639 = vunpack.c.h.b16 %v615
  %v640 = vpack.c.b16 %v624, %v624
  %v641 = vpack.c.b16 %v625, %v625
  %v642 = vpack.c.b16 %v626, %v626
  %v643 = vpack.c.b16 %v627, %v627
  %v644 = vpack.c.b16 %v628, %v628
  %v645 = vpack.c.b16 %v629, %v629
  %v646 = vpack.c.b16 %v630, %v630
  %v647 = vpack.c.b16 %v631, %v631
  %v648 = vpack.c.b16 %v632, %v632
  %v649 = vpack.c.b16 %v633, %v633
  %v650 = vpack.c.b16 %v634, %v634
  %v651 = vpack.c.b16 %v635, %v635
  %v652 = vpack.c.b16 %v636, %v636
  %v653 = vpack.c.b16 %v637, %v637
  %v654 = vpack.c.b16 %v638, %v638
  %v655 = vpack.c.b16 %v639, %v639
  %656 = vst [vmem:[#allocation2] sm:$0xf] 0
  %657 = vst [vmem:[#allocation2 + $0x4] sm:$0x1] 0
  %658 = vst [vmem:[#allocation2 + $0x50] sm:$0xf] 0
  %659 = vst [vmem:[#allocation2 + $0x54] sm:$0x1] 0
  %s660 = scalar_lea.vmem [#allocation2], 72
  %661 = vst [vmem:[%s660] sm:$0xf] 0
  %662 = vst [vmem:[%s660 + $0x4] sm:$0x1] 0
  %663 = vst [vmem:[%s660 + $0x50] sm:$0xf] 0
  %664 = vst [vmem:[%s660 + $0x54] sm:$0x1] 0
  %s665 = scalar_lea.vmem [#allocation2], 8
  %vm666 = vcmask 1040384
  %vm667 = vsmask.f32 256
  %vm668 = vmand %vm666, %vm667
  %v669 = vld [vmem:[%s665] sm:$0x1]
  %v670 = vsel %vm668, 0, %v669
  %671 = vst [vmem:[%s665] sm:$0x1] %v670
  %v672 = vld [vmem:[%s665 + $0x8] sm:$0x1]
  %v673 = vsel %vm668, 0, %v672
  %674 = vst [vmem:[%s665 + $0x8] sm:$0x1] %v673
  %v675 = vld [vmem:[%s665 + $0x10] sm:$0x1]
  %v676 = vsel %vm668, 0, %v675
  %677 = vst [vmem:[%s665 + $0x10] sm:$0x1] %v676
  %v678 = vld [vmem:[%s665 + $0x18] sm:$0x1]
  %v679 = vsel %vm668, 0, %v678
  %680 = vst [vmem:[%s665 + $0x18] sm:$0x1] %v679
  %v681 = vld [vmem:[%s665 + $0x20] sm:$0x1]
  %v682 = vsel %vm668, 0, %v681
  %683 = vst [vmem:[%s665 + $0x20] sm:$0x1] %v682
  %v684 = vld [vmem:[%s665 + $0x28] sm:$0x1]
  %v685 = vsel %vm668, 0, %v684
  %686 = vst [vmem:[%s665 + $0x28] sm:$0x1] %v685
  %v687 = vld [vmem:[%s665 + $0x30] sm:$0x1]
  %v688 = vsel %vm668, 0, %v687
  %689 = vst [vmem:[%s665 + $0x30] sm:$0x1] %v688
  %v690 = vld [vmem:[%s665 + $0x38] sm:$0x1]
  %v691 = vsel %vm668, 0, %v690
  %692 = vst [vmem:[%s665 + $0x38] sm:$0x1] %v691
  %v693 = vld [vmem:[%s665 + $0x50] sm:$0x1]
  %v694 = vsel %vm668, 0, %v693
  %695 = vst [vmem:[%s665 + $0x50] sm:$0x1] %v694
  %v696 = vld [vmem:[%s665 + $0x58] sm:$0x1]
  %v697 = vsel %vm668, 0, %v696
  %698 = vst [vmem:[%s665 + $0x58] sm:$0x1] %v697
  %v699 = vld [vmem:[%s665 + $0x60] sm:$0x1]
  %v700 = vsel %vm668, 0, %v699
  %701 = vst [vmem:[%s665 + $0x60] sm:$0x1] %v700
  %v702 = vld [vmem:[%s665 + $0x68] sm:$0x1]
  %v703 = vsel %vm668, 0, %v702
  %704 = vst [vmem:[%s665 + $0x68] sm:$0x1] %v703
  %v705 = vld [vmem:[%s665 + $0x70] sm:$0x1]
  %v706 = vsel %vm668, 0, %v705
  %707 = vst [vmem:[%s665 + $0x70] sm:$0x1] %v706
  %v708 = vld [vmem:[%s665 + $0x78] sm:$0x1]
  %v709 = vsel %vm668, 0, %v708
  %710 = vst [vmem:[%s665 + $0x78] sm:$0x1] %v709
  %v711 = vld [vmem:[%s665 + $0x80] sm:$0x1]
  %v712 = vsel %vm668, 0, %v711
  %713 = vst [vmem:[%s665 + $0x80] sm:$0x1] %v712
  %v714 = vld [vmem:[%s665 + $0x88] sm:$0x1]
  %v715 = vsel %vm668, 0, %v714
  %716 = vst [vmem:[%s665 + $0x88] sm:$0x1] %v715
  %vm717 = vsmask.f32 7938
  %vm718 = vmand %vm666, %vm717
  %v719 = vld [vmem:[%s665 + $0x4] sm:$0x1]
  %v720 = vsel %vm718, 0, %v719
  %721 = vst [vmem:[%s665 + $0x4] sm:$0x1] %v720
  %v722 = vld [vmem:[%s665 + $0xc] sm:$0x1]
  %v723 = vsel %vm718, 0, %v722
  %724 = vst [vmem:[%s665 + $0xc] sm:$0x1] %v723
  %v725 = vld [vmem:[%s665 + $0x14] sm:$0x1]
  %v726 = vsel %vm718, 0, %v725
  %727 = vst [vmem:[%s665 + $0x14] sm:$0x1] %v726
  %v728 = vld [vmem:[%s665 + $0x1c] sm:$0x1]
  %v729 = vsel %vm718, 0, %v728
  %730 = vst [vmem:[%s665 + $0x1c] sm:$0x1] %v729
  %v731 = vld [vmem:[%s665 + $0x24] sm:$0x1]
  %v732 = vsel %vm718, 0, %v731
  %733 = vst [vmem:[%s665 + $0x24] sm:$0x1] %v732
  %v734 = vld [vmem:[%s665 + $0x2c] sm:$0x1]
  %v735 = vsel %vm718, 0, %v734
  %736 = vst [vmem:[%s665 + $0x2c] sm:$0x1] %v735
  %v737 = vld [vmem:[%s665 + $0x34] sm:$0x1]
  %v738 = vsel %vm718, 0, %v737
  %739 = vst [vmem:[%s665 + $0x34] sm:$0x1] %v738
  %v740 = vld [vmem:[%s665 + $0x3c] sm:$0x1]
  %v741 = vsel %vm718, 0, %v740
  %742 = vst [vmem:[%s665 + $0x3c] sm:$0x1] %v741
  %v743 = vld [vmem:[%s665 + $0x54] sm:$0x1]
  %v744 = vsel %vm718, 0, %v743
  %745 = vst [vmem:[%s665 + $0x54] sm:$0x1] %v744
  %v746 = vld [vmem:[%s665 + $0x5c] sm:$0x1]
  %v747 = vsel %vm718, 0, %v746
  %748 = vst [vmem:[%s665 + $0x5c] sm:$0x1] %v747
  %v749 = vld [vmem:[%s665 + $0x64] sm:$0x1]
  %v750 = vsel %vm718, 0, %v749
  %751 = vst [vmem:[%s665 + $0x64] sm:$0x1] %v750
  %v752 = vld [vmem:[%s665 + $0x6c] sm:$0x1]
  %v753 = vsel %vm718, 0, %v752
  %754 = vst [vmem:[%s665 + $0x6c] sm:$0x1] %v753
  %v755 = vld [vmem:[%s665 + $0x74] sm:$0x1]
  %v756 = vsel %vm718, 0, %v755
  %757 = vst [vmem:[%s665 + $0x74] sm:$0x1] %v756
  %v758 = vld [vmem:[%s665 + $0x7c] sm:$0x1]
  %v759 = vsel %vm718, 0, %v758
  %760 = vst [vmem:[%s665 + $0x7c] sm:$0x1] %v759
  %v761 = vld [vmem:[%s665 + $0x84] sm:$0x1]
  %v762 = vsel %vm718, 0, %v761
  %763 = vst [vmem:[%s665 + $0x84] sm:$0x1] %v762
  %v764 = vld [vmem:[%s665 + $0x8c] sm:$0x1]
  %v765 = vsel %vm718, 0, %v764
  %766 = vst [vmem:[%s665 + $0x8c] sm:$0x1] %v765
  %v768 = vshrl.u32 %v640, 16
  %v770 = vrot.slane %v768, 7
  %v771 = vshll.u32 %v640, 16
  %v773 = vor.u32 %v770, %v771
  %v774 = vrot.slane %v770, 4
  %v776 = vshrl.u32 %v641, 16
  %v778 = vrot.slane %v776, 7
  %v779 = vshll.u32 %v641, 16
  %v781 = vor.u32 %v778, %v779
  %v782 = vrot.slane %v778, 4
  %v784 = vshrl.u32 %v642, 16
  %v786 = vrot.slane %v784, 7
  %v787 = vshll.u32 %v642, 16
  %v789 = vor.u32 %v786, %v787
  %v790 = vrot.slane %v786, 4
  %v792 = vshrl.u32 %v643, 16
  %v794 = vrot.slane %v792, 7
  %v795 = vshll.u32 %v643, 16
  %v797 = vor.u32 %v794, %v795
  %v798 = vrot.slane %v794, 4
  %v800 = vshrl.u32 %v644, 16
  %v802 = vrot.slane %v800, 7
  %v803 = vshll.u32 %v644, 16
  %v805 = vor.u32 %v802, %v803
  %v806 = vrot.slane %v802, 4
  %v808 = vshrl.u32 %v645, 16
  %v810 = vrot.slane %v808, 7
  %v811 = vshll.u32 %v645, 16
  %v813 = vor.u32 %v810, %v811
  %v814 = vrot.slane %v810, 4
  %v816 = vshrl.u32 %v646, 16
  %v818 = vrot.slane %v816, 7
  %v819 = vshll.u32 %v646, 16
  %v821 = vor.u32 %v818, %v819
  %v822 = vrot.slane %v818, 4
  %v824 = vshrl.u32 %v647, 16
  %v826 = vrot.slane %v824, 7
  %v827 = vshll.u32 %v647, 16
  %v829 = vor.u32 %v826, %v827
  %v830 = vrot.slane %v826, 4
  %v832 = vshrl.u32 %v648, 16
  %v834 = vrot.slane %v832, 7
  %v835 = vshll.u32 %v648, 16
  %v837 = vor.u32 %v834, %v835
  %v838 = vrot.slane %v834, 4
  %v840 = vshrl.u32 %v649, 16
  %v842 = vrot.slane %v840, 7
  %v843 = vshll.u32 %v649, 16
  %v845 = vor.u32 %v842, %v843
  %v846 = vrot.slane %v842, 4
  %v848 = vshrl.u32 %v650, 16
  %v850 = vrot.slane %v848, 7
  %v851 = vshll.u32 %v650, 16
  %v853 = vor.u32 %v850, %v851
  %v854 = vrot.slane %v850, 4
  %v856 = vshrl.u32 %v651, 16
  %v858 = vrot.slane %v856, 7
  %v859 = vshll.u32 %v651, 16
  %v861 = vor.u32 %v858, %v859
  %v862 = vrot.slane %v858, 4
  %v864 = vshrl.u32 %v652, 16
  %v866 = vrot.slane %v864, 7
  %v867 = vshll.u32 %v652, 16
  %v869 = vor.u32 %v866, %v867
  %v870 = vrot.slane %v866, 4
  %v872 = vshrl.u32 %v653, 16
  %v874 = vrot.slane %v872, 7
  %v875 = vshll.u32 %v653, 16
  %v877 = vor.u32 %v874, %v875
  %v878 = vrot.slane %v874, 4
  %v880 = vshrl.u32 %v654, 16
  %v882 = vrot.slane %v880, 7
  %v883 = vshll.u32 %v654, 16
  %v885 = vor.u32 %v882, %v883
  %v886 = vrot.slane %v882, 4
  %v888 = vshrl.u32 %v655, 16
  %v890 = vrot.slane %v888, 7
  %v891 = vshll.u32 %v655, 16
  %v893 = vor.u32 %v890, %v891
  %v894 = vrot.slane %v890, 4
  %vm927 = vcmask 1043456
  %vm928 = vmand %vm927, %vm717
  %v929 = vld [vmem:[%s665] sm:$0xf]
  %v930 = vsel %vm928, %v773, %v929
  %931 = vst [vmem:[%s665] sm:$0xf] %v930
  %v932 = vld [vmem:[%s665 + $0x4] sm:$0x1]
  %v933 = vsel %vm668, %v774, %v932
  %934 = vst [vmem:[%s665 + $0x4] sm:$0x1] %v933
  %v935 = vld [vmem:[%s665 + $0x8] sm:$0xf]
  %v936 = vsel %vm928, %v781, %v935
  %937 = vst [vmem:[%s665 + $0x8] sm:$0xf] %v936
  %v938 = vld [vmem:[%s665 + $0xc] sm:$0x1]
  %v939 = vsel %vm668, %v782, %v938
  %940 = vst [vmem:[%s665 + $0xc] sm:$0x1] %v939
  %v941 = vld [vmem:[%s665 + $0x10] sm:$0xf]
  %v942 = vsel %vm928, %v789, %v941
  %943 = vst [vmem:[%s665 + $0x10] sm:$0xf] %v942
  %v944 = vld [vmem:[%s665 + $0x14] sm:$0x1]
  %v945 = vsel %vm668, %v790, %v944
  %946 = vst [vmem:[%s665 + $0x14] sm:$0x1] %v945
  %v947 = vld [vmem:[%s665 + $0x18] sm:$0xf]
  %v948 = vsel %vm928, %v797, %v947
  %949 = vst [vmem:[%s665 + $0x18] sm:$0xf] %v948
  %v950 = vld [vmem:[%s665 + $0x1c] sm:$0x1]
  %v951 = vsel %vm668, %v798, %v950
  %952 = vst [vmem:[%s665 + $0x1c] sm:$0x1] %v951
  %v953 = vld [vmem:[%s665 + $0x20] sm:$0xf]
  %v954 = vsel %vm928, %v805, %v953
  %955 = vst [vmem:[%s665 + $0x20] sm:$0xf] %v954
  %v956 = vld [vmem:[%s665 + $0x24] sm:$0x1]
  %v957 = vsel %vm668, %v806, %v956
  %958 = vst [vmem:[%s665 + $0x24] sm:$0x1] %v957
  %v959 = vld [vmem:[%s665 + $0x28] sm:$0xf]
  %v960 = vsel %vm928, %v813, %v959
  %961 = vst [vmem:[%s665 + $0x28] sm:$0xf] %v960
  %v962 = vld [vmem:[%s665 + $0x2c] sm:$0x1]
  %v963 = vsel %vm668, %v814, %v962
  %964 = vst [vmem:[%s665 + $0x2c] sm:$0x1] %v963
  %v965 = vld [vmem:[%s665 + $0x30] sm:$0xf]
  %v966 = vsel %vm928, %v821, %v965
  %967 = vst [vmem:[%s665 + $0x30] sm:$0xf] %v966
  %v968 = vld [vmem:[%s665 + $0x34] sm:$0x1]
  %v969 = vsel %vm668, %v822, %v968
  %970 = vst [vmem:[%s665 + $0x34] sm:$0x1] %v969
  %v971 = vld [vmem:[%s665 + $0x38] sm:$0xf]
  %v972 = vsel %vm928, %v829, %v971
  %973 = vst [vmem:[%s665 + $0x38] sm:$0xf] %v972
  %v974 = vld [vmem:[%s665 + $0x3c] sm:$0x1]
  %v975 = vsel %vm668, %v830, %v974
  %976 = vst [vmem:[%s665 + $0x3c] sm:$0x1] %v975
  %v977 = vld [vmem:[%s665 + $0x50] sm:$0xf]
  %v978 = vsel %vm928, %v837, %v977
  %979 = vst [vmem:[%s665 + $0x50] sm:$0xf] %v978
  %v980 = vld [vmem:[%s665 + $0x54] sm:$0x1]
  %v981 = vsel %vm668, %v838, %v980
  %982 = vst [vmem:[%s665 + $0x54] sm:$0x1] %v981
  %v983 = vld [vmem:[%s665 + $0x58] sm:$0xf]
  %v984 = vsel %vm928, %v845, %v983
  %985 = vst [vmem:[%s665 + $0x58] sm:$0xf] %v984
  %v986 = vld [vmem:[%s665 + $0x5c] sm:$0x1]
  %v987 = vsel %vm668, %v846, %v986
  %988 = vst [vmem:[%s665 + $0x5c] sm:$0x1] %v987
  %v989 = vld [vmem:[%s665 + $0x60] sm:$0xf]
  %v990 = vsel %vm928, %v853, %v989
  %991 = vst [vmem:[%s665 + $0x60] sm:$0xf] %v990
  %v992 = vld [vmem:[%s665 + $0x64] sm:$0x1]
  %v993 = vsel %vm668, %v854, %v992
  %994 = vst [vmem:[%s665 + $0x64] sm:$0x1] %v993
  %v995 = vld [vmem:[%s665 + $0x68] sm:$0xf]
  %v996 = vsel %vm928, %v861, %v995
  %997 = vst [vmem:[%s665 + $0x68] sm:$0xf] %v996
  %v998 = vld [vmem:[%s665 + $0x6c] sm:$0x1]
  %v999 = vsel %vm668, %v862, %v998
  %1000 = vst [vmem:[%s665 + $0x6c] sm:$0x1] %v999
  %v1001 = vld [vmem:[%s665 + $0x70] sm:$0xf]
  %v1002 = vsel %vm928, %v869, %v1001
  %1003 = vst [vmem:[%s665 + $0x70] sm:$0xf] %v1002
  %v1004 = vld [vmem:[%s665 + $0x74] sm:$0x1]
  %v1005 = vsel %vm668, %v870, %v1004
  %1006 = vst [vmem:[%s665 + $0x74] sm:$0x1] %v1005
  %v1007 = vld [vmem:[%s665 + $0x78] sm:$0xf]
  %v1008 = vsel %vm928, %v877, %v1007
  %1009 = vst [vmem:[%s665 + $0x78] sm:$0xf] %v1008
  %v1010 = vld [vmem:[%s665 + $0x7c] sm:$0x1]
  %v1011 = vsel %vm668, %v878, %v1010
  %1012 = vst [vmem:[%s665 + $0x7c] sm:$0x1] %v1011
  %v1013 = vld [vmem:[%s665 + $0x80] sm:$0xf]
  %v1014 = vsel %vm928, %v885, %v1013
  %1015 = vst [vmem:[%s665 + $0x80] sm:$0xf] %v1014
  %v1016 = vld [vmem:[%s665 + $0x84] sm:$0x1]
  %v1017 = vsel %vm668, %v886, %v1016
  %1018 = vst [vmem:[%s665 + $0x84] sm:$0x1] %v1017
  %v1019 = vld [vmem:[%s665 + $0x88] sm:$0xf]
  %v1020 = vsel %vm928, %v893, %v1019
  %1021 = vst [vmem:[%s665 + $0x88] sm:$0xf] %v1020
  %v1022 = vld [vmem:[%s665 + $0x8c] sm:$0x1]
  %v1023 = vsel %vm668, %v894, %v1022
  %1024 = vst [vmem:[%s665 + $0x8c] sm:$0x1] %v1023
  %v1025 = vld [vmem:[#allocation2] sm:$0xf]
  %v1026 = vld [vmem:[#allocation2 + $0x8] sm:$0xf]
  %v1027 = vld [vmem:[#allocation2 + $0x10] sm:$0xf]
  %v1028 = vld [vmem:[#allocation2 + $0x18] sm:$0xf]
  %v1029 = vld [vmem:[#allocation2 + $0x20] sm:$0xf]
  %v1030 = vld [vmem:[#allocation2 + $0x28] sm:$0xf]
  %v1031 = vld [vmem:[#allocation2 + $0x30] sm:$0xf]
  %v1032 = vld [vmem:[#allocation2 + $0x38] sm:$0xf]
  %v1033 = vld [vmem:[#allocation2 + $0x50] sm:$0xf]
  %v1034 = vld [vmem:[#allocation2 + $0x58] sm:$0xf]
  %v1035 = vld [vmem:[#allocation2 + $0x60] sm:$0xf]
  %v1036 = vld [vmem:[#allocation2 + $0x68] sm:$0xf]
  %v1037 = vld [vmem:[#allocation2 + $0x70] sm:$0xf]
  %v1038 = vld [vmem:[#allocation2 + $0x78] sm:$0xf]
  %v1039 = vld [vmem:[#allocation2 + $0x80] sm:$0xf]
  %v1040 = vld [vmem:[#allocation2 + $0x88] sm:$0xf]
  %1041 = vst [vmem:[#allocation3] sm:$0xf] %v1025
  %1042 = vst [vmem:[#allocation3 + $0x24] sm:$0xf] %v1026
  %1043 = vst [vmem:[#allocation3 + $0x48] sm:$0xf] %v1027
  %1044 = vst [vmem:[#allocation3 + $0x6c] sm:$0xf] %v1028
  %1045 = vst [vmem:[#allocation3 + $0x90] sm:$0xf] %v1029
  %1046 = vst [vmem:[#allocation3 + $0xb4] sm:$0xf] %v1030
  %1047 = vst [vmem:[#allocation3 + $0xd8] sm:$0xf] %v1031
  %1048 = vst [vmem:[#allocation3 + $0xfc] sm:$0xf] %v1032
  %1049 = vst [vmem:[#allocation3 + $0x120] sm:$0xf] %v1033
  %1050 = vst [vmem:[#allocation3 + $0x144] sm:$0xf] %v1034
  %1051 = vst [vmem:[#allocation3 + $0x168] sm:$0xf] %v1035
  %1052 = vst [vmem:[#allocation3 + $0x18c] sm:$0xf] %v1036
  %1053 = vst [vmem:[#allocation3 + $0x1b0] sm:$0xf] %v1037
  %1054 = vst [vmem:[#allocation3 + $0x1d4] sm:$0xf] %v1038
  %1055 = vst [vmem:[#allocation3 + $0x1f8] sm:$0xf] %v1039
  %1056 = vst [vmem:[#allocation3 + $0x21c] sm:$0xf] %v1040
  %v1057 = vld [vmem:[#allocation2] sm:$0xf]
  %v1058 = vld [vmem:[#allocation2 + $0x4] sm:$0x1]
  %v1059 = vld [vmem:[#allocation2 + $0x8] sm:$0xf]
  %v1060 = vld [vmem:[#allocation2 + $0xc] sm:$0x1]
  %v1061 = vld [vmem:[#allocation2 + $0x10] sm:$0xf]
  %v1062 = vld [vmem:[#allocation2 + $0x14] sm:$0x1]
  %v1063 = vld [vmem:[#allocation2 + $0x18] sm:$0xf]
  %v1064 = vld [vmem:[#allocation2 + $0x1c] sm:$0x1]
  %v1065 = vld [vmem:[#allocation2 + $0x20] sm:$0xf]
  %v1066 = vld [vmem:[#allocation2 + $0x24] sm:$0x1]
  %v1067 = vld [vmem:[#allocation2 + $0x28] sm:$0xf]
  %v1068 = vld [vmem:[#allocation2 + $0x2c] sm:$0x1]
  %v1069 = vld [vmem:[#allocation2 + $0x30] sm:$0xf]
  %v1070 = vld [vmem:[#allocation2 + $0x34] sm:$0x1]
  %v1071 = vld [vmem:[#allocation2 + $0x38] sm:$0xf]
  %v1072 = vld [vmem:[#allocation2 + $0x3c] sm:$0x1]
  %v1073 = vld [vmem:[#allocation2 + $0x50] sm:$0xf]
  %v1074 = vld [vmem:[#allocation2 + $0x54] sm:$0x1]
  %v1075 = vld [vmem:[#allocation2 + $0x58] sm:$0xf]
  %v1076 = vld [vmem:[#allocation2 + $0x5c] sm:$0x1]
  %v1077 = vld [vmem:[#allocation2 + $0x60] sm:$0xf]
  %v1078 = vld [vmem:[#allocation2 + $0x64] sm:$0x1]
  %v1079 = vld [vmem:[#allocation2 + $0x68] sm:$0xf]
  %v1080 = vld [vmem:[#allocation2 + $0x6c] sm:$0x1]
  %v1081 = vld [vmem:[#allocation2 + $0x70] sm:$0xf]
  %v1082 = vld [vmem:[#allocation2 + $0x74] sm:$0x1]
  %v1083 = vld [vmem:[#allocation2 + $0x78] sm:$0xf]
  %v1084 = vld [vmem:[#allocation2 + $0x7c] sm:$0x1]
  %v1085 = vld [vmem:[#allocation2 + $0x80] sm:$0xf]
  %v1086 = vld [vmem:[#allocation2 + $0x84] sm:$0x1]
  %v1087 = vld [vmem:[#allocation2 + $0x88] sm:$0xf]
  %v1088 = vld [vmem:[#allocation2 + $0x8c] sm:$0x1]
  %vm1089 = vsmask.f32 3328
  %vm1090 = vsmask.f32 7440
  %vm1091 = vmor %vm1089, %vm1090
  %v1093 = vshrl.u32 %v1057, 16
  %v1095 = vrot.slane %v1093, 4
  %v1096 = vshll.u32 %v1057, 16
  %v1098 = vrot.slane %v1096, 5
  %v1099 = vor.u32 %v1095, %v1098
  %v1100 = vrot.slane %v1099, 4
  %v1102 = vshll.u32 %v1058, 16
  %v1104 = vrot.slane %v1102, 5
  %v1105 = vsel %vm1091, %v1100, %v1104
  %v1107 = vshrl.u32 %v1059, 16
  %v1109 = vrot.slane %v1107, 4
  %v1110 = vshll.u32 %v1059, 16
  %v1112 = vrot.slane %v1110, 5
  %v1113 = vor.u32 %v1109, %v1112
  %v1114 = vrot.slane %v1113, 4
  %v1116 = vshll.u32 %v1060, 16
  %v1118 = vrot.slane %v1116, 5
  %v1119 = vsel %vm1091, %v1114, %v1118
  %v1121 = vshrl.u32 %v1061, 16
  %v1123 = vrot.slane %v1121, 4
  %v1124 = vshll.u32 %v1061, 16
  %v1126 = vrot.slane %v1124, 5
  %v1127 = vor.u32 %v1123, %v1126
  %v1128 = vrot.slane %v1127, 4
  %v1130 = vshll.u32 %v1062, 16
  %v1132 = vrot.slane %v1130, 5
  %v1133 = vsel %vm1091, %v1128, %v1132
  %v1135 = vshrl.u32 %v1063, 16
  %v1137 = vrot.slane %v1135, 4
  %v1138 = vshll.u32 %v1063, 16
  %v1140 = vrot.slane %v1138, 5
  %v1141 = vor.u32 %v1137, %v1140
  %v1142 = vrot.slane %v1141, 4
  %v1144 = vshll.u32 %v1064, 16
  %v1146 = vrot.slane %v1144, 5
  %v1147 = vsel %vm1091, %v1142, %v1146
  %v1149 = vshrl.u32 %v1065, 16
  %v1151 = vrot.slane %v1149, 4
  %v1152 = vshll.u32 %v1065, 16
  %v1154 = vrot.slane %v1152, 5
  %v1155 = vor.u32 %v1151, %v1154
  %v1156 = vrot.slane %v1155, 4
  %v1158 = vshll.u32 %v1066, 16
  %v1160 = vrot.slane %v1158, 5
  %v1161 = vsel %vm1091, %v1156, %v1160
  %v1163 = vshrl.u32 %v1067, 16
  %v1165 = vrot.slane %v1163, 4
  %v1166 = vshll.u32 %v1067, 16
  %v1168 = vrot.slane %v1166, 5
  %v1169 = vor.u32 %v1165, %v1168
  %v1170 = vrot.slane %v1169, 4
  %v1172 = vshll.u32 %v1068, 16
  %v1174 = vrot.slane %v1172, 5
  %v1175 = vsel %vm1091, %v1170, %v1174
  %v1177 = vshrl.u32 %v1069, 16
  %v1179 = vrot.slane %v1177, 4
  %v1180 = vshll.u32 %v1069, 16
  %v1182 = vrot.slane %v1180, 5
  %v1183 = vor.u32 %v1179, %v1182
  %v1184 = vrot.slane %v1183, 4
  %v1186 = vshll.u32 %v1070, 16
  %v1188 = vrot.slane %v1186, 5
  %v1189 = vsel %vm1091, %v1184, %v1188
  %v1191 = vshrl.u32 %v1071, 16
  %v1193 = vrot.slane %v1191, 4
  %v1194 = vshll.u32 %v1071, 16
  %v1196 = vrot.slane %v1194, 5
  %v1197 = vor.u32 %v1193, %v1196
  %v1198 = vrot.slane %v1197, 4
  %v1200 = vshll.u32 %v1072, 16
  %v1202 = vrot.slane %v1200, 5
  %v1203 = vsel %vm1091, %v1198, %v1202
  %v1205 = vshrl.u32 %v1073, 16
  %v1207 = vrot.slane %v1205, 4
  %v1208 = vshll.u32 %v1073, 16
  %v1210 = vrot.slane %v1208, 5
  %v1211 = vor.u32 %v1207, %v1210
  %v1212 = vrot.slane %v1211, 4
  %v1214 = vshll.u32 %v1074, 16
  %v1216 = vrot.slane %v1214, 5
  %v1217 = vsel %vm1091, %v1212, %v1216
  %v1219 = vshrl.u32 %v1075, 16
  %v1221 = vrot.slane %v1219, 4
  %v1222 = vshll.u32 %v1075, 16
  %v1224 = vrot.slane %v1222, 5
  %v1225 = vor.u32 %v1221, %v1224
  %v1226 = vrot.slane %v1225, 4
  %v1228 = vshll.u32 %v1076, 16
  %v1230 = vrot.slane %v1228, 5
  %v1231 = vsel %vm1091, %v1226, %v1230
  %v1233 = vshrl.u32 %v1077, 16
  %v1235 = vrot.slane %v1233, 4
  %v1236 = vshll.u32 %v1077, 16
  %v1238 = vrot.slane %v1236, 5
  %v1239 = vor.u32 %v1235, %v1238
  %v1240 = vrot.slane %v1239, 4
  %v1242 = vshll.u32 %v1078, 16
  %v1244 = vrot.slane %v1242, 5
  %v1245 = vsel %vm1091, %v1240, %v1244
  %v1247 = vshrl.u32 %v1079, 16
  %v1249 = vrot.slane %v1247, 4
  %v1250 = vshll.u32 %v1079, 16
  %v1252 = vrot.slane %v1250, 5
  %v1253 = vor.u32 %v1249, %v1252
  %v1254 = vrot.slane %v1253, 4
  %v1256 = vshll.u32 %v1080, 16
  %v1258 = vrot.slane %v1256, 5
  %v1259 = vsel %vm1091, %v1254, %v1258
  %v1261 = vshrl.u32 %v1081, 16
  %v1263 = vrot.slane %v1261, 4
  %v1264 = vshll.u32 %v1081, 16
  %v1266 = vrot.slane %v1264, 5
  %v1267 = vor.u32 %v1263, %v1266
  %v1268 = vrot.slane %v1267, 4
  %v1270 = vshll.u32 %v1082, 16
  %v1272 = vrot.slane %v1270, 5
  %v1273 = vsel %vm1091, %v1268, %v1272
  %v1275 = vshrl.u32 %v1083, 16
  %v1277 = vrot.slane %v1275, 4
  %v1278 = vshll.u32 %v1083, 16
  %v1280 = vrot.slane %v1278, 5
  %v1281 = vor.u32 %v1277, %v1280
  %v1282 = vrot.slane %v1281, 4
  %v1284 = vshll.u32 %v1084, 16
  %v1286 = vrot.slane %v1284, 5
  %v1287 = vsel %vm1091, %v1282, %v1286
  %v1289 = vshrl.u32 %v1085, 16
  %v1291 = vrot.slane %v1289, 4
  %v1292 = vshll.u32 %v1085, 16
  %v1294 = vrot.slane %v1292, 5
  %v1295 = vor.u32 %v1291, %v1294
  %v1296 = vrot.slane %v1295, 4
  %v1298 = vshll.u32 %v1086, 16
  %v1300 = vrot.slane %v1298, 5
  %v1301 = vsel %vm1091, %v1296, %v1300
  %v1303 = vshrl.u32 %v1087, 16
  %v1305 = vrot.slane %v1303, 4
  %v1306 = vshll.u32 %v1087, 16
  %v1308 = vrot.slane %v1306, 5
  %v1309 = vor.u32 %v1305, %v1308
  %v1310 = vrot.slane %v1309, 4
  %v1312 = vshll.u32 %v1088, 16
  %v1314 = vrot.slane %v1312, 5
  %v1315 = vsel %vm1091, %v1310, %v1314
  %1332 = vst [vmem:[#allocation3 + $0x4] sm:$0xf] %v1105
  %1333 = vst [vmem:[#allocation3 + $0x28] sm:$0xf] %v1119
  %1334 = vst [vmem:[#allocation3 + $0x4c] sm:$0xf] %v1133
  %1335 = vst [vmem:[#allocation3 + $0x70] sm:$0xf] %v1147
  %1336 = vst [vmem:[#allocation3 + $0x94] sm:$0xf] %v1161
  %1337 = vst [vmem:[#allocation3 + $0xb8] sm:$0xf] %v1175
  %1338 = vst [vmem:[#allocation3 + $0xdc] sm:$0xf] %v1189
  %1339 = vst [vmem:[#allocation3 + $0x100] sm:$0xf] %v1203
  %1340 = vst [vmem:[#allocation3 + $0x124] sm:$0xf] %v1217
  %1341 = vst [vmem:[#allocation3 + $0x148] sm:$0xf] %v1231
  %1342 = vst [vmem:[#allocation3 + $0x16c] sm:$0xf] %v1245
  %1343 = vst [vmem:[#allocation3 + $0x190] sm:$0xf] %v1259
  %1344 = vst [vmem:[#allocation3 + $0x1b4] sm:$0xf] %v1273
  %1345 = vst [vmem:[#allocation3 + $0x1d8] sm:$0xf] %v1287
  %1346 = vst [vmem:[#allocation3 + $0x1fc] sm:$0xf] %v1301
  %1347 = vst [vmem:[#allocation3 + $0x220] sm:$0xf] %v1315
  %v1348 = vld [vmem:[#allocation2] sm:$0xe]
  %v1349 = vld [vmem:[#allocation2 + $0x4] sm:$0x1]
  %v1350 = vld [vmem:[#allocation2 + $0x8] sm:$0xe]
  %v1351 = vld [vmem:[#allocation2 + $0xc] sm:$0x1]
  %v1352 = vld [vmem:[#allocation2 + $0x10] sm:$0xe]
  %v1353 = vld [vmem:[#allocation2 + $0x14] sm:$0x1]
  %v1354 = vld [vmem:[#allocation2 + $0x18] sm:$0xe]
  %v1355 = vld [vmem:[#allocation2 + $0x1c] sm:$0x1]
  %v1356 = vld [vmem:[#allocation2 + $0x20] sm:$0xe]
  %v1357 = vld [vmem:[#allocation2 + $0x24] sm:$0x1]
  %v1358 = vld [vmem:[#allocation2 + $0x28] sm:$0xe]
  %v1359 = vld [vmem:[#allocation2 + $0x2c] sm:$0x1]
  %v1360 = vld [vmem:[#allocation2 + $0x30] sm:$0xe]
  %v1361 = vld [vmem:[#allocation2 + $0x34] sm:$0x1]
  %v1362 = vld [vmem:[#allocation2 + $0x38] sm:$0xe]
  %v1363 = vld [vmem:[#allocation2 + $0x3c] sm:$0x1]
  %v1364 = vld [vmem:[#allocation2 + $0x50] sm:$0xe]
  %v1365 = vld [vmem:[#allocation2 + $0x54] sm:$0x1]
  %v1366 = vld [vmem:[#allocation2 + $0x58] sm:$0xe]
  %v1367 = vld [vmem:[#allocation2 + $0x5c] sm:$0x1]
  %v1368 = vld [vmem:[#allocation2 + $0x60] sm:$0xe]
  %v1369 = vld [vmem:[#allocation2 + $0x64] sm:$0x1]
  %v1370 = vld [vmem:[#allocation2 + $0x68] sm:$0xe]
  %v1371 = vld [vmem:[#allocation2 + $0x6c] sm:$0x1]
  %v1372 = vld [vmem:[#allocation2 + $0x70] sm:$0xe]
  %v1373 = vld [vmem:[#allocation2 + $0x74] sm:$0x1]
  %v1374 = vld [vmem:[#allocation2 + $0x78] sm:$0xe]
  %v1375 = vld [vmem:[#allocation2 + $0x7c] sm:$0x1]
  %v1376 = vld [vmem:[#allocation2 + $0x80] sm:$0xe]
  %v1377 = vld [vmem:[#allocation2 + $0x84] sm:$0x1]
  %v1378 = vld [vmem:[#allocation2 + $0x88] sm:$0xe]
  %v1379 = vld [vmem:[#allocation2 + $0x8c] sm:$0x1]
  %vm1412 = vcmask 1042432
  %vm1413 = vcmask 1046532
  %vm1414 = vmor %vm1412, %vm1413
  %v1415 = vrot.slane %v1348, 5
  %v1416 = vrot.slane %v1415, 4
  %v1417 = vrot.slane %v1349, 5
  %v1418 = vsel %vm1414, %v1416, %v1417
  %v1419 = vrot.slane %v1350, 5
  %v1420 = vrot.slane %v1419, 4
  %v1421 = vrot.slane %v1351, 5
  %v1422 = vsel %vm1414, %v1420, %v1421
  %v1423 = vrot.slane %v1352, 5
  %v1424 = vrot.slane %v1423, 4
  %v1425 = vrot.slane %v1353, 5
  %v1426 = vsel %vm1414, %v1424, %v1425
  %v1427 = vrot.slane %v1354, 5
  %v1428 = vrot.slane %v1427, 4
  %v1429 = vrot.slane %v1355, 5
  %v1430 = vsel %vm1414, %v1428, %v1429
  %v1431 = vrot.slane %v1356, 5
  %v1432 = vrot.slane %v1431, 4
  %v1433 = vrot.slane %v1357, 5
  %v1434 = vsel %vm1414, %v1432, %v1433
  %v1435 = vrot.slane %v1358, 5
  %v1436 = vrot.slane %v1435, 4
  %v1437 = vrot.slane %v1359, 5
  %v1438 = vsel %vm1414, %v1436, %v1437
  %v1439 = vrot.slane %v1360, 5
  %v1440 = vrot.slane %v1439, 4
  %v1441 = vrot.slane %v1361, 5
  %v1442 = vsel %vm1414, %v1440, %v1441
  %v1443 = vrot.slane %v1362, 5
  %v1444 = vrot.slane %v1443, 4
  %v1445 = vrot.slane %v1363, 5
  %v1446 = vsel %vm1414, %v1444, %v1445
  %v1447 = vrot.slane %v1364, 5
  %v1448 = vrot.slane %v1447, 4
  %v1449 = vrot.slane %v1365, 5
  %v1450 = vsel %vm1414, %v1448, %v1449
  %v1451 = vrot.slane %v1366, 5
  %v1452 = vrot.slane %v1451, 4
  %v1453 = vrot.slane %v1367, 5
  %v1454 = vsel %vm1414, %v1452, %v1453
  %v1455 = vrot.slane %v1368, 5
  %v1456 = vrot.slane %v1455, 4
  %v1457 = vrot.slane %v1369, 5
  %v1458 = vsel %vm1414, %v1456, %v1457
  %v1459 = vrot.slane %v1370, 5
  %v1460 = vrot.slane %v1459, 4
  %v1461 = vrot.slane %v1371, 5
  %v1462 = vsel %vm1414, %v1460, %v1461
  %v1463 = vrot.slane %v1372, 5
  %v1464 = vrot.slane %v1463, 4
  %v1465 = vrot.slane %v1373, 5
  %v1466 = vsel %vm1414, %v1464, %v1465
  %v1467 = vrot.slane %v1374, 5
  %v1468 = vrot.slane %v1467, 4
  %v1469 = vrot.slane %v1375, 5
  %v1470 = vsel %vm1414, %v1468, %v1469
  %v1471 = vrot.slane %v1376, 5
  %v1472 = vrot.slane %v1471, 4
  %v1473 = vrot.slane %v1377, 5
  %v1474 = vsel %vm1414, %v1472, %v1473
  %v1475 = vrot.slane %v1378, 5
  %v1476 = vrot.slane %v1475, 4
  %v1477 = vrot.slane %v1379, 5
  %v1478 = vsel %vm1414, %v1476, %v1477
  %1495 = vst [vmem:[#allocation3 + $0x8] sm:$0xf] %v1418
  %1496 = vst [vmem:[#allocation3 + $0x2c] sm:$0xf] %v1422
  %1497 = vst [vmem:[#allocation3 + $0x50] sm:$0xf] %v1426
  %1498 = vst [vmem:[#allocation3 + $0x74] sm:$0xf] %v1430
  %1499 = vst [vmem:[#allocation3 + $0x98] sm:$0xf] %v1434
  %1500 = vst [vmem:[#allocation3 + $0xbc] sm:$0xf] %v1438
  %1501 = vst [vmem:[#allocation3 + $0xe0] sm:$0xf] %v1442
  %1502 = vst [vmem:[#allocation3 + $0x104] sm:$0xf] %v1446
  %1503 = vst [vmem:[#allocation3 + $0x128] sm:$0xf] %v1450
  %1504 = vst [vmem:[#allocation3 + $0x14c] sm:$0xf] %v1454
  %1505 = vst [vmem:[#allocation3 + $0x170] sm:$0xf] %v1458
  %1506 = vst [vmem:[#allocation3 + $0x194] sm:$0xf] %v1462
  %1507 = vst [vmem:[#allocation3 + $0x1b8] sm:$0xf] %v1466
  %1508 = vst [vmem:[#allocation3 + $0x1dc] sm:$0xf] %v1470
  %1509 = vst [vmem:[#allocation3 + $0x200] sm:$0xf] %v1474
  %1510 = vst [vmem:[#allocation3 + $0x224] sm:$0xf] %v1478
  %v1511 = vld [vmem:[%s665] sm:$0xf]
  %v1512 = vld [vmem:[%s665 + $0x8] sm:$0xf]
  %v1513 = vld [vmem:[%s665 + $0x10] sm:$0xf]
  %v1514 = vld [vmem:[%s665 + $0x18] sm:$0xf]
  %v1515 = vld [vmem:[%s665 + $0x20] sm:$0xf]
  %v1516 = vld [vmem:[%s665 + $0x28] sm:$0xf]
  %v1517 = vld [vmem:[%s665 + $0x30] sm:$0xf]
  %v1518 = vld [vmem:[%s665 + $0x38] sm:$0xf]
  %v1519 = vld [vmem:[%s665 + $0x50] sm:$0xf]
  %v1520 = vld [vmem:[%s665 + $0x58] sm:$0xf]
  %v1521 = vld [vmem:[%s665 + $0x60] sm:$0xf]
  %v1522 = vld [vmem:[%s665 + $0x68] sm:$0xf]
  %v1523 = vld [vmem:[%s665 + $0x70] sm:$0xf]
  %v1524 = vld [vmem:[%s665 + $0x78] sm:$0xf]
  %v1525 = vld [vmem:[%s665 + $0x80] sm:$0xf]
  %v1526 = vld [vmem:[%s665 + $0x88] sm:$0xf]
  %1527 = vst [vmem:[#allocation3 + $0xc] sm:$0xf] %v1511
  %1528 = vst [vmem:[#allocation3 + $0x30] sm:$0xf] %v1512
  %1529 = vst [vmem:[#allocation3 + $0x54] sm:$0xf] %v1513
  %1530 = vst [vmem:[#allocation3 + $0x78] sm:$0xf] %v1514
  %1531 = vst [vmem:[#allocation3 + $0x9c] sm:$0xf] %v1515
  %1532 = vst [vmem:[#allocation3 + $0xc0] sm:$0xf] %v1516
  %1533 = vst [vmem:[#allocation3 + $0xe4] sm:$0xf] %v1517
  %1534 = vst [vmem:[#allocation3 + $0x108] sm:$0xf] %v1518
  %1535 = vst [vmem:[#allocation3 + $0x12c] sm:$0xf] %v1519
  %1536 = vst [vmem:[#allocation3 + $0x150] sm:$0xf] %v1520
  %1537 = vst [vmem:[#allocation3 + $0x174] sm:$0xf] %v1521
  %1538 = vst [vmem:[#allocation3 + $0x198] sm:$0xf] %v1522
  %1539 = vst [vmem:[#allocation3 + $0x1bc] sm:$0xf] %v1523
  %1540 = vst [vmem:[#allocation3 + $0x1e0] sm:$0xf] %v1524
  %1541 = vst [vmem:[#allocation3 + $0x204] sm:$0xf] %v1525
  %1542 = vst [vmem:[#allocation3 + $0x228] sm:$0xf] %v1526
  %v1543 = vld [vmem:[%s665] sm:$0xf]
  %v1544 = vld [vmem:[%s665 + $0x4] sm:$0x1]
  %v1545 = vld [vmem:[%s665 + $0x8] sm:$0xf]
  %v1546 = vld [vmem:[%s665 + $0xc] sm:$0x1]
  %v1547 = vld [vmem:[%s665 + $0x10] sm:$0xf]
  %v1548 = vld [vmem:[%s665 + $0x14] sm:$0x1]
  %v1549 = vld [vmem:[%s665 + $0x18] sm:$0xf]
  %v1550 = vld [vmem:[%s665 + $0x1c] sm:$0x1]
  %v1551 = vld [vmem:[%s665 + $0x20] sm:$0xf]
  %v1552 = vld [vmem:[%s665 + $0x24] sm:$0x1]
  %v1553 = vld [vmem:[%s665 + $0x28] sm:$0xf]
  %v1554 = vld [vmem:[%s665 + $0x2c] sm:$0x1]
  %v1555 = vld [vmem:[%s665 + $0x30] sm:$0xf]
  %v1556 = vld [vmem:[%s665 + $0x34] sm:$0x1]
  %v1557 = vld [vmem:[%s665 + $0x38] sm:$0xf]
  %v1558 = vld [vmem:[%s665 + $0x3c] sm:$0x1]
  %v1559 = vld [vmem:[%s665 + $0x50] sm:$0xf]
  %v1560 = vld [vmem:[%s665 + $0x54] sm:$0x1]
  %v1561 = vld [vmem:[%s665 + $0x58] sm:$0xf]
  %v1562 = vld [vmem:[%s665 + $0x5c] sm:$0x1]
  %v1563 = vld [vmem:[%s665 + $0x60] sm:$0xf]
  %v1564 = vld [vmem:[%s665 + $0x64] sm:$0x1]
  %v1565 = vld [vmem:[%s665 + $0x68] sm:$0xf]
  %v1566 = vld [vmem:[%s665 + $0x6c] sm:$0x1]
  %v1567 = vld [vmem:[%s665 + $0x70] sm:$0xf]
  %v1568 = vld [vmem:[%s665 + $0x74] sm:$0x1]
  %v1569 = vld [vmem:[%s665 + $0x78] sm:$0xf]
  %v1570 = vld [vmem:[%s665 + $0x7c] sm:$0x1]
  %v1571 = vld [vmem:[%s665 + $0x80] sm:$0xf]
  %v1572 = vld [vmem:[%s665 + $0x84] sm:$0x1]
  %v1573 = vld [vmem:[%s665 + $0x88] sm:$0xf]
  %v1574 = vld [vmem:[%s665 + $0x8c] sm:$0x1]
  %v1576 = vshrl.u32 %v1543, 16
  %v1578 = vrot.slane %v1576, 4
  %v1579 = vshll.u32 %v1543, 16
  %v1581 = vrot.slane %v1579, 5
  %v1582 = vor.u32 %v1578, %v1581
  %v1583 = vrot.slane %v1582, 4
  %v1585 = vshll.u32 %v1544, 16
  %v1587 = vrot.slane %v1585, 5
  %v1588 = vsel %vm1091, %v1583, %v1587
  %v1590 = vshrl.u32 %v1545, 16
  %v1592 = vrot.slane %v1590, 4
  %v1593 = vshll.u32 %v1545, 16
  %v1595 = vrot.slane %v1593, 5
  %v1596 = vor.u32 %v1592, %v1595
  %v1597 = vrot.slane %v1596, 4
  %v1599 = vshll.u32 %v1546, 16
  %v1601 = vrot.slane %v1599, 5
  %v1602 = vsel %vm1091, %v1597, %v1601
  %v1604 = vshrl.u32 %v1547, 16
  %v1606 = vrot.slane %v1604, 4
  %v1607 = vshll.u32 %v1547, 16
  %v1609 = vrot.slane %v1607, 5
  %v1610 = vor.u32 %v1606, %v1609
  %v1611 = vrot.slane %v1610, 4
  %v1613 = vshll.u32 %v1548, 16
  %v1615 = vrot.slane %v1613, 5
  %v1616 = vsel %vm1091, %v1611, %v1615
  %v1618 = vshrl.u32 %v1549, 16
  %v1620 = vrot.slane %v1618, 4
  %v1621 = vshll.u32 %v1549, 16
  %v1623 = vrot.slane %v1621, 5
  %v1624 = vor.u32 %v1620, %v1623
  %v1625 = vrot.slane %v1624, 4
  %v1627 = vshll.u32 %v1550, 16
  %v1629 = vrot.slane %v1627, 5
  %v1630 = vsel %vm1091, %v1625, %v1629
  %v1632 = vshrl.u32 %v1551, 16
  %v1634 = vrot.slane %v1632, 4
  %v1635 = vshll.u32 %v1551, 16
  %v1637 = vrot.slane %v1635, 5
  %v1638 = vor.u32 %v1634, %v1637
  %v1639 = vrot.slane %v1638, 4
  %v1641 = vshll.u32 %v1552, 16
  %v1643 = vrot.slane %v1641, 5
  %v1644 = vsel %vm1091, %v1639, %v1643
  %v1646 = vshrl.u32 %v1553, 16
  %v1648 = vrot.slane %v1646, 4
  %v1649 = vshll.u32 %v1553, 16
  %v1651 = vrot.slane %v1649, 5
  %v1652 = vor.u32 %v1648, %v1651
  %v1653 = vrot.slane %v1652, 4
  %v1655 = vshll.u32 %v1554, 16
  %v1657 = vrot.slane %v1655, 5
  %v1658 = vsel %vm1091, %v1653, %v1657
  %v1660 = vshrl.u32 %v1555, 16
  %v1662 = vrot.slane %v1660, 4
  %v1663 = vshll.u32 %v1555, 16
  %v1665 = vrot.slane %v1663, 5
  %v1666 = vor.u32 %v1662, %v1665
  %v1667 = vrot.slane %v1666, 4
  %v1669 = vshll.u32 %v1556, 16
  %v1671 = vrot.slane %v1669, 5
  %v1672 = vsel %vm1091, %v1667, %v1671
  %v1674 = vshrl.u32 %v1557, 16
  %v1676 = vrot.slane %v1674, 4
  %v1677 = vshll.u32 %v1557, 16
  %v1679 = vrot.slane %v1677, 5
  %v1680 = vor.u32 %v1676, %v1679
  %v1681 = vrot.slane %v1680, 4
  %v1683 = vshll.u32 %v1558, 16
  %v1685 = vrot.slane %v1683, 5
  %v1686 = vsel %vm1091, %v1681, %v1685
  %v1688 = vshrl.u32 %v1559, 16
  %v1690 = vrot.slane %v1688, 4
  %v1691 = vshll.u32 %v1559, 16
  %v1693 = vrot.slane %v1691, 5
  %v1694 = vor.u32 %v1690, %v1693
  %v1695 = vrot.slane %v1694, 4
  %v1697 = vshll.u32 %v1560, 16
  %v1699 = vrot.slane %v1697, 5
  %v1700 = vsel %vm1091, %v1695, %v1699
  %v1702 = vshrl.u32 %v1561, 16
  %v1704 = vrot.slane %v1702, 4
  %v1705 = vshll.u32 %v1561, 16
  %v1707 = vrot.slane %v1705, 5
  %v1708 = vor.u32 %v1704, %v1707
  %v1709 = vrot.slane %v1708, 4
  %v1711 = vshll.u32 %v1562, 16
  %v1713 = vrot.slane %v1711, 5
  %v1714 = vsel %vm1091, %v1709, %v1713
  %v1716 = vshrl.u32 %v1563, 16
  %v1718 = vrot.slane %v1716, 4
  %v1719 = vshll.u32 %v1563, 16
  %v1721 = vrot.slane %v1719, 5
  %v1722 = vor.u32 %v1718, %v1721
  %v1723 = vrot.slane %v1722, 4
  %v1725 = vshll.u32 %v1564, 16
  %v1727 = vrot.slane %v1725, 5
  %v1728 = vsel %vm1091, %v1723, %v1727
  %v1730 = vshrl.u32 %v1565, 16
  %v1732 = vrot.slane %v1730, 4
  %v1733 = vshll.u32 %v1565, 16
  %v1735 = vrot.slane %v1733, 5
  %v1736 = vor.u32 %v1732, %v1735
  %v1737 = vrot.slane %v1736, 4
  %v1739 = vshll.u32 %v1566, 16
  %v1741 = vrot.slane %v1739, 5
  %v1742 = vsel %vm1091, %v1737, %v1741
  %v1744 = vshrl.u32 %v1567, 16
  %v1746 = vrot.slane %v1744, 4
  %v1747 = vshll.u32 %v1567, 16
  %v1749 = vrot.slane %v1747, 5
  %v1750 = vor.u32 %v1746, %v1749
  %v1751 = vrot.slane %v1750, 4
  %v1753 = vshll.u32 %v1568, 16
  %v1755 = vrot.slane %v1753, 5
  %v1756 = vsel %vm1091, %v1751, %v1755
  %v1758 = vshrl.u32 %v1569, 16
  %v1760 = vrot.slane %v1758, 4
  %v1761 = vshll.u32 %v1569, 16
  %v1763 = vrot.slane %v1761, 5
  %v1764 = vor.u32 %v1760, %v1763
  %v1765 = vrot.slane %v1764, 4
  %v1767 = vshll.u32 %v1570, 16
  %v1769 = vrot.slane %v1767, 5
  %v1770 = vsel %vm1091, %v1765, %v1769
  %v1772 = vshrl.u32 %v1571, 16
  %v1774 = vrot.slane %v1772, 4
  %v1775 = vshll.u32 %v1571, 16
  %v1777 = vrot.slane %v1775, 5
  %v1778 = vor.u32 %v1774, %v1777
  %v1779 = vrot.slane %v1778, 4
  %v1781 = vshll.u32 %v1572, 16
  %v1783 = vrot.slane %v1781, 5
  %v1784 = vsel %vm1091, %v1779, %v1783
  %v1786 = vshrl.u32 %v1573, 16
  %v1788 = vrot.slane %v1786, 4
  %v1789 = vshll.u32 %v1573, 16
  %v1791 = vrot.slane %v1789, 5
  %v1792 = vor.u32 %v1788, %v1791
  %v1793 = vrot.slane %v1792, 4
  %v1795 = vshll.u32 %v1574, 16
  %v1797 = vrot.slane %v1795, 5
  %v1798 = vsel %vm1091, %v1793, %v1797
  %1815 = vst [vmem:[#allocation3 + $0x10] sm:$0xf] %v1588
  %1816 = vst [vmem:[#allocation3 + $0x34] sm:$0xf] %v1602
  %1817 = vst [vmem:[#allocation3 + $0x58] sm:$0xf] %v1616
  %1818 = vst [vmem:[#allocation3 + $0x7c] sm:$0xf] %v1630
  %1819 = vst [vmem:[#allocation3 + $0xa0] sm:$0xf] %v1644
  %1820 = vst [vmem:[#allocation3 + $0xc4] sm:$0xf] %v1658
  %1821 = vst [vmem:[#allocation3 + $0xe8] sm:$0xf] %v1672
  %1822 = vst [vmem:[#allocation3 + $0x10c] sm:$0xf] %v1686
  %1823 = vst [vmem:[#allocation3 + $0x130] sm:$0xf] %v1700
  %1824 = vst [vmem:[#allocation3 + $0x154] sm:$0xf] %v1714
  %1825 = vst [vmem:[#allocation3 + $0x178] sm:$0xf] %v1728
  %1826 = vst [vmem:[#allocation3 + $0x19c] sm:$0xf] %v1742
  %1827 = vst [vmem:[#allocation3 + $0x1c0] sm:$0xf] %v1756
  %1828 = vst [vmem:[#allocation3 + $0x1e4] sm:$0xf] %v1770
  %1829 = vst [vmem:[#allocation3 + $0x208] sm:$0xf] %v1784
  %1830 = vst [vmem:[#allocation3 + $0x22c] sm:$0xf] %v1798
  %v1831 = vld [vmem:[%s665] sm:$0xe]
  %v1832 = vld [vmem:[%s665 + $0x4] sm:$0x1]
  %v1833 = vld [vmem:[%s665 + $0x8] sm:$0xe]
  %v1834 = vld [vmem:[%s665 + $0xc] sm:$0x1]
  %v1835 = vld [vmem:[%s665 + $0x10] sm:$0xe]
  %v1836 = vld [vmem:[%s665 + $0x14] sm:$0x1]
  %v1837 = vld [vmem:[%s665 + $0x18] sm:$0xe]
  %v1838 = vld [vmem:[%s665 + $0x1c] sm:$0x1]
  %v1839 = vld [vmem:[%s665 + $0x20] sm:$0xe]
  %v1840 = vld [vmem:[%s665 + $0x24] sm:$0x1]
  %v1841 = vld [vmem:[%s665 + $0x28] sm:$0xe]
  %v1842 = vld [vmem:[%s665 + $0x2c] sm:$0x1]
  %v1843 = vld [vmem:[%s665 + $0x30] sm:$0xe]
  %v1844 = vld [vmem:[%s665 + $0x34] sm:$0x1]
  %v1845 = vld [vmem:[%s665 + $0x38] sm:$0xe]
  %v1846 = vld [vmem:[%s665 + $0x3c] sm:$0x1]
  %v1847 = vld [vmem:[%s665 + $0x50] sm:$0xe]
  %v1848 = vld [vmem:[%s665 + $0x54] sm:$0x1]
  %v1849 = vld [vmem:[%s665 + $0x58] sm:$0xe]
  %v1850 = vld [vmem:[%s665 + $0x5c] sm:$0x1]
  %v1851 = vld [vmem:[%s665 + $0x60] sm:$0xe]
  %v1852 = vld [vmem:[%s665 + $0x64] sm:$0x1]
  %v1853 = vld [vmem:[%s665 + $0x68] sm:$0xe]
  %v1854 = vld [vmem:[%s665 + $0x6c] sm:$0x1]
  %v1855 = vld [vmem:[%s665 + $0x70] sm:$0xe]
  %v1856 = vld [vmem:[%s665 + $0x74] sm:$0x1]
  %v1857 = vld [vmem:[%s665 + $0x78] sm:$0xe]
  %v1858 = vld [vmem:[%s665 + $0x7c] sm:$0x1]
  %v1859 = vld [vmem:[%s665 + $0x80] sm:$0xe]
  %v1860 = vld [vmem:[%s665 + $0x84] sm:$0x1]
  %v1861 = vld [vmem:[%s665 + $0x88] sm:$0xe]
  %v1862 = vld [vmem:[%s665 + $0x8c] sm:$0x1]
  %v1895 = vrot.slane %v1831, 5
  %v1896 = vrot.slane %v1895, 4
  %v1897 = vrot.slane %v1832, 5
  %v1898 = vsel %vm1414, %v1896, %v1897
  %v1899 = vrot.slane %v1833, 5
  %v1900 = vrot.slane %v1899, 4
  %v1901 = vrot.slane %v1834, 5
  %v1902 = vsel %vm1414, %v1900, %v1901
  %v1903 = vrot.slane %v1835, 5
  %v1904 = vrot.slane %v1903, 4
  %v1905 = vrot.slane %v1836, 5
  %v1906 = vsel %vm1414, %v1904, %v1905
  %v1907 = vrot.slane %v1837, 5
  %v1908 = vrot.slane %v1907, 4
  %v1909 = vrot.slane %v1838, 5
  %v1910 = vsel %vm1414, %v1908, %v1909
  %v1911 = vrot.slane %v1839, 5
  %v1912 = vrot.slane %v1911, 4
  %v1913 = vrot.slane %v1840, 5
  %v1914 = vsel %vm1414, %v1912, %v1913
  %v1915 = vrot.slane %v1841, 5
  %v1916 = vrot.slane %v1915, 4
  %v1917 = vrot.slane %v1842, 5
  %v1918 = vsel %vm1414, %v1916, %v1917
  %v1919 = vrot.slane %v1843, 5
  %v1920 = vrot.slane %v1919, 4
  %v1921 = vrot.slane %v1844, 5
  %v1922 = vsel %vm1414, %v1920, %v1921
  %v1923 = vrot.slane %v1845, 5
  %v1924 = vrot.slane %v1923, 4
  %v1925 = vrot.slane %v1846, 5
  %v1926 = vsel %vm1414, %v1924, %v1925
  %v1927 = vrot.slane %v1847, 5
  %v1928 = vrot.slane %v1927, 4
  %v1929 = vrot.slane %v1848, 5
  %v1930 = vsel %vm1414, %v1928, %v1929
  %v1931 = vrot.slane %v1849, 5
  %v1932 = vrot.slane %v1931, 4
  %v1933 = vrot.slane %v1850, 5
  %v1934 = vsel %vm1414, %v1932, %v1933
  %v1935 = vrot.slane %v1851, 5
  %v1936 = vrot.slane %v1935, 4
  %v1937 = vrot.slane %v1852, 5
  %v1938 = vsel %vm1414, %v1936, %v1937
  %v1939 = vrot.slane %v1853, 5
  %v1940 = vrot.slane %v1939, 4
  %v1941 = vrot.slane %v1854, 5
  %v1942 = vsel %vm1414, %v1940, %v1941
  %v1943 = vrot.slane %v1855, 5
  %v1944 = vrot.slane %v1943, 4
  %v1945 = vrot.slane %v1856, 5
  %v1946 = vsel %vm1414, %v1944, %v1945
  %v1947 = vrot.slane %v1857, 5
  %v1948 = vrot.slane %v1947, 4
  %v1949 = vrot.slane %v1858, 5
  %v1950 = vsel %vm1414, %v1948, %v1949
  %v1951 = vrot.slane %v1859, 5
  %v1952 = vrot.slane %v1951, 4
  %v1953 = vrot.slane %v1860, 5
  %v1954 = vsel %vm1414, %v1952, %v1953
  %v1955 = vrot.slane %v1861, 5
  %v1956 = vrot.slane %v1955, 4
  %v1957 = vrot.slane %v1862, 5
  %v1958 = vsel %vm1414, %v1956, %v1957
  %1975 = vst [vmem:[#allocation3 + $0x14] sm:$0xf] %v1898
  %1976 = vst [vmem:[#allocation3 + $0x38] sm:$0xf] %v1902
  %1977 = vst [vmem:[#allocation3 + $0x5c] sm:$0xf] %v1906
  %1978 = vst [vmem:[#allocation3 + $0x80] sm:$0xf] %v1910
  %1979 = vst [vmem:[#allocation3 + $0xa4] sm:$0xf] %v1914
  %1980 = vst [vmem:[#allocation3 + $0xc8] sm:$0xf] %v1918
  %1981 = vst [vmem:[#allocation3 + $0xec] sm:$0xf] %v1922
  %1982 = vst [vmem:[#allocation3 + $0x110] sm:$0xf] %v1926
  %1983 = vst [vmem:[#allocation3 + $0x134] sm:$0xf] %v1930
  %1984 = vst [vmem:[#allocation3 + $0x158] sm:$0xf] %v1934
  %1985 = vst [vmem:[#allocation3 + $0x17c] sm:$0xf] %v1938
  %1986 = vst [vmem:[#allocation3 + $0x1a0] sm:$0xf] %v1942
  %1987 = vst [vmem:[#allocation3 + $0x1c4] sm:$0xf] %v1946
  %1988 = vst [vmem:[#allocation3 + $0x1e8] sm:$0xf] %v1950
  %1989 = vst [vmem:[#allocation3 + $0x20c] sm:$0xf] %v1954
  %1990 = vst [vmem:[#allocation3 + $0x230] sm:$0xf] %v1958
  %s1991 = scalar_lea.vmem [#allocation2], 16
  %v1992 = vld [vmem:[%s1991] sm:$0xf]
  %v1993 = vld [vmem:[%s1991 + $0x8] sm:$0xf]
  %v1994 = vld [vmem:[%s1991 + $0x10] sm:$0xf]
  %v1995 = vld [vmem:[%s1991 + $0x18] sm:$0xf]
  %v1996 = vld [vmem:[%s1991 + $0x20] sm:$0xf]
  %v1997 = vld [vmem:[%s1991 + $0x28] sm:$0xf]
  %v1998 = vld [vmem:[%s1991 + $0x30] sm:$0xf]
  %v1999 = vld [vmem:[%s1991 + $0x38] sm:$0xf]
  %v2000 = vld [vmem:[%s1991 + $0x50] sm:$0xf]
  %v2001 = vld [vmem:[%s1991 + $0x58] sm:$0xf]
  %v2002 = vld [vmem:[%s1991 + $0x60] sm:$0xf]
  %v2003 = vld [vmem:[%s1991 + $0x68] sm:$0xf]
  %v2004 = vld [vmem:[%s1991 + $0x70] sm:$0xf]
  %v2005 = vld [vmem:[%s1991 + $0x78] sm:$0xf]
  %v2006 = vld [vmem:[%s1991 + $0x80] sm:$0xf]
  %v2007 = vld [vmem:[%s1991 + $0x88] sm:$0xf]
  %2008 = vst [vmem:[#allocation3 + $0x18] sm:$0xf] %v1992
  %2009 = vst [vmem:[#allocation3 + $0x3c] sm:$0xf] %v1993
  %2010 = vst [vmem:[#allocation3 + $0x60] sm:$0xf] %v1994
  %2011 = vst [vmem:[#allocation3 + $0x84] sm:$0xf] %v1995
  %2012 = vst [vmem:[#allocation3 + $0xa8] sm:$0xf] %v1996
  %2013 = vst [vmem:[#allocation3 + $0xcc] sm:$0xf] %v1997
  %2014 = vst [vmem:[#allocation3 + $0xf0] sm:$0xf] %v1998
  %2015 = vst [vmem:[#allocation3 + $0x114] sm:$0xf] %v1999
  %2016 = vst [vmem:[#allocation3 + $0x138] sm:$0xf] %v2000
  %2017 = vst [vmem:[#allocation3 + $0x15c] sm:$0xf] %v2001
  %2018 = vst [vmem:[#allocation3 + $0x180] sm:$0xf] %v2002
  %2019 = vst [vmem:[#allocation3 + $0x1a4] sm:$0xf] %v2003
  %2020 = vst [vmem:[#allocation3 + $0x1c8] sm:$0xf] %v2004
  %2021 = vst [vmem:[#allocation3 + $0x1ec] sm:$0xf] %v2005
  %2022 = vst [vmem:[#allocation3 + $0x210] sm:$0xf] %v2006
  %2023 = vst [vmem:[#allocation3 + $0x234] sm:$0xf] %v2007
  %v2024 = vld [vmem:[%s1991] sm:$0xf]
  %v2025 = vld [vmem:[%s1991 + $0x4] sm:$0x1]
  %v2026 = vld [vmem:[%s1991 + $0x8] sm:$0xf]
  %v2027 = vld [vmem:[%s1991 + $0xc] sm:$0x1]
  %v2028 = vld [vmem:[%s1991 + $0x10] sm:$0xf]
  %v2029 = vld [vmem:[%s1991 + $0x14] sm:$0x1]
  %v2030 = vld [vmem:[%s1991 + $0x18] sm:$0xf]
  %v2031 = vld [vmem:[%s1991 + $0x1c] sm:$0x1]
  %v2032 = vld [vmem:[%s1991 + $0x20] sm:$0xf]
  %v2033 = vld [vmem:[%s1991 + $0x24] sm:$0x1]
  %v2034 = vld [vmem:[%s1991 + $0x28] sm:$0xf]
  %v2035 = vld [vmem:[%s1991 + $0x2c] sm:$0x1]
  %v2036 = vld [vmem:[%s1991 + $0x30] sm:$0xf]
  %v2037 = vld [vmem:[%s1991 + $0x34] sm:$0x1]
  %v2038 = vld [vmem:[%s1991 + $0x38] sm:$0xf]
  %v2039 = vld [vmem:[%s1991 + $0x3c] sm:$0x1]
  %v2040 = vld [vmem:[%s1991 + $0x50] sm:$0xf]
  %v2041 = vld [vmem:[%s1991 + $0x54] sm:$0x1]
  %v2042 = vld [vmem:[%s1991 + $0x58] sm:$0xf]
  %v2043 = vld [vmem:[%s1991 + $0x5c] sm:$0x1]
  %v2044 = vld [vmem:[%s1991 + $0x60] sm:$0xf]
  %v2045 = vld [vmem:[%s1991 + $0x64] sm:$0x1]
  %v2046 = vld [vmem:[%s1991 + $0x68] sm:$0xf]
  %v2047 = vld [vmem:[%s1991 + $0x6c] sm:$0x1]
  %v2048 = vld [vmem:[%s1991 + $0x70] sm:$0xf]
  %v2049 = vld [vmem:[%s1991 + $0x74] sm:$0x1]
  %v2050 = vld [vmem:[%s1991 + $0x78] sm:$0xf]
  %v2051 = vld [vmem:[%s1991 + $0x7c] sm:$0x1]
  %v2052 = vld [vmem:[%s1991 + $0x80] sm:$0xf]
  %v2053 = vld [vmem:[%s1991 + $0x84] sm:$0x1]
  %v2054 = vld [vmem:[%s1991 + $0x88] sm:$0xf]
  %v2055 = vld [vmem:[%s1991 + $0x8c] sm:$0x1]
  %v2057 = vshrl.u32 %v2024, 16
  %v2059 = vrot.slane %v2057, 4
  %v2060 = vshll.u32 %v2024, 16
  %v2062 = vrot.slane %v2060, 5
  %v2063 = vor.u32 %v2059, %v2062
  %v2064 = vrot.slane %v2063, 4
  %v2066 = vshll.u32 %v2025, 16
  %v2068 = vrot.slane %v2066, 5
  %v2069 = vsel %vm1091, %v2064, %v2068
  %v2071 = vshrl.u32 %v2026, 16
  %v2073 = vrot.slane %v2071, 4
  %v2074 = vshll.u32 %v2026, 16
  %v2076 = vrot.slane %v2074, 5
  %v2077 = vor.u32 %v2073, %v2076
  %v2078 = vrot.slane %v2077, 4
  %v2080 = vshll.u32 %v2027, 16
  %v2082 = vrot.slane %v2080, 5
  %v2083 = vsel %vm1091, %v2078, %v2082
  %v2085 = vshrl.u32 %v2028, 16
  %v2087 = vrot.slane %v2085, 4
  %v2088 = vshll.u32 %v2028, 16
  %v2090 = vrot.slane %v2088, 5
  %v2091 = vor.u32 %v2087, %v2090
  %v2092 = vrot.slane %v2091, 4
  %v2094 = vshll.u32 %v2029, 16
  %v2096 = vrot.slane %v2094, 5
  %v2097 = vsel %vm1091, %v2092, %v2096
  %v2099 = vshrl.u32 %v2030, 16
  %v2101 = vrot.slane %v2099, 4
  %v2102 = vshll.u32 %v2030, 16
  %v2104 = vrot.slane %v2102, 5
  %v2105 = vor.u32 %v2101, %v2104
  %v2106 = vrot.slane %v2105, 4
  %v2108 = vshll.u32 %v2031, 16
  %v2110 = vrot.slane %v2108, 5
  %v2111 = vsel %vm1091, %v2106, %v2110
  %v2113 = vshrl.u32 %v2032, 16
  %v2115 = vrot.slane %v2113, 4
  %v2116 = vshll.u32 %v2032, 16
  %v2118 = vrot.slane %v2116, 5
  %v2119 = vor.u32 %v2115, %v2118
  %v2120 = vrot.slane %v2119, 4
  %v2122 = vshll.u32 %v2033, 16
  %v2124 = vrot.slane %v2122, 5
  %v2125 = vsel %vm1091, %v2120, %v2124
  %v2127 = vshrl.u32 %v2034, 16
  %v2129 = vrot.slane %v2127, 4
  %v2130 = vshll.u32 %v2034, 16
  %v2132 = vrot.slane %v2130, 5
  %v2133 = vor.u32 %v2129, %v2132
  %v2134 = vrot.slane %v2133, 4
  %v2136 = vshll.u32 %v2035, 16
  %v2138 = vrot.slane %v2136, 5
  %v2139 = vsel %vm1091, %v2134, %v2138
  %v2141 = vshrl.u32 %v2036, 16
  %v2143 = vrot.slane %v2141, 4
  %v2144 = vshll.u32 %v2036, 16
  %v2146 = vrot.slane %v2144, 5
  %v2147 = vor.u32 %v2143, %v2146
  %v2148 = vrot.slane %v2147, 4
  %v2150 = vshll.u32 %v2037, 16
  %v2152 = vrot.slane %v2150, 5
  %v2153 = vsel %vm1091, %v2148, %v2152
  %v2155 = vshrl.u32 %v2038, 16
  %v2157 = vrot.slane %v2155, 4
  %v2158 = vshll.u32 %v2038, 16
  %v2160 = vrot.slane %v2158, 5
  %v2161 = vor.u32 %v2157, %v2160
  %v2162 = vrot.slane %v2161, 4
  %v2164 = vshll.u32 %v2039, 16
  %v2166 = vrot.slane %v2164, 5
  %v2167 = vsel %vm1091, %v2162, %v2166
  %v2169 = vshrl.u32 %v2040, 16
  %v2171 = vrot.slane %v2169, 4
  %v2172 = vshll.u32 %v2040, 16
  %v2174 = vrot.slane %v2172, 5
  %v2175 = vor.u32 %v2171, %v2174
  %v2176 = vrot.slane %v2175, 4
  %v2178 = vshll.u32 %v2041, 16
  %v2180 = vrot.slane %v2178, 5
  %v2181 = vsel %vm1091, %v2176, %v2180
  %v2183 = vshrl.u32 %v2042, 16
  %v2185 = vrot.slane %v2183, 4
  %v2186 = vshll.u32 %v2042, 16
  %v2188 = vrot.slane %v2186, 5
  %v2189 = vor.u32 %v2185, %v2188
  %v2190 = vrot.slane %v2189, 4
  %v2192 = vshll.u32 %v2043, 16
  %v2194 = vrot.slane %v2192, 5
  %v2195 = vsel %vm1091, %v2190, %v2194
  %v2197 = vshrl.u32 %v2044, 16
  %v2199 = vrot.slane %v2197, 4
  %v2200 = vshll.u32 %v2044, 16
  %v2202 = vrot.slane %v2200, 5
  %v2203 = vor.u32 %v2199, %v2202
  %v2204 = vrot.slane %v2203, 4
  %v2206 = vshll.u32 %v2045, 16
  %v2208 = vrot.slane %v2206, 5
  %v2209 = vsel %vm1091, %v2204, %v2208
  %v2211 = vshrl.u32 %v2046, 16
  %v2213 = vrot.slane %v2211, 4
  %v2214 = vshll.u32 %v2046, 16
  %v2216 = vrot.slane %v2214, 5
  %v2217 = vor.u32 %v2213, %v2216
  %v2218 = vrot.slane %v2217, 4
  %v2220 = vshll.u32 %v2047, 16
  %v2222 = vrot.slane %v2220, 5
  %v2223 = vsel %vm1091, %v2218, %v2222
  %v2225 = vshrl.u32 %v2048, 16
  %v2227 = vrot.slane %v2225, 4
  %v2228 = vshll.u32 %v2048, 16
  %v2230 = vrot.slane %v2228, 5
  %v2231 = vor.u32 %v2227, %v2230
  %v2232 = vrot.slane %v2231, 4
  %v2234 = vshll.u32 %v2049, 16
  %v2236 = vrot.slane %v2234, 5
  %v2237 = vsel %vm1091, %v2232, %v2236
  %v2239 = vshrl.u32 %v2050, 16
  %v2241 = vrot.slane %v2239, 4
  %v2242 = vshll.u32 %v2050, 16
  %v2244 = vrot.slane %v2242, 5
  %v2245 = vor.u32 %v2241, %v2244
  %v2246 = vrot.slane %v2245, 4
  %v2248 = vshll.u32 %v2051, 16
  %v2250 = vrot.slane %v2248, 5
  %v2251 = vsel %vm1091, %v2246, %v2250
  %v2253 = vshrl.u32 %v2052, 16
  %v2255 = vrot.slane %v2253, 4
  %v2256 = vshll.u32 %v2052, 16
  %v2258 = vrot.slane %v2256, 5
  %v2259 = vor.u32 %v2255, %v2258
  %v2260 = vrot.slane %v2259, 4
  %v2262 = vshll.u32 %v2053, 16
  %v2264 = vrot.slane %v2262, 5
  %v2265 = vsel %vm1091, %v2260, %v2264
  %v2267 = vshrl.u32 %v2054, 16
  %v2269 = vrot.slane %v2267, 4
  %v2270 = vshll.u32 %v2054, 16
  %v2272 = vrot.slane %v2270, 5
  %v2273 = vor.u32 %v2269, %v2272
  %v2274 = vrot.slane %v2273, 4
  %v2276 = vshll.u32 %v2055, 16
  %v2278 = vrot.slane %v2276, 5
  %v2279 = vsel %vm1091, %v2274, %v2278
  %2296 = vst [vmem:[#allocation3 + $0x1c] sm:$0xf] %v2069
  %2297 = vst [vmem:[#allocation3 + $0x40] sm:$0xf] %v2083
  %2298 = vst [vmem:[#allocation3 + $0x64] sm:$0xf] %v2097
  %2299 = vst [vmem:[#allocation3 + $0x88] sm:$0xf] %v2111
  %2300 = vst [vmem:[#allocation3 + $0xac] sm:$0xf] %v2125
  %2301 = vst [vmem:[#allocation3 + $0xd0] sm:$0xf] %v2139
  %2302 = vst [vmem:[#allocation3 + $0xf4] sm:$0xf] %v2153
  %2303 = vst [vmem:[#allocation3 + $0x118] sm:$0xf] %v2167
  %2304 = vst [vmem:[#allocation3 + $0x13c] sm:$0xf] %v2181
  %2305 = vst [vmem:[#allocation3 + $0x160] sm:$0xf] %v2195
  %2306 = vst [vmem:[#allocation3 + $0x184] sm:$0xf] %v2209
  %2307 = vst [vmem:[#allocation3 + $0x1a8] sm:$0xf] %v2223
  %2308 = vst [vmem:[#allocation3 + $0x1cc] sm:$0xf] %v2237
  %2309 = vst [vmem:[#allocation3 + $0x1f0] sm:$0xf] %v2251
  %2310 = vst [vmem:[#allocation3 + $0x214] sm:$0xf] %v2265
  %2311 = vst [vmem:[#allocation3 + $0x238] sm:$0xf] %v2279
  %v2312 = vld [vmem:[%s1991] sm:$0xe]
  %v2313 = vld [vmem:[%s1991 + $0x4] sm:$0x1]
  %v2314 = vld [vmem:[%s1991 + $0x8] sm:$0xe]
  %v2315 = vld [vmem:[%s1991 + $0xc] sm:$0x1]
  %v2316 = vld [vmem:[%s1991 + $0x10] sm:$0xe]
  %v2317 = vld [vmem:[%s1991 + $0x14] sm:$0x1]
  %v2318 = vld [vmem:[%s1991 + $0x18] sm:$0xe]
  %v2319 = vld [vmem:[%s1991 + $0x1c] sm:$0x1]
  %v2320 = vld [vmem:[%s1991 + $0x20] sm:$0xe]
  %v2321 = vld [vmem:[%s1991 + $0x24] sm:$0x1]
  %v2322 = vld [vmem:[%s1991 + $0x28] sm:$0xe]
  %v2323 = vld [vmem:[%s1991 + $0x2c] sm:$0x1]
  %v2324 = vld [vmem:[%s1991 + $0x30] sm:$0xe]
  %v2325 = vld [vmem:[%s1991 + $0x34] sm:$0x1]
  %v2326 = vld [vmem:[%s1991 + $0x38] sm:$0xe]
  %v2327 = vld [vmem:[%s1991 + $0x3c] sm:$0x1]
  %v2328 = vld [vmem:[%s1991 + $0x50] sm:$0xe]
  %v2329 = vld [vmem:[%s1991 + $0x54] sm:$0x1]
  %v2330 = vld [vmem:[%s1991 + $0x58] sm:$0xe]
  %v2331 = vld [vmem:[%s1991 + $0x5c] sm:$0x1]
  %v2332 = vld [vmem:[%s1991 + $0x60] sm:$0xe]
  %v2333 = vld [vmem:[%s1991 + $0x64] sm:$0x1]
  %v2334 = vld [vmem:[%s1991 + $0x68] sm:$0xe]
  %v2335 = vld [vmem:[%s1991 + $0x6c] sm:$0x1]
  %v2336 = vld [vmem:[%s1991 + $0x70] sm:$0xe]
  %v2337 = vld [vmem:[%s1991 + $0x74] sm:$0x1]
  %v2338 = vld [vmem:[%s1991 + $0x78] sm:$0xe]
  %v2339 = vld [vmem:[%s1991 + $0x7c] sm:$0x1]
  %v2340 = vld [vmem:[%s1991 + $0x80] sm:$0xe]
  %v2341 = vld [vmem:[%s1991 + $0x84] sm:$0x1]
  %v2342 = vld [vmem:[%s1991 + $0x88] sm:$0xe]
  %v2343 = vld [vmem:[%s1991 + $0x8c] sm:$0x1]
  %v2376 = vrot.slane %v2312, 5
  %v2377 = vrot.slane %v2376, 4
  %v2378 = vrot.slane %v2313, 5
  %v2379 = vsel %vm1414, %v2377, %v2378
  %v2380 = vrot.slane %v2314, 5
  %v2381 = vrot.slane %v2380, 4
  %v2382 = vrot.slane %v2315, 5
  %v2383 = vsel %vm1414, %v2381, %v2382
  %v2384 = vrot.slane %v2316, 5
  %v2385 = vrot.slane %v2384, 4
  %v2386 = vrot.slane %v2317, 5
  %v2387 = vsel %vm1414, %v2385, %v2386
  %v2388 = vrot.slane %v2318, 5
  %v2389 = vrot.slane %v2388, 4
  %v2390 = vrot.slane %v2319, 5
  %v2391 = vsel %vm1414, %v2389, %v2390
  %v2392 = vrot.slane %v2320, 5
  %v2393 = vrot.slane %v2392, 4
  %v2394 = vrot.slane %v2321, 5
  %v2395 = vsel %vm1414, %v2393, %v2394
  %v2396 = vrot.slane %v2322, 5
  %v2397 = vrot.slane %v2396, 4
  %v2398 = vrot.slane %v2323, 5
  %v2399 = vsel %vm1414, %v2397, %v2398
  %v2400 = vrot.slane %v2324, 5
  %v2401 = vrot.slane %v2400, 4
  %v2402 = vrot.slane %v2325, 5
  %v2403 = vsel %vm1414, %v2401, %v2402
  %v2404 = vrot.slane %v2326, 5
  %v2405 = vrot.slane %v2404, 4
  %v2406 = vrot.slane %v2327, 5
  %v2407 = vsel %vm1414, %v2405, %v2406
  %v2408 = vrot.slane %v2328, 5
  %v2409 = vrot.slane %v2408, 4
  %v2410 = vrot.slane %v2329, 5
  %v2411 = vsel %vm1414, %v2409, %v2410
  %v2412 = vrot.slane %v2330, 5
  %v2413 = vrot.slane %v2412, 4
  %v2414 = vrot.slane %v2331, 5
  %v2415 = vsel %vm1414, %v2413, %v2414
  %v2416 = vrot.slane %v2332, 5
  %v2417 = vrot.slane %v2416, 4
  %v2418 = vrot.slane %v2333, 5
  %v2419 = vsel %vm1414, %v2417, %v2418
  %v2420 = vrot.slane %v2334, 5
  %v2421 = vrot.slane %v2420, 4
  %v2422 = vrot.slane %v2335, 5
  %v2423 = vsel %vm1414, %v2421, %v2422
  %v2424 = vrot.slane %v2336, 5
  %v2425 = vrot.slane %v2424, 4
  %v2426 = vrot.slane %v2337, 5
  %v2427 = vsel %vm1414, %v2425, %v2426
  %v2428 = vrot.slane %v2338, 5
  %v2429 = vrot.slane %v2428, 4
  %v2430 = vrot.slane %v2339, 5
  %v2431 = vsel %vm1414, %v2429, %v2430
  %v2432 = vrot.slane %v2340, 5
  %v2433 = vrot.slane %v2432, 4
  %v2434 = vrot.slane %v2341, 5
  %v2435 = vsel %vm1414, %v2433, %v2434
  %v2436 = vrot.slane %v2342, 5
  %v2437 = vrot.slane %v2436, 4
  %v2438 = vrot.slane %v2343, 5
  %v2439 = vsel %vm1414, %v2437, %v2438
  %2456 = vst [vmem:[#allocation3 + $0x20] sm:$0xf] %v2379
  %2457 = vst [vmem:[#allocation3 + $0x44] sm:$0xf] %v2383
  %2458 = vst [vmem:[#allocation3 + $0x68] sm:$0xf] %v2387
  %2459 = vst [vmem:[#allocation3 + $0x8c] sm:$0xf] %v2391
  %2460 = vst [vmem:[#allocation3 + $0xb0] sm:$0xf] %v2395
  %2461 = vst [vmem:[#allocation3 + $0xd4] sm:$0xf] %v2399
  %2462 = vst [vmem:[#allocation3 + $0xf8] sm:$0xf] %v2403
  %2463 = vst [vmem:[#allocation3 + $0x11c] sm:$0xf] %v2407
  %2464 = vst [vmem:[#allocation3 + $0x140] sm:$0xf] %v2411
  %2465 = vst [vmem:[#allocation3 + $0x164] sm:$0xf] %v2415
  %2466 = vst [vmem:[#allocation3 + $0x188] sm:$0xf] %v2419
  %2467 = vst [vmem:[#allocation3 + $0x1ac] sm:$0xf] %v2423
  %2468 = vst [vmem:[#allocation3 + $0x1d0] sm:$0xf] %v2427
  %2469 = vst [vmem:[#allocation3 + $0x1f4] sm:$0xf] %v2431
  %2470 = vst [vmem:[#allocation3 + $0x218] sm:$0xf] %v2435
  %2471 = vst [vmem:[#allocation3 + $0x23c] sm:$0xf] %v2439
  %v2472 = vld [vmem:[#allocation3] sm:$0xff]
  %v2473 = vld [vmem:[#allocation3 + $0x8] sm:$0xff]
  %v2474 = vld [vmem:[#allocation3 + $0x10] sm:$0xff]
  %v2475 = vld [vmem:[#allocation3 + $0x18] sm:$0xff]
  %v2476 = vld [vmem:[#allocation3 + $0x20] sm:$0xf]
  %v2477 = vld [vmem:[#allocation3 + $0x24] sm:$0xff]
  %v2478 = vld [vmem:[#allocation3 + $0x2c] sm:$0xff]
  %v2479 = vld [vmem:[#allocation3 + $0x34] sm:$0xff]
  %v2480 = vld [vmem:[#allocation3 + $0x3c] sm:$0xff]
  %v2481 = vld [vmem:[#allocation3 + $0x44] sm:$0xf]
  %v2482 = vld [vmem:[#allocation3 + $0x48] sm:$0xff]
  %v2483 = vld [vmem:[#allocation3 + $0x50] sm:$0xff]
  %v2484 = vld [vmem:[#allocation3 + $0x58] sm:$0xff]
  %v2485 = vld [vmem:[#allocation3 + $0x60] sm:$0xff]
  %v2486 = vld [vmem:[#allocation3 + $0x68] sm:$0xf]
  %v2487 = vld [vmem:[#allocation3 + $0x6c] sm:$0xff]
  %v2488 = vld [vmem:[#allocation3 + $0x74] sm:$0xff]
  %v2489 = vld [vmem:[#allocation3 + $0x7c] sm:$0xff]
  %v2490 = vld [vmem:[#allocation3 + $0x84] sm:$0xff]
  %v2491 = vld [vmem:[#allocation3 + $0x8c] sm:$0xf]
  %v2492 = vld [vmem:[#allocation3 + $0x90] sm:$0xff]
  %v2493 = vld [vmem:[#allocation3 + $0x98] sm:$0xff]
  %v2494 = vld [vmem:[#allocation3 + $0xa0] sm:$0xff]
  %v2495 = vld [vmem:[#allocation3 + $0xa8] sm:$0xff]
  %v2496 = vld [vmem:[#allocation3 + $0xb0] sm:$0xf]
  %v2497 = vld [vmem:[#allocation3 + $0xb4] sm:$0xff]
  %v2498 = vld [vmem:[#allocation3 + $0xbc] sm:$0xff]
  %v2499 = vld [vmem:[#allocation3 + $0xc4] sm:$0xff]
  %v2500 = vld [vmem:[#allocation3 + $0xcc] sm:$0xff]
  %v2501 = vld [vmem:[#allocation3 + $0xd4] sm:$0xf]
  %v2502 = vld [vmem:[#allocation3 + $0xd8] sm:$0xff]
  %v2503 = vld [vmem:[#allocation3 + $0xe0] sm:$0xff]
  %v2504 = vld [vmem:[#allocation3 + $0xe8] sm:$0xff]
  %v2505 = vld [vmem:[#allocation3 + $0xf0] sm:$0xff]
  %v2506 = vld [vmem:[#allocation3 + $0xf8] sm:$0xf]
  %v2507 = vld [vmem:[#allocation3 + $0xfc] sm:$0xff]
  %v2508 = vld [vmem:[#allocation3 + $0x104] sm:$0xff]
  %v2509 = vld [vmem:[#allocation3 + $0x10c] sm:$0xff]
  %v2510 = vld [vmem:[#allocation3 + $0x114] sm:$0xff]
  %v2511 = vld [vmem:[#allocation3 + $0x11c] sm:$0xf]
  %v2512 = vld [vmem:[#allocation3 + $0x120] sm:$0xff]
  %v2513 = vld [vmem:[#allocation3 + $0x128] sm:$0xff]
  %v2514 = vld [vmem:[#allocation3 + $0x130] sm:$0xff]
  %v2515 = vld [vmem:[#allocation3 + $0x138] sm:$0xff]
  %v2516 = vld [vmem:[#allocation3 + $0x140] sm:$0xf]
  %v2517 = vld [vmem:[#allocation3 + $0x144] sm:$0xff]
  %v2518 = vld [vmem:[#allocation3 + $0x14c] sm:$0xff]
  %v2519 = vld [vmem:[#allocation3 + $0x154] sm:$0xff]
  %v2520 = vld [vmem:[#allocation3 + $0x15c] sm:$0xff]
  %v2521 = vld [vmem:[#allocation3 + $0x164] sm:$0xf]
  %v2522 = vld [vmem:[#allocation3 + $0x168] sm:$0xff]
  %v2523 = vld [vmem:[#allocation3 + $0x170] sm:$0xff]
  %v2524 = vld [vmem:[#allocation3 + $0x178] sm:$0xff]
  %v2525 = vld [vmem:[#allocation3 + $0x180] sm:$0xff]
  %v2526 = vld [vmem:[#allocation3 + $0x188] sm:$0xf]
  %v2527 = vld [vmem:[#allocation3 + $0x18c] sm:$0xff]
  %v2528 = vld [vmem:[#allocation3 + $0x194] sm:$0xff]
  %v2529 = vld [vmem:[#allocation3 + $0x19c] sm:$0xff]
  %v2530 = vld [vmem:[#allocation3 + $0x1a4] sm:$0xff]
  %v2531 = vld [vmem:[#allocation3 + $0x1ac] sm:$0xf]
  %v2532 = vld [vmem:[#allocation3 + $0x1b0] sm:$0xff]
  %v2533 = vld [vmem:[#allocation3 + $0x1b8] sm:$0xff]
  %v2534 = vld [vmem:[#allocation3 + $0x1c0] sm:$0xff]
  %v2535 = vld [vmem:[#allocation3 + $0x1c8] sm:$0xff]
  %v2536 = vld [vmem:[#allocation3 + $0x1d0] sm:$0xf]
  %v2537 = vld [vmem:[#allocation3 + $0x1d4] sm:$0xff]
  %v2538 = vld [vmem:[#allocation3 + $0x1dc] sm:$0xff]
  %v2539 = vld [vmem:[#allocation3 + $0x1e4] sm:$0xff]
  %v2540 = vld [vmem:[#allocation3 + $0x1ec] sm:$0xff]
  %v2541 = vld [vmem:[#allocation3 + $0x1f4] sm:$0xf]
  %v2542 = vld [vmem:[#allocation3 + $0x1f8] sm:$0xff]
  %v2543 = vld [vmem:[#allocation3 + $0x200] sm:$0xff]
  %v2544 = vld [vmem:[#allocation3 + $0x208] sm:$0xff]
  %v2545 = vld [vmem:[#allocation3 + $0x210] sm:$0xff]
  %v2546 = vld [vmem:[#allocation3 + $0x218] sm:$0xf]
  %v2547 = vld [vmem:[#allocation3 + $0x21c] sm:$0xff]
  %v2548 = vld [vmem:[#allocation3 + $0x224] sm:$0xff]
  %v2549 = vld [vmem:[#allocation3 + $0x22c] sm:$0xff]
  %v2550 = vld [vmem:[#allocation3 + $0x234] sm:$0xff]
  %v2551 = vld [vmem:[#allocation3 + $0x23c] sm:$0xf]
  %v2552 = vld [vmem:[%s4] sm:$0xf]
  %v2553 = vld [vmem:[%s4 + $0x4] sm:$0xf]
  %v2554 = vld [vmem:[%s4 + $0x8] sm:$0xf]
  %v2555 = vld [vmem:[%s4 + $0xc] sm:$0xf]
  %v2556 = vld [vmem:[%s4 + $0x10] sm:$0xf]
  %v2557 = vld [vmem:[%s4 + $0x14] sm:$0xf]
  %v2558 = vld [vmem:[%s4 + $0x18] sm:$0xf]
  %v2559 = vld [vmem:[%s4 + $0x1c] sm:$0xf]
  %v2560 = vld [vmem:[%s4 + $0x20] sm:$0xf]
  %v2561 = vld [vmem:[%s4 + $0x24] sm:$0xf]
  %v2562 = vld [vmem:[%s4 + $0x28] sm:$0xf]
  %v2563 = vld [vmem:[%s4 + $0x2c] sm:$0xf]
  %v2564 = vld [vmem:[%s4 + $0x30] sm:$0xf]
  %v2565 = vld [vmem:[%s4 + $0x34] sm:$0xf]
  %v2566 = vld [vmem:[%s4 + $0x38] sm:$0xf]
  %v2567 = vld [vmem:[%s4 + $0x3c] sm:$0xf]
  %v2568 = vld [vmem:[%s4 + $0x40] sm:$0xf]
  %v2569 = vld [vmem:[%s4 + $0x44] sm:$0xf]
  %v2570 = vld [vmem:[%s4 + $0x48] sm:$0xf]
  %v2571 = vld [vmem:[%s4 + $0x4c] sm:$0xf]
  %v2572 = vld [vmem:[%s4 + $0x50] sm:$0xf]
  %v2573 = vld [vmem:[%s4 + $0x54] sm:$0xf]
  %v2574 = vld [vmem:[%s4 + $0x58] sm:$0xf]
  %v2575 = vld [vmem:[%s4 + $0x5c] sm:$0xf]
  %v2576 = vld [vmem:[%s4 + $0x60] sm:$0xf]
  %v2577 = vld [vmem:[%s4 + $0x64] sm:$0xf]
  %v2578 = vld [vmem:[%s4 + $0x68] sm:$0xf]
  %v2579 = vld [vmem:[%s4 + $0x6c] sm:$0xf]
  %v2580 = vld [vmem:[%s4 + $0x70] sm:$0xf]
  %v2581 = vld [vmem:[%s4 + $0x74] sm:$0xf]
  %v2582 = vld [vmem:[%s4 + $0x78] sm:$0xf]
  %v2583 = vld [vmem:[%s4 + $0x7c] sm:$0xf]
  %v2584 = vld [vmem:[%s4 + $0x80] sm:$0xf]
  %v2585 = vld [vmem:[%s4 + $0x84] sm:$0xf]
  %v2586 = vld [vmem:[%s4 + $0x88] sm:$0xf]
  %v2587 = vld [vmem:[%s4 + $0x8c] sm:$0xf]
  %v2588 = vld [vmem:[%s4 + $0x90] sm:$0xf]
  %v2589 = vld [vmem:[%s4 + $0x94] sm:$0xf]
  %v2590 = vld [vmem:[%s4 + $0x98] sm:$0xf]
  %v2591 = vld [vmem:[%s4 + $0x9c] sm:$0xf]
  %v2592 = vld [vmem:[%s4 + $0xa0] sm:$0xf]
  %v2593 = vld [vmem:[%s4 + $0xa4] sm:$0xf]
  %v2594 = vld [vmem:[%s4 + $0xa8] sm:$0xf]
  %v2595 = vld [vmem:[%s4 + $0xac] sm:$0xf]
  %v2596 = vld [vmem:[%s4 + $0xb0] sm:$0xf]
  %v2597 = vld [vmem:[%s4 + $0xb4] sm:$0xf]
  %v2598 = vld [vmem:[%s4 + $0xb8] sm:$0xf]
  %v2599 = vld [vmem:[%s4 + $0xbc] sm:$0xf]
  %v2600 = vld [vmem:[%s4 + $0xc0] sm:$0xf]
  %v2601 = vld [vmem:[%s4 + $0xc4] sm:$0xf]
  %v2602 = vld [vmem:[%s4 + $0xc8] sm:$0xf]
  %v2603 = vld [vmem:[%s4 + $0xcc] sm:$0xf]
  %v2604 = vld [vmem:[%s4 + $0xd0] sm:$0xf]
  %v2605 = vld [vmem:[%s4 + $0xd4] sm:$0xf]
  %v2606 = vld [vmem:[%s4 + $0xd8] sm:$0xf]
  %v2607 = vld [vmem:[%s4 + $0xdc] sm:$0xf]
  %v2608 = vld [vmem:[%s4 + $0xe0] sm:$0xf]
  %v2609 = vld [vmem:[%s4 + $0xe4] sm:$0xf]
  %v2610 = vld [vmem:[%s4 + $0xe8] sm:$0xf]
  %v2611 = vld [vmem:[%s4 + $0xec] sm:$0xf]
  %v2612 = vld [vmem:[%s4 + $0xf0] sm:$0xf]
  %v2613 = vld [vmem:[%s4 + $0xf4] sm:$0xf]
  %v2614 = vld [vmem:[%s4 + $0xf8] sm:$0xf]
  %v2615 = vld [vmem:[%s4 + $0xfc] sm:$0xf]
  %v2616 = vld [vmem:[%s4 + $0x100] sm:$0xf]
  %v2617 = vld [vmem:[%s4 + $0x104] sm:$0xf]
  %v2618 = vld [vmem:[%s4 + $0x108] sm:$0xf]
  %v2619 = vld [vmem:[%s4 + $0x10c] sm:$0xf]
  %v2620 = vld [vmem:[%s4 + $0x110] sm:$0xf]
  %v2621 = vld [vmem:[%s4 + $0x114] sm:$0xf]
  %v2622 = vld [vmem:[%s4 + $0x118] sm:$0xf]
  %v2623 = vld [vmem:[%s4 + $0x11c] sm:$0xf]
  %v2624 = vld [vmem:[%s4 + $0x120] sm:$0xf]
  %v2625 = vld [vmem:[%s4 + $0x124] sm:$0xf]
  %v2626 = vld [vmem:[%s4 + $0x128] sm:$0xf]
  %v2627 = vld [vmem:[%s4 + $0x12c] sm:$0xf]
  %v2628 = vld [vmem:[%s4 + $0x130] sm:$0xf]
  %v2629 = vld [vmem:[%s4 + $0x134] sm:$0xf]
  %v2630 = vld [vmem:[%s4 + $0x138] sm:$0xf]
  %v2631 = vld [vmem:[%s4 + $0x13c] sm:$0xf]
  %v2632 = vld [vmem:[%s4 + $0x140] sm:$0xf]
  %v2633 = vld [vmem:[%s4 + $0x144] sm:$0xf]
  %v2634 = vld [vmem:[%s4 + $0x148] sm:$0xf]
  %v2635 = vld [vmem:[%s4 + $0x14c] sm:$0xf]
  %v2636 = vld [vmem:[%s4 + $0x150] sm:$0xf]
  %v2637 = vld [vmem:[%s4 + $0x154] sm:$0xf]
  %v2638 = vld [vmem:[%s4 + $0x158] sm:$0xf]
  %v2639 = vld [vmem:[%s4 + $0x15c] sm:$0xf]
  %v2640 = vld [vmem:[%s4 + $0x160] sm:$0xf]
  %v2641 = vld [vmem:[%s4 + $0x164] sm:$0xf]
  %v2642 = vld [vmem:[%s4 + $0x168] sm:$0xf]
  %v2643 = vld [vmem:[%s4 + $0x16c] sm:$0xf]
  %v2644 = vld [vmem:[%s4 + $0x170] sm:$0xf]
  %v2645 = vld [vmem:[%s4 + $0x174] sm:$0xf]
  %v2646 = vld [vmem:[%s4 + $0x178] sm:$0xf]
  %v2647 = vld [vmem:[%s4 + $0x17c] sm:$0xf]
  %v2648 = vld [vmem:[%s4 + $0x180] sm:$0xf]
  %v2649 = vld [vmem:[%s4 + $0x184] sm:$0xf]
  %v2650 = vld [vmem:[%s4 + $0x188] sm:$0xf]
  %v2651 = vld [vmem:[%s4 + $0x18c] sm:$0xf]
  %v2652 = vld [vmem:[%s4 + $0x190] sm:$0xf]
  %v2653 = vld [vmem:[%s4 + $0x194] sm:$0xf]
  %v2654 = vld [vmem:[%s4 + $0x198] sm:$0xf]
  %v2655 = vld [vmem:[%s4 + $0x19c] sm:$0xf]
  %v2656 = vld [vmem:[%s4 + $0x1a0] sm:$0xf]
  %v2657 = vld [vmem:[%s4 + $0x1a4] sm:$0xf]
  %v2658 = vld [vmem:[%s4 + $0x1a8] sm:$0xf]
  %v2659 = vld [vmem:[%s4 + $0x1ac] sm:$0xf]
  %v2660 = vld [vmem:[%s4 + $0x1b0] sm:$0xf]
  %v2661 = vld [vmem:[%s4 + $0x1b4] sm:$0xf]
  %v2662 = vld [vmem:[%s4 + $0x1b8] sm:$0xf]
  %v2663 = vld [vmem:[%s4 + $0x1bc] sm:$0xf]
  %v2664 = vld [vmem:[%s4 + $0x1c0] sm:$0xf]
  %v2665 = vld [vmem:[%s4 + $0x1c4] sm:$0xf]
  %v2666 = vld [vmem:[%s4 + $0x1c8] sm:$0xf]
  %v2667 = vld [vmem:[%s4 + $0x1cc] sm:$0xf]
  %v2668 = vld [vmem:[%s4 + $0x1d0] sm:$0xf]
  %v2669 = vld [vmem:[%s4 + $0x1d4] sm:$0xf]
  %v2670 = vld [vmem:[%s4 + $0x1d8] sm:$0xf]
  %v2671 = vld [vmem:[%s4 + $0x1dc] sm:$0xf]
  %v2672 = vld [vmem:[%s4 + $0x1e0] sm:$0xf]
  %v2673 = vld [vmem:[%s4 + $0x1e4] sm:$0xf]
  %v2674 = vld [vmem:[%s4 + $0x1e8] sm:$0xf]
  %v2675 = vld [vmem:[%s4 + $0x1ec] sm:$0xf]
  %v2676 = vld [vmem:[%s4 + $0x1f0] sm:$0xf]
  %v2677 = vld [vmem:[%s4 + $0x1f4] sm:$0xf]
  %v2678 = vld [vmem:[%s4 + $0x1f8] sm:$0xf]
  %v2679 = vld [vmem:[%s4 + $0x1fc] sm:$0xf]
  %v2680 = vld [vmem:[%s4 + $0x200] sm:$0xf]
  %v2681 = vld [vmem:[%s4 + $0x204] sm:$0xf]
  %v2682 = vld [vmem:[%s4 + $0x208] sm:$0xf]
  %v2683 = vld [vmem:[%s4 + $0x20c] sm:$0xf]
  %v2684 = vld [vmem:[%s4 + $0x210] sm:$0xf]
  %v2685 = vld [vmem:[%s4 + $0x214] sm:$0xf]
  %v2686 = vld [vmem:[%s4 + $0x218] sm:$0xf]
  %v2687 = vld [vmem:[%s4 + $0x21c] sm:$0xf]
  %v2688 = vld [vmem:[%s4 + $0x220] sm:$0xf]
  %v2689 = vld [vmem:[%s4 + $0x224] sm:$0xf]
  %v2690 = vld [vmem:[%s4 + $0x228] sm:$0xf]
  %v2691 = vld [vmem:[%s4 + $0x22c] sm:$0xf]
  %v2692 = vld [vmem:[%s4 + $0x230] sm:$0xf]
  %v2693 = vld [vmem:[%s4 + $0x234] sm:$0xf]
  %v2694 = vld [vmem:[%s4 + $0x238] sm:$0xf]
  %v2695 = vld [vmem:[%s4 + $0x23c] sm:$0xf]
  %v2776 = vunpack.c.l.b16 %v2472
  %v2777 = vunpack.c.h.b16 %v2472
  %v2778 = vunpack.c.l.b16 %v2473
  %v2779 = vunpack.c.h.b16 %v2473
  %v2780 = vunpack.c.l.b16 %v2474
  %v2781 = vunpack.c.h.b16 %v2474
  %v2782 = vunpack.c.l.b16 %v2475
  %v2783 = vunpack.c.h.b16 %v2475
  %v2784 = vunpack.c.l.b16 %v2476
  %v2785 = vunpack.c.l.b16 %v2477
  %v2786 = vunpack.c.h.b16 %v2477
  %v2787 = vunpack.c.l.b16 %v2478
  %v2788 = vunpack.c.h.b16 %v2478
  %v2789 = vunpack.c.l.b16 %v2479
  %v2790 = vunpack.c.h.b16 %v2479
  %v2791 = vunpack.c.l.b16 %v2480
  %v2792 = vunpack.c.h.b16 %v2480
  %v2793 = vunpack.c.l.b16 %v2481
  %v2794 = vunpack.c.l.b16 %v2482
  %v2795 = vunpack.c.h.b16 %v2482
  %v2796 = vunpack.c.l.b16 %v2483
  %v2797 = vunpack.c.h.b16 %v2483
  %v2798 = vunpack.c.l.b16 %v2484
  %v2799 = vunpack.c.h.b16 %v2484
  %v2800 = vunpack.c.l.b16 %v2485
  %v2801 = vunpack.c.h.b16 %v2485
  %v2802 = vunpack.c.l.b16 %v2486
  %v2803 = vunpack.c.l.b16 %v2487
  %v2804 = vunpack.c.h.b16 %v2487
  %v2805 = vunpack.c.l.b16 %v2488
  %v2806 = vunpack.c.h.b16 %v2488
  %v2807 = vunpack.c.l.b16 %v2489
  %v2808 = vunpack.c.h.b16 %v2489
  %v2809 = vunpack.c.l.b16 %v2490
  %v2810 = vunpack.c.h.b16 %v2490
  %v2811 = vunpack.c.l.b16 %v2491
  %v2812 = vunpack.c.l.b16 %v2492
  %v2813 = vunpack.c.h.b16 %v2492
  %v2814 = vunpack.c.l.b16 %v2493
  %v2815 = vunpack.c.h.b16 %v2493
  %v2816 = vunpack.c.l.b16 %v2494
  %v2817 = vunpack.c.h.b16 %v2494
  %v2818 = vunpack.c.l.b16 %v2495
  %v2819 = vunpack.c.h.b16 %v2495
  %v2820 = vunpack.c.l.b16 %v2496
  %v2821 = vunpack.c.l.b16 %v2497
  %v2822 = vunpack.c.h.b16 %v2497
  %v2823 = vunpack.c.l.b16 %v2498
  %v2824 = vunpack.c.h.b16 %v2498
  %v2825 = vunpack.c.l.b16 %v2499
  %v2826 = vunpack.c.h.b16 %v2499
  %v2827 = vunpack.c.l.b16 %v2500
  %v2828 = vunpack.c.h.b16 %v2500
  %v2829 = vunpack.c.l.b16 %v2501
  %v2830 = vunpack.c.l.b16 %v2502
  %v2831 = vunpack.c.h.b16 %v2502
  %v2832 = vunpack.c.l.b16 %v2503
  %v2833 = vunpack.c.h.b16 %v2503
  %v2834 = vunpack.c.l.b16 %v2504
  %v2835 = vunpack.c.h.b16 %v2504
  %v2836 = vunpack.c.l.b16 %v2505
  %v2837 = vunpack.c.h.b16 %v2505
  %v2838 = vunpack.c.l.b16 %v2506
  %v2839 = vunpack.c.l.b16 %v2507
  %v2840 = vunpack.c.h.b16 %v2507
  %v2841 = vunpack.c.l.b16 %v2508
  %v2842 = vunpack.c.h.b16 %v2508
  %v2843 = vunpack.c.l.b16 %v2509
  %v2844 = vunpack.c.h.b16 %v2509
  %v2845 = vunpack.c.l.b16 %v2510
  %v2846 = vunpack.c.h.b16 %v2510
  %v2847 = vunpack.c.l.b16 %v2511
  %v2848 = vunpack.c.l.b16 %v2512
  %v2849 = vunpack.c.h.b16 %v2512
  %v2850 = vunpack.c.l.b16 %v2513
  %v2851 = vunpack.c.h.b16 %v2513
  %v2852 = vunpack.c.l.b16 %v2514
  %v2853 = vunpack.c.h.b16 %v2514
  %v2854 = vunpack.c.l.b16 %v2515
  %v2855 = vunpack.c.h.b16 %v2515
  %v2856 = vunpack.c.l.b16 %v2516
  %v2857 = vunpack.c.l.b16 %v2517
  %v2858 = vunpack.c.h.b16 %v2517
  %v2859 = vunpack.c.l.b16 %v2518
  %v2860 = vunpack.c.h.b16 %v2518
  %v2861 = vunpack.c.l.b16 %v2519
  %v2862 = vunpack.c.h.b16 %v2519
  %v2863 = vunpack.c.l.b16 %v2520
  %v2864 = vunpack.c.h.b16 %v2520
  %v2865 = vunpack.c.l.b16 %v2521
  %v2866 = vunpack.c.l.b16 %v2522
  %v2867 = vunpack.c.h.b16 %v2522
  %v2868 = vunpack.c.l.b16 %v2523
  %v2869 = vunpack.c.h.b16 %v2523
  %v2870 = vunpack.c.l.b16 %v2524
  %v2871 = vunpack.c.h.b16 %v2524
  %v2872 = vunpack.c.l.b16 %v2525
  %v2873 = vunpack.c.h.b16 %v2525
  %v2874 = vunpack.c.l.b16 %v2526
  %v2875 = vunpack.c.l.b16 %v2527
  %v2876 = vunpack.c.h.b16 %v2527
  %v2877 = vunpack.c.l.b16 %v2528
  %v2878 = vunpack.c.h.b16 %v2528
  %v2879 = vunpack.c.l.b16 %v2529
  %v2880 = vunpack.c.h.b16 %v2529
  %v2881 = vunpack.c.l.b16 %v2530
  %v2882 = vunpack.c.h.b16 %v2530
  %v2883 = vunpack.c.l.b16 %v2531
  %v2884 = vunpack.c.l.b16 %v2532
  %v2885 = vunpack.c.h.b16 %v2532
  %v2886 = vunpack.c.l.b16 %v2533
  %v2887 = vunpack.c.h.b16 %v2533
  %v2888 = vunpack.c.l.b16 %v2534
  %v2889 = vunpack.c.h.b16 %v2534
  %v2890 = vunpack.c.l.b16 %v2535
  %v2891 = vunpack.c.h.b16 %v2535
  %v2892 = vunpack.c.l.b16 %v2536
  %v2893 = vunpack.c.l.b16 %v2537
  %v2894 = vunpack.c.h.b16 %v2537
  %v2895 = vunpack.c.l.b16 %v2538
  %v2896 = vunpack.c.h.b16 %v2538
  %v2897 = vunpack.c.l.b16 %v2539
  %v2898 = vunpack.c.h.b16 %v2539
  %v2899 = vunpack.c.l.b16 %v2540
  %v2900 = vunpack.c.h.b16 %v2540
  %v2901 = vunpack.c.l.b16 %v2541
  %v2902 = vunpack.c.l.b16 %v2542
  %v2903 = vunpack.c.h.b16 %v2542
  %v2904 = vunpack.c.l.b16 %v2543
  %v2905 = vunpack.c.h.b16 %v2543
  %v2906 = vunpack.c.l.b16 %v2544
  %v2907 = vunpack.c.h.b16 %v2544
  %v2908 = vunpack.c.l.b16 %v2545
  %v2909 = vunpack.c.h.b16 %v2545
  %v2910 = vunpack.c.l.b16 %v2546
  %v2911 = vunpack.c.l.b16 %v2547
  %v2912 = vunpack.c.h.b16 %v2547
  %v2913 = vunpack.c.l.b16 %v2548
  %v2914 = vunpack.c.h.b16 %v2548
  %v2915 = vunpack.c.l.b16 %v2549
  %v2916 = vunpack.c.h.b16 %v2549
  %v2917 = vunpack.c.l.b16 %v2550
  %v2918 = vunpack.c.h.b16 %v2550
  %v2919 = vunpack.c.l.b16 %v2551
  %v2920 = vpack.c.b16 %v2785, %v2776
  %v2921 = vpack.c.b16 %v2786, %v2777
  %v2922 = vpack.c.b16 %v2787, %v2778
  %v2923 = vpack.c.b16 %v2788, %v2779
  %v2924 = vpack.c.b16 %v2789, %v2780
  %v2925 = vpack.c.b16 %v2790, %v2781
  %v2926 = vpack.c.b16 %v2791, %v2782
  %v2927 = vpack.c.b16 %v2792, %v2783
  %v2928 = vpack.c.b16 %v2793, %v2784
  %v2929 = vpack.c.b16 %v2803, %v2794
  %v2930 = vpack.c.b16 %v2804, %v2795
  %v2931 = vpack.c.b16 %v2805, %v2796
  %v2932 = vpack.c.b16 %v2806, %v2797
  %v2933 = vpack.c.b16 %v2807, %v2798
  %v2934 = vpack.c.b16 %v2808, %v2799
  %v2935 = vpack.c.b16 %v2809, %v2800
  %v2936 = vpack.c.b16 %v2810, %v2801
  %v2937 = vpack.c.b16 %v2811, %v2802
  %v2938 = vpack.c.b16 %v2821, %v2812
  %v2939 = vpack.c.b16 %v2822, %v2813
  %v2940 = vpack.c.b16 %v2823, %v2814
  %v2941 = vpack.c.b16 %v2824, %v2815
  %v2942 = vpack.c.b16 %v2825, %v2816
  %v2943 = vpack.c.b16 %v2826, %v2817
  %v2944 = vpack.c.b16 %v2827, %v2818
  %v2945 = vpack.c.b16 %v2828, %v2819
  %v2946 = vpack.c.b16 %v2829, %v2820
  %v2947 = vpack.c.b16 %v2839, %v2830
  %v2948 = vpack.c.b16 %v2840, %v2831
  %v2949 = vpack.c.b16 %v2841, %v2832
  %v2950 = vpack.c.b16 %v2842, %v2833
  %v2951 = vpack.c.b16 %v2843, %v2834
  %v2952 = vpack.c.b16 %v2844, %v2835
  %v2953 = vpack.c.b16 %v2845, %v2836
  %v2954 = vpack.c.b16 %v2846, %v2837
  %v2955 = vpack.c.b16 %v2847, %v2838
  %v2956 = vpack.c.b16 %v2857, %v2848
  %v2957 = vpack.c.b16 %v2858, %v2849
  %v2958 = vpack.c.b16 %v2859, %v2850
  %v2959 = vpack.c.b16 %v2860, %v2851
  %v2960 = vpack.c.b16 %v2861, %v2852
  %v2961 = vpack.c.b16 %v2862, %v2853
  %v2962 = vpack.c.b16 %v2863, %v2854
  %v2963 = vpack.c.b16 %v2864, %v2855
  %v2964 = vpack.c.b16 %v2865, %v2856
  %v2965 = vpack.c.b16 %v2875, %v2866
  %v2966 = vpack.c.b16 %v2876, %v2867
  %v2967 = vpack.c.b16 %v2877, %v2868
  %v2968 = vpack.c.b16 %v2878, %v2869
  %v2969 = vpack.c.b16 %v2879, %v2870
  %v2970 = vpack.c.b16 %v2880, %v2871
  %v2971 = vpack.c.b16 %v2881, %v2872
  %v2972 = vpack.c.b16 %v2882, %v2873
  %v2973 = vpack.c.b16 %v2883, %v2874
  %v2974 = vpack.c.b16 %v2893, %v2884
  %v2975 = vpack.c.b16 %v2894, %v2885
  %v2976 = vpack.c.b16 %v2895, %v2886
  %v2977 = vpack.c.b16 %v2896, %v2887
  %v2978 = vpack.c.b16 %v2897, %v2888
  %v2979 = vpack.c.b16 %v2898, %v2889
  %v2980 = vpack.c.b16 %v2899, %v2890
  %v2981 = vpack.c.b16 %v2900, %v2891
  %v2982 = vpack.c.b16 %v2901, %v2892
  %v2983 = vpack.c.b16 %v2911, %v2902
  %v2984 = vpack.c.b16 %v2912, %v2903
  %v2985 = vpack.c.b16 %v2913, %v2904
  %v2986 = vpack.c.b16 %v2914, %v2905
  %v2987 = vpack.c.b16 %v2915, %v2906
  %v2988 = vpack.c.b16 %v2916, %v2907
  %v2989 = vpack.c.b16 %v2917, %v2908
  %v2990 = vpack.c.b16 %v2918, %v2909
  %v2991 = vpack.c.b16 %v2919, %v2910
  %v3208 = vunpack.c.l.b16 %v2552
  %v3209 = vunpack.c.l.b16 %v2553
  %v3210 = vunpack.c.l.b16 %v2554
  %v3211 = vunpack.c.l.b16 %v2555
  %v3212 = vunpack.c.l.b16 %v2556
  %v3213 = vunpack.c.l.b16 %v2557
  %v3214 = vunpack.c.l.b16 %v2558
  %v3215 = vunpack.c.l.b16 %v2559
  %v3216 = vunpack.c.l.b16 %v2560
  %v3217 = vunpack.c.l.b16 %v2561
  %v3218 = vunpack.c.l.b16 %v2562
  %v3219 = vunpack.c.l.b16 %v2563
  %v3220 = vunpack.c.l.b16 %v2564
  %v3221 = vunpack.c.l.b16 %v2565
  %v3222 = vunpack.c.l.b16 %v2566
  %v3223 = vunpack.c.l.b16 %v2567
  %v3224 = vunpack.c.l.b16 %v2568
  %v3225 = vunpack.c.l.b16 %v2569
  %v3226 = vunpack.c.l.b16 %v2570
  %v3227 = vunpack.c.l.b16 %v2571
  %v3228 = vunpack.c.l.b16 %v2572
  %v3229 = vunpack.c.l.b16 %v2573
  %v3230 = vunpack.c.l.b16 %v2574
  %v3231 = vunpack.c.l.b16 %v2575
  %v3232 = vunpack.c.l.b16 %v2576
  %v3233 = vunpack.c.l.b16 %v2577
  %v3234 = vunpack.c.l.b16 %v2578
  %v3235 = vunpack.c.l.b16 %v2579
  %v3236 = vunpack.c.l.b16 %v2580
  %v3237 = vunpack.c.l.b16 %v2581
  %v3238 = vunpack.c.l.b16 %v2582
  %v3239 = vunpack.c.l.b16 %v2583
  %v3240 = vunpack.c.l.b16 %v2584
  %v3241 = vunpack.c.l.b16 %v2585
  %v3242 = vunpack.c.l.b16 %v2586
  %v3243 = vunpack.c.l.b16 %v2587
  %v3244 = vunpack.c.l.b16 %v2588
  %v3245 = vunpack.c.l.b16 %v2589
  %v3246 = vunpack.c.l.b16 %v2590
  %v3247 = vunpack.c.l.b16 %v2591
  %v3248 = vunpack.c.l.b16 %v2592
  %v3249 = vunpack.c.l.b16 %v2593
  %v3250 = vunpack.c.l.b16 %v2594
  %v3251 = vunpack.c.l.b16 %v2595
  %v3252 = vunpack.c.l.b16 %v2596
  %v3253 = vunpack.c.l.b16 %v2597
  %v3254 = vunpack.c.l.b16 %v2598
  %v3255 = vunpack.c.l.b16 %v2599
  %v3256 = vunpack.c.l.b16 %v2600
  %v3257 = vunpack.c.l.b16 %v2601
  %v3258 = vunpack.c.l.b16 %v2602
  %v3259 = vunpack.c.l.b16 %v2603
  %v3260 = vunpack.c.l.b16 %v2604
  %v3261 = vunpack.c.l.b16 %v2605
  %v3262 = vunpack.c.l.b16 %v2606
  %v3263 = vunpack.c.l.b16 %v2607
  %v3264 = vunpack.c.l.b16 %v2608
  %v3265 = vunpack.c.l.b16 %v2609
  %v3266 = vunpack.c.l.b16 %v2610
  %v3267 = vunpack.c.l.b16 %v2611
  %v3268 = vunpack.c.l.b16 %v2612
  %v3269 = vunpack.c.l.b16 %v2613
  %v3270 = vunpack.c.l.b16 %v2614
  %v3271 = vunpack.c.l.b16 %v2615
  %v3272 = vunpack.c.l.b16 %v2616
  %v3273 = vunpack.c.l.b16 %v2617
  %v3274 = vunpack.c.l.b16 %v2618
  %v3275 = vunpack.c.l.b16 %v2619
  %v3276 = vunpack.c.l.b16 %v2620
  %v3277 = vunpack.c.l.b16 %v2621
  %v3278 = vunpack.c.l.b16 %v2622
  %v3279 = vunpack.c.l.b16 %v2623
  %v3280 = vunpack.c.l.b16 %v2624
  %v3281 = vunpack.c.l.b16 %v2625
  %v3282 = vunpack.c.l.b16 %v2626
  %v3283 = vunpack.c.l.b16 %v2627
  %v3284 = vunpack.c.l.b16 %v2628
  %v3285 = vunpack.c.l.b16 %v2629
  %v3286 = vunpack.c.l.b16 %v2630
  %v3287 = vunpack.c.l.b16 %v2631
  %v3288 = vunpack.c.l.b16 %v2632
  %v3289 = vunpack.c.l.b16 %v2633
  %v3290 = vunpack.c.l.b16 %v2634
  %v3291 = vunpack.c.l.b16 %v2635
  %v3292 = vunpack.c.l.b16 %v2636
  %v3293 = vunpack.c.l.b16 %v2637
  %v3294 = vunpack.c.l.b16 %v2638
  %v3295 = vunpack.c.l.b16 %v2639
  %v3296 = vunpack.c.l.b16 %v2640
  %v3297 = vunpack.c.l.b16 %v2641
  %v3298 = vunpack.c.l.b16 %v2642
  %v3299 = vunpack.c.l.b16 %v2643
  %v3300 = vunpack.c.l.b16 %v2644
  %v3301 = vunpack.c.l.b16 %v2645
  %v3302 = vunpack.c.l.b16 %v2646
  %v3303 = vunpack.c.l.b16 %v2647
  %v3304 = vunpack.c.l.b16 %v2648
  %v3305 = vunpack.c.l.b16 %v2649
  %v3306 = vunpack.c.l.b16 %v2650
  %v3307 = vunpack.c.l.b16 %v2651
  %v3308 = vunpack.c.l.b16 %v2652
  %v3309 = vunpack.c.l.b16 %v2653
  %v3310 = vunpack.c.l.b16 %v2654
  %v3311 = vunpack.c.l.b16 %v2655
  %v3312 = vunpack.c.l.b16 %v2656
  %v3313 = vunpack.c.l.b16 %v2657
  %v3314 = vunpack.c.l.b16 %v2658
  %v3315 = vunpack.c.l.b16 %v2659
  %v3316 = vunpack.c.l.b16 %v2660
  %v3317 = vunpack.c.l.b16 %v2661
  %v3318 = vunpack.c.l.b16 %v2662
  %v3319 = vunpack.c.l.b16 %v2663
  %v3320 = vunpack.c.l.b16 %v2664
  %v3321 = vunpack.c.l.b16 %v2665
  %v3322 = vunpack.c.l.b16 %v2666
  %v3323 = vunpack.c.l.b16 %v2667
  %v3324 = vunpack.c.l.b16 %v2668
  %v3325 = vunpack.c.l.b16 %v2669
  %v3326 = vunpack.c.l.b16 %v2670
  %v3327 = vunpack.c.l.b16 %v2671
  %v3328 = vunpack.c.l.b16 %v2672
  %v3329 = vunpack.c.l.b16 %v2673
  %v3330 = vunpack.c.l.b16 %v2674
  %v3331 = vunpack.c.l.b16 %v2675
  %v3332 = vunpack.c.l.b16 %v2676
  %v3333 = vunpack.c.l.b16 %v2677
  %v3334 = vunpack.c.l.b16 %v2678
  %v3335 = vunpack.c.l.b16 %v2679
  %v3336 = vunpack.c.l.b16 %v2680
  %v3337 = vunpack.c.l.b16 %v2681
  %v3338 = vunpack.c.l.b16 %v2682
  %v3339 = vunpack.c.l.b16 %v2683
  %v3340 = vunpack.c.l.b16 %v2684
  %v3341 = vunpack.c.l.b16 %v2685
  %v3342 = vunpack.c.l.b16 %v2686
  %v3343 = vunpack.c.l.b16 %v2687
  %v3344 = vunpack.c.l.b16 %v2688
  %v3345 = vunpack.c.l.b16 %v2689
  %v3346 = vunpack.c.l.b16 %v2690
  %v3347 = vunpack.c.l.b16 %v2691
  %v3348 = vunpack.c.l.b16 %v2692
  %v3349 = vunpack.c.l.b16 %v2693
  %v3350 = vunpack.c.l.b16 %v2694
  %v3351 = vunpack.c.l.b16 %v2695
  %v3352 = vpack.c.b16 %v3209, %v3208
  %v3353 = vpack.c.b16 %v3211, %v3210
  %v3354 = vpack.c.b16 %v3213, %v3212
  %v3355 = vpack.c.b16 %v3215, %v3214
  %v3356 = vpack.c.b16 %v3217, %v3216
  %v3357 = vpack.c.b16 %v3219, %v3218
  %v3358 = vpack.c.b16 %v3221, %v3220
  %v3359 = vpack.c.b16 %v3223, %v3222
  %v3360 = vpack.c.b16 %v3225, %v3224
  %v3361 = vpack.c.b16 %v3227, %v3226
  %v3362 = vpack.c.b16 %v3229, %v3228
  %v3363 = vpack.c.b16 %v3231, %v3230
  %v3364 = vpack.c.b16 %v3233, %v3232
  %v3365 = vpack.c.b16 %v3235, %v3234
  %v3366 = vpack.c.b16 %v3237, %v3236
  %v3367 = vpack.c.b16 %v3239, %v3238
  %v3368 = vpack.c.b16 %v3241, %v3240
  %v3369 = vpack.c.b16 %v3243, %v3242
  %v3370 = vpack.c.b16 %v3245, %v3244
  %v3371 = vpack.c.b16 %v3247, %v3246
  %v3372 = vpack.c.b16 %v3249, %v3248
  %v3373 = vpack.c.b16 %v3251, %v3250
  %v3374 = vpack.c.b16 %v3253, %v3252
  %v3375 = vpack.c.b16 %v3255, %v3254
  %v3376 = vpack.c.b16 %v3257, %v3256
  %v3377 = vpack.c.b16 %v3259, %v3258
  %v3378 = vpack.c.b16 %v3261, %v3260
  %v3379 = vpack.c.b16 %v3263, %v3262
  %v3380 = vpack.c.b16 %v3265, %v3264
  %v3381 = vpack.c.b16 %v3267, %v3266
  %v3382 = vpack.c.b16 %v3269, %v3268
  %v3383 = vpack.c.b16 %v3271, %v3270
  %v3384 = vpack.c.b16 %v3273, %v3272
  %v3385 = vpack.c.b16 %v3275, %v3274
  %v3386 = vpack.c.b16 %v3277, %v3276
  %v3387 = vpack.c.b16 %v3279, %v3278
  %v3388 = vpack.c.b16 %v3281, %v3280
  %v3389 = vpack.c.b16 %v3283, %v3282
  %v3390 = vpack.c.b16 %v3285, %v3284
  %v3391 = vpack.c.b16 %v3287, %v3286
  %v3392 = vpack.c.b16 %v3289, %v3288
  %v3393 = vpack.c.b16 %v3291, %v3290
  %v3394 = vpack.c.b16 %v3293, %v3292
  %v3395 = vpack.c.b16 %v3295, %v3294
  %v3396 = vpack.c.b16 %v3297, %v3296
  %v3397 = vpack.c.b16 %v3299, %v3298
  %v3398 = vpack.c.b16 %v3301, %v3300
  %v3399 = vpack.c.b16 %v3303, %v3302
  %v3400 = vpack.c.b16 %v3305, %v3304
  %v3401 = vpack.c.b16 %v3307, %v3306
  %v3402 = vpack.c.b16 %v3309, %v3308
  %v3403 = vpack.c.b16 %v3311, %v3310
  %v3404 = vpack.c.b16 %v3313, %v3312
  %v3405 = vpack.c.b16 %v3315, %v3314
  %v3406 = vpack.c.b16 %v3317, %v3316
  %v3407 = vpack.c.b16 %v3319, %v3318
  %v3408 = vpack.c.b16 %v3321, %v3320
  %v3409 = vpack.c.b16 %v3323, %v3322
  %v3410 = vpack.c.b16 %v3325, %v3324
  %v3411 = vpack.c.b16 %v3327, %v3326
  %v3412 = vpack.c.b16 %v3329, %v3328
  %v3413 = vpack.c.b16 %v3331, %v3330
  %v3414 = vpack.c.b16 %v3333, %v3332
  %v3415 = vpack.c.b16 %v3335, %v3334
  %v3416 = vpack.c.b16 %v3337, %v3336
  %v3417 = vpack.c.b16 %v3339, %v3338
  %v3418 = vpack.c.b16 %v3341, %v3340
  %v3419 = vpack.c.b16 %v3343, %v3342
  %v3420 = vpack.c.b16 %v3345, %v3344
  %v3421 = vpack.c.b16 %v3347, %v3346
  %v3422 = vpack.c.b16 %v3349, %v3348
  %v3423 = vpack.c.b16 %v3351, %v3350
  %3496 = vmatprep.subr.bf16.mxu0 0
  %3497 = vmatpush1.bf16.msra.mxu0 %v3359
  %3498 = vmatprep.subr.bf16.mxu0 0
  %3499 = vmatpush1.bf16.msra.mxu0 %v3358
  %3500 = vmatprep.subr.bf16.mxu0 0
  %3501 = vmatpush1.bf16.msra.mxu0 %v3357
  %3502 = vmatprep.subr.bf16.mxu0 0
  %3503 = vmatpush1.bf16.msra.mxu0 %v3356
  %3504 = vmatprep.subr.bf16.mxu0 0
  %3505 = vmatpush1.bf16.msra.mxu0 %v3355
  %3506 = vmatprep.subr.bf16.mxu0 0
  %3507 = vmatpush1.bf16.msra.mxu0 %v3354
  %3508 = vmatprep.subr.bf16.mxu0 0
  %3509 = vmatpush1.bf16.msra.mxu0 %v3353
  %3510 = vmatprep.subr.bf16.mxu0 0
  %3511 = vmatpush1.bf16.msra.mxu0 %v3352
  %3512 = vmatprep.subr.bf16.mxu0 0
  %3513 = vmatpush2.bf16.msra.mxu0 %v3367
  %3514 = vmatprep.subr.bf16.mxu0 0
  %3515 = vmatpush2.bf16.msra.mxu0 %v3366
  %3516 = vmatprep.subr.bf16.mxu0 0
  %3517 = vmatpush2.bf16.msra.mxu0 %v3365
  %3518 = vmatprep.subr.bf16.mxu0 0
  %3519 = vmatpush2.bf16.msra.mxu0 %v3364
  %3520 = vmatprep.subr.bf16.mxu0 0
  %3521 = vmatpush2.bf16.msra.mxu0 %v3363
  %3522 = vmatprep.subr.bf16.mxu0 0
  %3523 = vmatpush2.bf16.msra.mxu0 %v3362
  %3524 = vmatprep.subr.bf16.mxu0 0
  %3525 = vmatpush2.bf16.msra.mxu0 %v3361
  %3526 = vmatprep.subr.bf16.mxu0 0
  %3527 = vmatpush2.bf16.msra.mxu0 %v3360
  %3528 = vmatprep.mubr.bf16.mxu0 %v2921
  %3529 = vmatmul.mubr.bf16.gmra.mxu0 %v2920
  %v3530 = vpop.f32.mrf.mxu0
  %v3531 = vadd.f32 0.0, %v3530
  %v3532 = vpop.f32.mrf.mxu0
  %v3533 = vpop.f32.mrf.mxu0
  %v3534 = vadd.f32 0.0, %v3533
  %v3535 = vpop.f32.mrf.mxu0
  %3536 = vmatprep.mubr.bf16.mxu0 %v2930
  %3537 = vmatmul.mubr.bf16.gmra.mxu0 %v2929
  %v3538 = vpop.f32.mrf.mxu0
  %v3539 = vadd.f32 0.0, %v3538
  %v3540 = vpop.f32.mrf.mxu0
  %v3541 = vpop.f32.mrf.mxu0
  %v3542 = vadd.f32 0.0, %v3541
  %v3543 = vpop.f32.mrf.mxu0
  %3544 = vmatprep.mubr.bf16.mxu0 %v2939
  %3545 = vmatmul.mubr.bf16.gmra.mxu0 %v2938
  %v3546 = vpop.f32.mrf.mxu0
  %v3547 = vadd.f32 0.0, %v3546
  %v3548 = vpop.f32.mrf.mxu0
  %v3549 = vpop.f32.mrf.mxu0
  %v3550 = vadd.f32 0.0, %v3549
  %v3551 = vpop.f32.mrf.mxu0
  %3552 = vmatprep.mubr.bf16.mxu0 %v2948
  %3553 = vmatmul.mubr.bf16.gmra.mxu0 %v2947
  %v3554 = vpop.f32.mrf.mxu0
  %v3555 = vadd.f32 0.0, %v3554
  %v3556 = vpop.f32.mrf.mxu0
  %v3557 = vpop.f32.mrf.mxu0
  %v3558 = vadd.f32 0.0, %v3557
  %v3559 = vpop.f32.mrf.mxu0
  %3560 = vmatprep.mubr.bf16.mxu0 %v2957
  %3561 = vmatmul.mubr.bf16.gmra.mxu0 %v2956
  %v3562 = vpop.f32.mrf.mxu0
  %v3563 = vadd.f32 0.0, %v3562
  %v3564 = vpop.f32.mrf.mxu0
  %v3565 = vpop.f32.mrf.mxu0
  %v3566 = vadd.f32 0.0, %v3565
  %v3567 = vpop.f32.mrf.mxu0
  %3568 = vmatprep.mubr.bf16.mxu0 %v2966
  %3569 = vmatmul.mubr.bf16.gmra.mxu0 %v2965
  %v3570 = vpop.f32.mrf.mxu0
  %v3571 = vadd.f32 0.0, %v3570
  %v3572 = vpop.f32.mrf.mxu0
  %v3573 = vpop.f32.mrf.mxu0
  %v3574 = vadd.f32 0.0, %v3573
  %v3575 = vpop.f32.mrf.mxu0
  %3576 = vmatprep.mubr.bf16.mxu0 %v2975
  %3577 = vmatmul.mubr.bf16.gmra.mxu0 %v2974
  %v3578 = vpop.f32.mrf.mxu0
  %v3579 = vadd.f32 0.0, %v3578
  %v3580 = vpop.f32.mrf.mxu0
  %v3581 = vpop.f32.mrf.mxu0
  %v3582 = vadd.f32 0.0, %v3581
  %v3583 = vpop.f32.mrf.mxu0
  %3584 = vmatprep.mubr.bf16.mxu0 %v2984
  %3585 = vmatmul.mubr.bf16.gmra.mxu0 %v2983
  %v3586 = vpop.f32.mrf.mxu0
  %v3587 = vadd.f32 0.0, %v3586
  %v3588 = vpop.f32.mrf.mxu0
  %v3589 = vpop.f32.mrf.mxu0
  %v3590 = vadd.f32 0.0, %v3589
  %v3591 = vpop.f32.mrf.mxu0
  %3592 = vdwg.mxu0
  %3593 = vmatprep.subr.bf16.mxu0 0
  %3594 = vmatpush1.bf16.msra.mxu0 %v3375
  %3595 = vmatprep.subr.bf16.mxu0 0
  %3596 = vmatpush1.bf16.msra.mxu0 %v3374
  %3597 = vmatprep.subr.bf16.mxu0 0
  %3598 = vmatpush1.bf16.msra.mxu0 %v3373
  %3599 = vmatprep.subr.bf16.mxu0 0
  %3600 = vmatpush1.bf16.msra.mxu0 %v3372
  %3601 = vmatprep.subr.bf16.mxu0 0
  %3602 = vmatpush1.bf16.msra.mxu0 %v3371
  %3603 = vmatprep.subr.bf16.mxu0 0
  %3604 = vmatpush1.bf16.msra.mxu0 %v3370
  %3605 = vmatprep.subr.bf16.mxu0 0
  %3606 = vmatpush1.bf16.msra.mxu0 %v3369
  %3607 = vmatprep.subr.bf16.mxu0 0
  %3608 = vmatpush1.bf16.msra.mxu0 %v3368
  %3609 = vmatprep.subr.bf16.mxu0 0
  %3610 = vmatpush2.bf16.msra.mxu0 %v3383
  %3611 = vmatprep.subr.bf16.mxu0 0
  %3612 = vmatpush2.bf16.msra.mxu0 %v3382
  %3613 = vmatprep.subr.bf16.mxu0 0
  %3614 = vmatpush2.bf16.msra.mxu0 %v3381
  %3615 = vmatprep.subr.bf16.mxu0 0
  %3616 = vmatpush2.bf16.msra.mxu0 %v3380
  %3617 = vmatprep.subr.bf16.mxu0 0
  %3618 = vmatpush2.bf16.msra.mxu0 %v3379
  %3619 = vmatprep.subr.bf16.mxu0 0
  %3620 = vmatpush2.bf16.msra.mxu0 %v3378
  %3621 = vmatprep.subr.bf16.mxu0 0
  %3622 = vmatpush2.bf16.msra.mxu0 %v3377
  %3623 = vmatprep.subr.bf16.mxu0 0
  %3624 = vmatpush2.bf16.msra.mxu0 %v3376
  %3625 = vmatprep.mubr.bf16.mxu0 %v2923
  %3626 = vmatmul.mubr.bf16.gmra.mxu0 %v2922
  %v3627 = vpop.f32.mrf.mxu0
  %v3628 = vadd.f32 %v3531, %v3627
  %v3629 = vpop.f32.mrf.mxu0
  %v3630 = vpop.f32.mrf.mxu0
  %v3631 = vadd.f32 %v3534, %v3630
  %v3632 = vpop.f32.mrf.mxu0
  %3633 = vmatprep.mubr.bf16.mxu0 %v2932
  %3634 = vmatmul.mubr.bf16.gmra.mxu0 %v2931
  %v3635 = vpop.f32.mrf.mxu0
  %v3636 = vadd.f32 %v3539, %v3635
  %v3637 = vpop.f32.mrf.mxu0
  %v3638 = vpop.f32.mrf.mxu0
  %v3639 = vadd.f32 %v3542, %v3638
  %v3640 = vpop.f32.mrf.mxu0
  %3641 = vmatprep.mubr.bf16.mxu0 %v2941
  %3642 = vmatmul.mubr.bf16.gmra.mxu0 %v2940
  %v3643 = vpop.f32.mrf.mxu0
  %v3644 = vadd.f32 %v3547, %v3643
  %v3645 = vpop.f32.mrf.mxu0
  %v3646 = vpop.f32.mrf.mxu0
  %v3647 = vadd.f32 %v3550, %v3646
  %v3648 = vpop.f32.mrf.mxu0
  %3649 = vmatprep.mubr.bf16.mxu0 %v2950
  %3650 = vmatmul.mubr.bf16.gmra.mxu0 %v2949
  %v3651 = vpop.f32.mrf.mxu0
  %v3652 = vadd.f32 %v3555, %v3651
  %v3653 = vpop.f32.mrf.mxu0
  %v3654 = vpop.f32.mrf.mxu0
  %v3655 = vadd.f32 %v3558, %v3654
  %v3656 = vpop.f32.mrf.mxu0
  %3657 = vmatprep.mubr.bf16.mxu0 %v2959
  %3658 = vmatmul.mubr.bf16.gmra.mxu0 %v2958
  %v3659 = vpop.f32.mrf.mxu0
  %v3660 = vadd.f32 %v3563, %v3659
  %v3661 = vpop.f32.mrf.mxu0
  %v3662 = vpop.f32.mrf.mxu0
  %v3663 = vadd.f32 %v3566, %v3662
  %v3664 = vpop.f32.mrf.mxu0
  %3665 = vmatprep.mubr.bf16.mxu0 %v2968
  %3666 = vmatmul.mubr.bf16.gmra.mxu0 %v2967
  %v3667 = vpop.f32.mrf.mxu0
  %v3668 = vadd.f32 %v3571, %v3667
  %v3669 = vpop.f32.mrf.mxu0
  %v3670 = vpop.f32.mrf.mxu0
  %v3671 = vadd.f32 %v3574, %v3670
  %v3672 = vpop.f32.mrf.mxu0
  %3673 = vmatprep.mubr.bf16.mxu0 %v2977
  %3674 = vmatmul.mubr.bf16.gmra.mxu0 %v2976
  %v3675 = vpop.f32.mrf.mxu0
  %v3676 = vadd.f32 %v3579, %v3675
  %v3677 = vpop.f32.mrf.mxu0
  %v3678 = vpop.f32.mrf.mxu0
  %v3679 = vadd.f32 %v3582, %v3678
  %v3680 = vpop.f32.mrf.mxu0
  %3681 = vmatprep.mubr.bf16.mxu0 %v2986
  %3682 = vmatmul.mubr.bf16.gmra.mxu0 %v2985
  %v3683 = vpop.f32.mrf.mxu0
  %v3684 = vadd.f32 %v3587, %v3683
  %v3685 = vpop.f32.mrf.mxu0
  %v3686 = vpop.f32.mrf.mxu0
  %v3687 = vadd.f32 %v3590, %v3686
  %v3688 = vpop.f32.mrf.mxu0
  %3689 = vdwg.mxu0
  %3690 = vmatprep.subr.bf16.mxu0 0
  %3691 = vmatpush1.bf16.msra.mxu0 %v3391
  %3692 = vmatprep.subr.bf16.mxu0 0
  %3693 = vmatpush1.bf16.msra.mxu0 %v3390
  %3694 = vmatprep.subr.bf16.mxu0 0
  %3695 = vmatpush1.bf16.msra.mxu0 %v3389
  %3696 = vmatprep.subr.bf16.mxu0 0
  %3697 = vmatpush1.bf16.msra.mxu0 %v3388
  %3698 = vmatprep.subr.bf16.mxu0 0
  %3699 = vmatpush1.bf16.msra.mxu0 %v3387
  %3700 = vmatprep.subr.bf16.mxu0 0
  %3701 = vmatpush1.bf16.msra.mxu0 %v3386
  %3702 = vmatprep.subr.bf16.mxu0 0
  %3703 = vmatpush1.bf16.msra.mxu0 %v3385
  %3704 = vmatprep.subr.bf16.mxu0 0
  %3705 = vmatpush1.bf16.msra.mxu0 %v3384
  %3706 = vmatprep.subr.bf16.mxu0 0
  %3707 = vmatpush2.bf16.msra.mxu0 %v3399
  %3708 = vmatprep.subr.bf16.mxu0 0
  %3709 = vmatpush2.bf16.msra.mxu0 %v3398
  %3710 = vmatprep.subr.bf16.mxu0 0
  %3711 = vmatpush2.bf16.msra.mxu0 %v3397
  %3712 = vmatprep.subr.bf16.mxu0 0
  %3713 = vmatpush2.bf16.msra.mxu0 %v3396
  %3714 = vmatprep.subr.bf16.mxu0 0
  %3715 = vmatpush2.bf16.msra.mxu0 %v3395
  %3716 = vmatprep.subr.bf16.mxu0 0
  %3717 = vmatpush2.bf16.msra.mxu0 %v3394
  %3718 = vmatprep.subr.bf16.mxu0 0
  %3719 = vmatpush2.bf16.msra.mxu0 %v3393
  %3720 = vmatprep.subr.bf16.mxu0 0
  %3721 = vmatpush2.bf16.msra.mxu0 %v3392
  %3722 = vmatprep.mubr.bf16.mxu0 %v2925
  %3723 = vmatmul.mubr.bf16.gmra.mxu0 %v2924
  %v3724 = vpop.f32.mrf.mxu0
  %v3725 = vadd.f32 %v3628, %v3724
  %v3726 = vpop.f32.mrf.mxu0
  %v3727 = vpop.f32.mrf.mxu0
  %v3728 = vadd.f32 %v3631, %v3727
  %v3729 = vpop.f32.mrf.mxu0
  %3730 = vmatprep.mubr.bf16.mxu0 %v2934
  %3731 = vmatmul.mubr.bf16.gmra.mxu0 %v2933
  %v3732 = vpop.f32.mrf.mxu0
  %v3733 = vadd.f32 %v3636, %v3732
  %v3734 = vpop.f32.mrf.mxu0
  %v3735 = vpop.f32.mrf.mxu0
  %v3736 = vadd.f32 %v3639, %v3735
  %v3737 = vpop.f32.mrf.mxu0
  %3738 = vmatprep.mubr.bf16.mxu0 %v2943
  %3739 = vmatmul.mubr.bf16.gmra.mxu0 %v2942
  %v3740 = vpop.f32.mrf.mxu0
  %v3741 = vadd.f32 %v3644, %v3740
  %v3742 = vpop.f32.mrf.mxu0
  %v3743 = vpop.f32.mrf.mxu0
  %v3744 = vadd.f32 %v3647, %v3743
  %v3745 = vpop.f32.mrf.mxu0
  %3746 = vmatprep.mubr.bf16.mxu0 %v2952
  %3747 = vmatmul.mubr.bf16.gmra.mxu0 %v2951
  %v3748 = vpop.f32.mrf.mxu0
  %v3749 = vadd.f32 %v3652, %v3748
  %v3750 = vpop.f32.mrf.mxu0
  %v3751 = vpop.f32.mrf.mxu0
  %v3752 = vadd.f32 %v3655, %v3751
  %v3753 = vpop.f32.mrf.mxu0
  %3754 = vmatprep.mubr.bf16.mxu0 %v2961
  %3755 = vmatmul.mubr.bf16.gmra.mxu0 %v2960
  %v3756 = vpop.f32.mrf.mxu0
  %v3757 = vadd.f32 %v3660, %v3756
  %v3758 = vpop.f32.mrf.mxu0
  %v3759 = vpop.f32.mrf.mxu0
  %v3760 = vadd.f32 %v3663, %v3759
  %v3761 = vpop.f32.mrf.mxu0
  %3762 = vmatprep.mubr.bf16.mxu0 %v2970
  %3763 = vmatmul.mubr.bf16.gmra.mxu0 %v2969
  %v3764 = vpop.f32.mrf.mxu0
  %v3765 = vadd.f32 %v3668, %v3764
  %v3766 = vpop.f32.mrf.mxu0
  %v3767 = vpop.f32.mrf.mxu0
  %v3768 = vadd.f32 %v3671, %v3767
  %v3769 = vpop.f32.mrf.mxu0
  %3770 = vmatprep.mubr.bf16.mxu0 %v2979
  %3771 = vmatmul.mubr.bf16.gmra.mxu0 %v2978
  %v3772 = vpop.f32.mrf.mxu0
  %v3773 = vadd.f32 %v3676, %v3772
  %v3774 = vpop.f32.mrf.mxu0
  %v3775 = vpop.f32.mrf.mxu0
  %v3776 = vadd.f32 %v3679, %v3775
  %v3777 = vpop.f32.mrf.mxu0
  %3778 = vmatprep.mubr.bf16.mxu0 %v2988
  %3779 = vmatmul.mubr.bf16.gmra.mxu0 %v2987
  %v3780 = vpop.f32.mrf.mxu0
  %v3781 = vadd.f32 %v3684, %v3780
  %v3782 = vpop.f32.mrf.mxu0
  %v3783 = vpop.f32.mrf.mxu0
  %v3784 = vadd.f32 %v3687, %v3783
  %v3785 = vpop.f32.mrf.mxu0
  %3786 = vdwg.mxu0
  %3787 = vmatprep.subr.bf16.mxu0 0
  %3788 = vmatpush1.bf16.msra.mxu0 %v3407
  %3789 = vmatprep.subr.bf16.mxu0 0
  %3790 = vmatpush1.bf16.msra.mxu0 %v3406
  %3791 = vmatprep.subr.bf16.mxu0 0
  %3792 = vmatpush1.bf16.msra.mxu0 %v3405
  %3793 = vmatprep.subr.bf16.mxu0 0
  %3794 = vmatpush1.bf16.msra.mxu0 %v3404
  %3795 = vmatprep.subr.bf16.mxu0 0
  %3796 = vmatpush1.bf16.msra.mxu0 %v3403
  %3797 = vmatprep.subr.bf16.mxu0 0
  %3798 = vmatpush1.bf16.msra.mxu0 %v3402
  %3799 = vmatprep.subr.bf16.mxu0 0
  %3800 = vmatpush1.bf16.msra.mxu0 %v3401
  %3801 = vmatprep.subr.bf16.mxu0 0
  %3802 = vmatpush1.bf16.msra.mxu0 %v3400
  %3803 = vmatprep.subr.bf16.mxu0 0
  %3804 = vmatpush2.bf16.msra.mxu0 %v3415
  %3805 = vmatprep.subr.bf16.mxu0 0
  %3806 = vmatpush2.bf16.msra.mxu0 %v3414
  %3807 = vmatprep.subr.bf16.mxu0 0
  %3808 = vmatpush2.bf16.msra.mxu0 %v3413
  %3809 = vmatprep.subr.bf16.mxu0 0
  %3810 = vmatpush2.bf16.msra.mxu0 %v3412
  %3811 = vmatprep.subr.bf16.mxu0 0
  %3812 = vmatpush2.bf16.msra.mxu0 %v3411
  %3813 = vmatprep.subr.bf16.mxu0 0
  %3814 = vmatpush2.bf16.msra.mxu0 %v3410
  %3815 = vmatprep.subr.bf16.mxu0 0
  %3816 = vmatpush2.bf16.msra.mxu0 %v3409
  %3817 = vmatprep.subr.bf16.mxu0 0
  %3818 = vmatpush2.bf16.msra.mxu0 %v3408
  %3819 = vmatprep.mubr.bf16.mxu0 %v2927
  %3820 = vmatmul.mubr.bf16.gmra.mxu0 %v2926
  %v3821 = vpop.f32.mrf.mxu0
  %v3822 = vadd.f32 %v3725, %v3821
  %v3823 = vpop.f32.mrf.mxu0
  %v3824 = vpop.f32.mrf.mxu0
  %v3825 = vadd.f32 %v3728, %v3824
  %v3826 = vpop.f32.mrf.mxu0
  %3827 = vmatprep.mubr.bf16.mxu0 %v2936
  %3828 = vmatmul.mubr.bf16.gmra.mxu0 %v2935
  %v3829 = vpop.f32.mrf.mxu0
  %v3830 = vadd.f32 %v3733, %v3829
  %v3831 = vpop.f32.mrf.mxu0
  %v3832 = vpop.f32.mrf.mxu0
  %v3833 = vadd.f32 %v3736, %v3832
  %v3834 = vpop.f32.mrf.mxu0
  %3835 = vmatprep.mubr.bf16.mxu0 %v2945
  %3836 = vmatmul.mubr.bf16.gmra.mxu0 %v2944
  %v3837 = vpop.f32.mrf.mxu0
  %v3838 = vadd.f32 %v3741, %v3837
  %v3839 = vpop.f32.mrf.mxu0
  %v3840 = vpop.f32.mrf.mxu0
  %v3841 = vadd.f32 %v3744, %v3840
  %v3842 = vpop.f32.mrf.mxu0
  %3843 = vmatprep.mubr.bf16.mxu0 %v2954
  %3844 = vmatmul.mubr.bf16.gmra.mxu0 %v2953
  %v3845 = vpop.f32.mrf.mxu0
  %v3846 = vadd.f32 %v3749, %v3845
  %v3847 = vpop.f32.mrf.mxu0
  %v3848 = vpop.f32.mrf.mxu0
  %v3849 = vadd.f32 %v3752, %v3848
  %v3850 = vpop.f32.mrf.mxu0
  %3851 = vmatprep.mubr.bf16.mxu0 %v2963
  %3852 = vmatmul.mubr.bf16.gmra.mxu0 %v2962
  %v3853 = vpop.f32.mrf.mxu0
  %v3854 = vadd.f32 %v3757, %v3853
  %v3855 = vpop.f32.mrf.mxu0
  %v3856 = vpop.f32.mrf.mxu0
  %v3857 = vadd.f32 %v3760, %v3856
  %v3858 = vpop.f32.mrf.mxu0
  %3859 = vmatprep.mubr.bf16.mxu0 %v2972
  %3860 = vmatmul.mubr.bf16.gmra.mxu0 %v2971
  %v3861 = vpop.f32.mrf.mxu0
  %v3862 = vadd.f32 %v3765, %v3861
  %v3863 = vpop.f32.mrf.mxu0
  %v3864 = vpop.f32.mrf.mxu0
  %v3865 = vadd.f32 %v3768, %v3864
  %v3866 = vpop.f32.mrf.mxu0
  %3867 = vmatprep.mubr.bf16.mxu0 %v2981
  %3868 = vmatmul.mubr.bf16.gmra.mxu0 %v2980
  %v3869 = vpop.f32.mrf.mxu0
  %v3870 = vadd.f32 %v3773, %v3869
  %v3871 = vpop.f32.mrf.mxu0
  %v3872 = vpop.f32.mrf.mxu0
  %v3873 = vadd.f32 %v3776, %v3872
  %v3874 = vpop.f32.mrf.mxu0
  %3875 = vmatprep.mubr.bf16.mxu0 %v2990
  %3876 = vmatmul.mubr.bf16.gmra.mxu0 %v2989
  %v3877 = vpop.f32.mrf.mxu0
  %v3878 = vadd.f32 %v3781, %v3877
  %v3879 = vpop.f32.mrf.mxu0
  %v3880 = vpop.f32.mrf.mxu0
  %v3881 = vadd.f32 %v3784, %v3880
  %v3882 = vpop.f32.mrf.mxu0
  %3883 = vdwg.mxu0
  %3884 = vmatprep.subr.bf16.mxu0 0
  %3885 = vmatpush1.bf16.msra.mxu0 %v3423
  %3886 = vmatprep.subr.bf16.mxu0 0
  %3887 = vmatpush1.bf16.msra.mxu0 %v3422
  %3888 = vmatprep.subr.bf16.mxu0 0
  %3889 = vmatpush1.bf16.msra.mxu0 %v3421
  %3890 = vmatprep.subr.bf16.mxu0 0
  %3891 = vmatpush1.bf16.msra.mxu0 %v3420
  %3892 = vmatprep.subr.bf16.mxu0 0
  %3893 = vmatpush1.bf16.msra.mxu0 %v3419
  %3894 = vmatprep.subr.bf16.mxu0 0
  %3895 = vmatpush1.bf16.msra.mxu0 %v3418
  %3896 = vmatprep.subr.bf16.mxu0 0
  %3897 = vmatpush1.bf16.msra.mxu0 %v3417
  %3898 = vmatprep.subr.bf16.mxu0 0
  %3899 = vmatpush1.bf16.msra.mxu0 %v3416
  %3900 = vmatprep.subr.bf16.mxu0 0
  %3901 = vmatpush2.bf16.msra.mxu0 0
  %3902 = vmatprep.subr.bf16.mxu0 0
  %3903 = vmatpush2.bf16.msra.mxu0 0
  %3904 = vmatprep.subr.bf16.mxu0 0
  %3905 = vmatpush2.bf16.msra.mxu0 0
  %3906 = vmatprep.subr.bf16.mxu0 0
  %3907 = vmatpush2.bf16.msra.mxu0 0
  %3908 = vmatprep.subr.bf16.mxu0 0
  %3909 = vmatpush2.bf16.msra.mxu0 0
  %3910 = vmatprep.subr.bf16.mxu0 0
  %3911 = vmatpush2.bf16.msra.mxu0 0
  %3912 = vmatprep.subr.bf16.mxu0 0
  %3913 = vmatpush2.bf16.msra.mxu0 0
  %3914 = vmatprep.subr.bf16.mxu0 0
  %3915 = vmatpush2.bf16.msra.mxu0 0
  %3916 = vmatprep.mubr.bf16.mxu0 0
  %3917 = vmatmul.mubr.bf16.gmra.mxu0 %v2928
  %v3918 = vpop.f32.mrf.mxu0
  %v3919 = vadd.f32 %v3822, %v3918
  %v3920 = vpop.f32.mrf.mxu0
  %v3921 = vpop.f32.mrf.mxu0
  %v3922 = vadd.f32 %v3825, %v3921
  %v3923 = vpop.f32.mrf.mxu0
  %3924 = vmatprep.mubr.bf16.mxu0 0
  %3925 = vmatmul.mubr.bf16.gmra.mxu0 %v2937
  %v3926 = vpop.f32.mrf.mxu0
  %v3927 = vadd.f32 %v3830, %v3926
  %v3928 = vpop.f32.mrf.mxu0
  %v3929 = vpop.f32.mrf.mxu0
  %v3930 = vadd.f32 %v3833, %v3929
  %v3931 = vpop.f32.mrf.mxu0
  %3932 = vmatprep.mubr.bf16.mxu0 0
  %3933 = vmatmul.mubr.bf16.gmra.mxu0 %v2946
  %v3934 = vpop.f32.mrf.mxu0
  %v3935 = vadd.f32 %v3838, %v3934
  %v3936 = vpop.f32.mrf.mxu0
  %v3937 = vpop.f32.mrf.mxu0
  %v3938 = vadd.f32 %v3841, %v3937
  %v3939 = vpop.f32.mrf.mxu0
  %3940 = vmatprep.mubr.bf16.mxu0 0
  %3941 = vmatmul.mubr.bf16.gmra.mxu0 %v2955
  %v3942 = vpop.f32.mrf.mxu0
  %v3943 = vadd.f32 %v3846, %v3942
  %v3944 = vpop.f32.mrf.mxu0
  %v3945 = vpop.f32.mrf.mxu0
  %v3946 = vadd.f32 %v3849, %v3945
  %v3947 = vpop.f32.mrf.mxu0
  %3948 = vmatprep.mubr.bf16.mxu0 0
  %3949 = vmatmul.mubr.bf16.gmra.mxu0 %v2964
  %v3950 = vpop.f32.mrf.mxu0
  %v3951 = vadd.f32 %v3854, %v3950
  %v3952 = vpop.f32.mrf.mxu0
  %v3953 = vpop.f32.mrf.mxu0
  %v3954 = vadd.f32 %v3857, %v3953
  %v3955 = vpop.f32.mrf.mxu0
  %3956 = vmatprep.mubr.bf16.mxu0 0
  %3957 = vmatmul.mubr.bf16.gmra.mxu0 %v2973
  %v3958 = vpop.f32.mrf.mxu0
  %v3959 = vadd.f32 %v3862, %v3958
  %v3960 = vpop.f32.mrf.mxu0
  %v3961 = vpop.f32.mrf.mxu0
  %v3962 = vadd.f32 %v3865, %v3961
  %v3963 = vpop.f32.mrf.mxu0
  %3964 = vmatprep.mubr.bf16.mxu0 0
  %3965 = vmatmul.mubr.bf16.gmra.mxu0 %v2982
  %v3966 = vpop.f32.mrf.mxu0
  %v3967 = vadd.f32 %v3870, %v3966
  %v3968 = vpop.f32.mrf.mxu0
  %v3969 = vpop.f32.mrf.mxu0
  %v3970 = vadd.f32 %v3873, %v3969
  %v3971 = vpop.f32.mrf.mxu0
  %3972 = vmatprep.mubr.bf16.mxu0 0
  %3973 = vmatmul.mubr.bf16.gmra.mxu0 %v2991
  %v3974 = vpop.f32.mrf.mxu0
  %v3975 = vadd.f32 %v3878, %v3974
  %v3976 = vpop.f32.mrf.mxu0
  %v3977 = vpop.f32.mrf.mxu0
  %v3978 = vadd.f32 %v3881, %v3977
  %v3979 = vpop.f32.mrf.mxu0
  %3980 = vdwg.mxu0
  %v3981 = vld [vmem:[%s5] sm:$0x1]
  %v3982 = vld [vmem:[%s6] sm:$0x1]
  %v3983 = vadd.f32 %v3919, %v3922
  %v3984 = vadd.f32 %v3983, %v3927
  %v3985 = vadd.f32 %v3984, %v3930
  %v3986 = vadd.f32 %v3985, %v3935
  %v3987 = vadd.f32 %v3986, %v3938
  %v3988 = vadd.f32 %v3987, %v3943
  %v3989 = vadd.f32 %v3988, %v3946
  %v3990 = vadd.f32 %v3989, %v3951
  %v3991 = vadd.f32 %v3990, %v3954
  %v3992 = vadd.f32 %v3991, %v3959
  %v3993 = vadd.f32 %v3992, %v3962
  %v3994 = vadd.f32 %v3993, %v3967
  %v3995 = vadd.f32 %v3994, %v3970
  %v3996 = vadd.f32 %v3995, %v3975
  %v3997 = vadd.f32 %v3996, %v3978
  %v3998 = vrot.slane %v3997, 4
  %v3999 = vadd.f32 %v3997, %v3998
  %v4000 = vrot.slane %v3999, 2
  %v4001 = vadd.f32 %v3999, %v4000
  %v4002 = vrot.slane %v4001, 1
  %v4003 = vadd.f32 %v4001, %v4002
  %v4004 = vmul.f32 %v3919, %v3919
  %v4005 = vmul.f32 %v3922, %v3922
  %v4006 = vmul.f32 %v3927, %v3927
  %v4007 = vmul.f32 %v3930, %v3930
  %v4008 = vmul.f32 %v3935, %v3935
  %v4009 = vmul.f32 %v3938, %v3938
  %v4010 = vmul.f32 %v3943, %v3943
  %v4011 = vmul.f32 %v3946, %v3946
  %v4012 = vmul.f32 %v3951, %v3951
  %v4013 = vmul.f32 %v3954, %v3954
  %v4014 = vmul.f32 %v3959, %v3959
  %v4015 = vmul.f32 %v3962, %v3962
  %v4016 = vmul.f32 %v3967, %v3967
  %v4017 = vmul.f32 %v3970, %v3970
  %v4018 = vmul.f32 %v3975, %v3975
  %v4019 = vmul.f32 %v3978, %v3978
  %v4020 = vadd.f32 %v4004, %v4005
  %v4021 = vadd.f32 %v4020, %v4006
  %v4022 = vadd.f32 %v4021, %v4007
  %v4023 = vadd.f32 %v4022, %v4008
  %v4024 = vadd.f32 %v4023, %v4009
  %v4025 = vadd.f32 %v4024, %v4010
  %v4026 = vadd.f32 %v4025, %v4011
  %v4027 = vadd.f32 %v4026, %v4012
  %v4028 = vadd.f32 %v4027, %v4013
  %v4029 = vadd.f32 %v4028, %v4014
  %v4030 = vadd.f32 %v4029, %v4015
  %v4031 = vadd.f32 %v4030, %v4016
  %v4032 = vadd.f32 %v4031, %v4017
  %v4033 = vadd.f32 %v4032, %v4018
  %v4034 = vadd.f32 %v4033, %v4019
  %v4035 = vrot.slane %v4034, 4
  %v4036 = vadd.f32 %v4034, %v4035
  %v4037 = vrot.slane %v4036, 2
  %v4038 = vadd.f32 %v4036, %v4037
  %v4039 = vrot.slane %v4038, 1
  %v4040 = vadd.f32 %v4038, %v4039
  %v4041 = vmul.f32 %v4003, 0.0078125
  %v4042 = vmul.f32 %v4040, 0.0078125
  %v4043 = vmul.f32 %v4041, %v4041
  %v4044 = vsub.f32 %v4042, %v4043
  %v4045 = vmax.f32 %v4044, 0.0
  %v4046 = vsub.f32 %v3919, %v4041
  %v4047 = vsub.f32 %v3922, %v4041
  %v4048 = vsub.f32 %v3927, %v4041
  %v4049 = vsub.f32 %v3930, %v4041
  %v4050 = vsub.f32 %v3935, %v4041
  %v4051 = vsub.f32 %v3938, %v4041
  %v4052 = vsub.f32 %v3943, %v4041
  %v4053 = vsub.f32 %v3946, %v4041
  %v4054 = vsub.f32 %v3951, %v4041
  %v4055 = vsub.f32 %v3954, %v4041
  %v4056 = vsub.f32 %v3959, %v4041
  %v4057 = vsub.f32 %v3962, %v4041
  %v4058 = vsub.f32 %v3967, %v4041
  %v4059 = vsub.f32 %v3970, %v4041
  %v4060 = vsub.f32 %v3975, %v4041
  %v4061 = vsub.f32 %v3978, %v4041
  %v4062 = vadd.f32 %v4045, 1e-05
  %v4063 = vrsqrt.pop %v4062
  %v4064 = vmul.f32 %v4046, %v4063
  %v4065 = vmul.f32 %v4047, %v4063
  %v4066 = vmul.f32 %v4048, %v4063
  %v4067 = vmul.f32 %v4049, %v4063
  %v4068 = vmul.f32 %v4050, %v4063
  %v4069 = vmul.f32 %v4051, %v4063
  %v4070 = vmul.f32 %v4052, %v4063
  %v4071 = vmul.f32 %v4053, %v4063
  %v4072 = vmul.f32 %v4054, %v4063
  %v4073 = vmul.f32 %v4055, %v4063
  %v4074 = vmul.f32 %v4056, %v4063
  %v4075 = vmul.f32 %v4057, %v4063
  %v4076 = vmul.f32 %v4058, %v4063
  %v4077 = vmul.f32 %v4059, %v4063
  %v4078 = vmul.f32 %v4060, %v4063
  %v4079 = vmul.f32 %v4061, %v4063
  %v4081 = vlaneseq
  %v4082 = vshrl.u32 %v4081, 7
  %v4083 = vsub.s32 0, %v4082
  %v4084 = vrot.slane %v3981, %v4083
  %v4086 = vmul.f32 %v4064, %v4084
  %v4087 = vmul.f32 %v4065, %v4084
  %v4088 = vmul.f32 %v4066, %v4084
  %v4089 = vmul.f32 %v4067, %v4084
  %v4090 = vmul.f32 %v4068, %v4084
  %v4091 = vmul.f32 %v4069, %v4084
  %v4092 = vmul.f32 %v4070, %v4084
  %v4093 = vmul.f32 %v4071, %v4084
  %v4094 = vmul.f32 %v4072, %v4084
  %v4095 = vmul.f32 %v4073, %v4084
  %v4096 = vmul.f32 %v4074, %v4084
  %v4097 = vmul.f32 %v4075, %v4084
  %v4098 = vmul.f32 %v4076, %v4084
  %v4099 = vmul.f32 %v4077, %v4084
  %v4100 = vmul.f32 %v4078, %v4084
  %v4101 = vmul.f32 %v4079, %v4084
  %v4103 = vlaneseq
  %v4104 = vshrl.u32 %v4103, 7
  %v4105 = vsub.s32 0, %v4104
  %v4106 = vrot.slane %v3982, %v4105
  %v4108 = vadd.f32 %v4086, %v4106
  %v4109 = vadd.f32 %v4087, %v4106
  %v4110 = vadd.f32 %v4088, %v4106
  %v4111 = vadd.f32 %v4089, %v4106
  %v4112 = vadd.f32 %v4090, %v4106
  %v4113 = vadd.f32 %v4091, %v4106
  %v4114 = vadd.f32 %v4092, %v4106
  %v4115 = vadd.f32 %v4093, %v4106
  %v4116 = vadd.f32 %v4094, %v4106
  %v4117 = vadd.f32 %v4095, %v4106
  %v4118 = vadd.f32 %v4096, %v4106
  %v4119 = vadd.f32 %v4097, %v4106
  %v4120 = vadd.f32 %v4098, %v4106
  %v4121 = vadd.f32 %v4099, %v4106
  %v4122 = vadd.f32 %v4100, %v4106
  %v4123 = vadd.f32 %v4101, %v4106
  %v4124 = vmax.f32 %v4108, 0.0
  %v4125 = vmax.f32 %v4109, 0.0
  %v4126 = vmax.f32 %v4110, 0.0
  %v4127 = vmax.f32 %v4111, 0.0
  %v4128 = vmax.f32 %v4112, 0.0
  %v4129 = vmax.f32 %v4113, 0.0
  %v4130 = vmax.f32 %v4114, 0.0
  %v4131 = vmax.f32 %v4115, 0.0
  %v4132 = vmax.f32 %v4116, 0.0
  %v4133 = vmax.f32 %v4117, 0.0
  %v4134 = vmax.f32 %v4118, 0.0
  %v4135 = vmax.f32 %v4119, 0.0
  %v4136 = vmax.f32 %v4120, 0.0
  %v4137 = vmax.f32 %v4121, 0.0
  %v4138 = vmax.f32 %v4122, 0.0
  %v4139 = vmax.f32 %v4123, 0.0
  %v4140 = vadd.f32 %v4124, %v592
  %v4141 = vadd.f32 %v4125, %v593
  %v4142 = vadd.f32 %v4126, %v594
  %v4143 = vadd.f32 %v4127, %v595
  %v4144 = vadd.f32 %v4128, %v596
  %v4145 = vadd.f32 %v4129, %v597
  %v4146 = vadd.f32 %v4130, %v598
  %v4147 = vadd.f32 %v4131, %v599
  %v4148 = vadd.f32 %v4132, %v600
  %v4149 = vadd.f32 %v4133, %v601
  %v4150 = vadd.f32 %v4134, %v602
  %v4151 = vadd.f32 %v4135, %v603
  %v4152 = vadd.f32 %v4136, %v604
  %v4153 = vadd.f32 %v4137, %v605
  %v4154 = vadd.f32 %v4138, %v606
  %v4155 = vadd.f32 %v4139, %v607
  %4156 = vst [vmem:[%s9] sm:$0xff] %v4140
  %4157 = vst [vmem:[%s9 + $0x8] sm:$0xff] %v4141
  %4158 = vst [vmem:[%s9 + $0x10] sm:$0xff] %v4142
  %4159 = vst [vmem:[%s9 + $0x18] sm:$0xff] %v4143
  %4160 = vst [vmem:[%s9 + $0x20] sm:$0xff] %v4144
  %4161 = vst [vmem:[%s9 + $0x28] sm:$0xff] %v4145
  %4162 = vst [vmem:[%s9 + $0x30] sm:$0xff] %v4146
  %4163 = vst [vmem:[%s9 + $0x38] sm:$0xff] %v4147
  %4164 = vst [vmem:[%s9 + $0x40] sm:$0xff] %v4148
  %4165 = vst [vmem:[%s9 + $0x48] sm:$0xff] %v4149
  %4166 = vst [vmem:[%s9 + $0x50] sm:$0xff] %v4150
  %4167 = vst [vmem:[%s9 + $0x58] sm:$0xff] %v4151
  %4168 = vst [vmem:[%s9 + $0x60] sm:$0xff] %v4152
  %4169 = vst [vmem:[%s9 + $0x68] sm:$0xff] %v4153
  %4170 = vst [vmem:[%s9 + $0x70] sm:$0xff] %v4154
  %4171 = vst [vmem:[%s9 + $0x78] sm:$0xff] %v4155
  // Predicated region
  $region38: #{residual_block_forward.1} parent=0 // pred_check
    _
  $region39: #{residual_block_forward.1} parent=0 // pred_check_branch
    %4173 = sbr.rel (0) target = $region41
  $region40: #{residual_block_forward.1} parent=0 // pred_region
    _
  $region41: #{residual_block_forward.1} parent=0 // pred_fallthru
    _
  // Predicated region
  $region42: #{residual_block_forward.1} parent=0 // pred_check
    _
  $region43: #{residual_block_forward.1} parent=0 // pred_check_branch
    %4175 = sbr.rel (0) target = $region45
  $region44: #{residual_block_forward.1} parent=0 // pred_region
    _
  $region45: #{residual_block_forward.1} parent=0 // pred_fallthru
    _

</llo_original>
